<compile_context>
chip_gen: v7x
topology: tpu7x:2x2x1
jax: 0.10.0
libtpu: 0.0.40
codegen_flags: <defaults>
</compile_context>

<pallas_src>
import functools

import jax
import jax.numpy as jnp
from jax.experimental import pallas as pl
from jax.experimental.pallas import tpu as pltpu


def _layer_norm(h, gamma, beta, eps=1e-5):
    mu = jnp.mean(h, axis=-1, keepdims=True)
    var = jnp.mean(jnp.square(h - mu), axis=-1, keepdims=True)
    return (h - mu) * jax.lax.rsqrt(var + eps) * gamma + beta


def encoder_layer_kernel(xq_ref, xkv_ref, mask_ref,
                         wq_ref, wkv_ref, wo_ref,
                         w1_ref, b1_ref, w2_ref, b2_ref,
                         g0_ref, be0_ref, g1_ref, be1_ref,
                         o_ref, *, n_head, d_qkv, matmul_dtype):
    xq = xq_ref[0]      # (TQ, D) f32 -- query tile (also the residual input)
    xkv = xkv_ref[0]    # (S, D)  f32 -- full sequence for K/V
    mask = mask_ref[0]  # (1, S)  f32

    tq = xq.shape[0]
    s = xkv.shape[0]
    hdk = n_head * d_qkv
    scale = 1.0 / jnp.sqrt(jnp.float32(d_qkv))

    def mm(a, b):
        # MXU matmul: bf16 (or f32) operands, f32 accumulation.
        return jnp.dot(a.astype(matmul_dtype), b.astype(matmul_dtype),
                       preferred_element_type=jnp.float32)

    # ---- Multi-head self attention ------------------------------------
    # Fused projections: one MXU pass over the full sequence for K|V,
    # one pass over the query tile for Q.
    q = mm(xq, wq_ref[...]) * scale          # (TQ, Hdk); scale folded here
    kv = mm(xkv, wkv_ref[...])               # (S, 2*Hdk)
    k = kv[:, :hdk]
    v = kv[:, hdk:]

    qh = q.reshape(tq, n_head, d_qkv)
    kh = k.reshape(s, n_head, d_qkv)
    vh = v.reshape(s, n_head, d_qkv)

    # Mask hoisted to a single additive bias, broadcast over heads/queries.
    bias = jnp.where(mask == 0.0, -1e9, 0.0)            # (1, S)

    # Head-batched scores + softmax (one exp/reduce pipeline for all heads).
    scores = jnp.einsum('qhd,khd->hqk',
                        qh.astype(matmul_dtype), kh.astype(matmul_dtype),
                        preferred_element_type=jnp.float32)   # (H, TQ, S)
    scores = scores + bias
    scores = scores - jnp.max(scores, axis=-1, keepdims=True)
    p = jnp.exp(scores)
    p = p * pl.reciprocal(jnp.sum(p, axis=-1, keepdims=True), approx=True)

    ctx = jnp.einsum('hqk,khd->qhd',
                     p.astype(matmul_dtype), vh.astype(matmul_dtype),
                     preferred_element_type=jnp.float32)      # (TQ, H, dk)
    attn = mm(ctx.reshape(tq, hdk), wo_ref[...])              # (TQ, D)

    # ---- Residual + LayerNorm 0 ----------------------------------------
    h1 = _layer_norm(xq + attn, g0_ref[0], be0_ref[0])

    # ---- Position-wise feed forward ------------------------------------
    ff = jnp.maximum(mm(h1, w1_ref[...]) + b1_ref[0], 0.0)    # (TQ, d_ff)
    ff = mm(ff, w2_ref[...]) + b2_ref[0]                      # (TQ, D)

    # ---- Residual + LayerNorm 1 ----------------------------------------
    o_ref[0] = _layer_norm(h1 + ff, g1_ref[0], be1_ref[0])


def embed_residual_encoder_layer(x, mask, x0, params, *, n_head, d_qkv,
                                 q_tile=256, matmul_dtype=jnp.bfloat16):
    """Mirrors EmbedResidualEncoderLayer.forward(x, mask, x0) in eval mode."""
    del x0  # forward(x, mask, x0) never reads x0 in the reference module.
    (wq, wk, wv, wo, w1, b1, w2, b2, g0, be0, g1, be1) = params
    B, S, D = x.shape
    hdk = n_head * d_qkv
    d_ff = w1.shape[1]

    # Clamp the query tile to the sequence length (fall back to a single tile
    # when S is not divisible by q_tile).
    if q_tile >= S or S % q_tile != 0:
        q_tile = S
    nq = S // q_tile

    # Fuse K|V weights; ship all MXU weights to VMEM in the matmul dtype.
    wkv = jnp.concatenate([wk, wv], axis=1)
    wq_c = wq.astype(matmul_dtype)
    wkv_c = wkv.astype(matmul_dtype)
    wo_c = wo.astype(matmul_dtype)
    w1_c = w1.astype(matmul_dtype)
    w2_c = w2.astype(matmul_dtype)

    const = lambda shape: pl.BlockSpec(shape, lambda b, q: (0,) * len(shape))

    kernel = functools.partial(encoder_layer_kernel, n_head=n_head,
                               d_qkv=d_qkv, matmul_dtype=matmul_dtype)

    return pl.pallas_call(
        kernel,
        out_shape=jax.ShapeDtypeStruct((B, S, D), jnp.float32),
        grid_spec=pltpu.PrefetchScalarGridSpec(
            num_scalar_prefetch=0,
            grid=(B, nq),
            in_specs=[
                pl.BlockSpec((1, q_tile, D), lambda b, q: (b, q, 0)),  # x (query tile)
                pl.BlockSpec((1, S, D), lambda b, q: (b, 0, 0)),       # x (full, for K/V)
                pl.BlockSpec((1, 1, S), lambda b, q: (b, 0, 0)),       # mask
                const((D, hdk)),        # wq
                const((D, 2 * hdk)),    # wk|wv fused
                const((hdk, D)),        # wo
                const((D, d_ff)),       # w1
                const((1, d_ff)),       # b1
                const((d_ff, D)),       # w2
                const((1, D)),          # b2
                const((1, D)),          # ln0 gamma
                const((1, D)),          # ln0 beta
                const((1, D)),          # ln1 gamma
                const((1, D)),          # ln1 beta
            ],
            out_specs=pl.BlockSpec((1, q_tile, D), lambda b, q: (b, q, 0)),
        ),
        compiler_params=pltpu.CompilerParams(
            dimension_semantics=("parallel", "parallel"),
            vmem_limit_bytes=48 * 1024 * 1024),
    )(x, x, mask, wq_c, wkv_c, wo_c, w1_c, b1, w2_c, b2, g0, be0, g1, be1)


def reference(x, mask, params, *, n_head, d_qkv):
    """Pure-JAX reference mirroring the PyTorch module (eval mode, f32)."""
    (wq, wk, wv, wo, w1, b1, w2, b2, g0, be0, g1, be1) = params
    B, S, D = x.shape
    q = (x @ wq).reshape(B, S, n_head, d_qkv)
    k = (x @ wk).reshape(B, S, n_head, d_qkv)
    v = (x @ wv).reshape(B, S, n_head, d_qkv)
    scores = jnp.einsum('bqhd,bkhd->bhqk', q, k) / jnp.sqrt(jnp.float32(d_qkv))
    scores = jnp.where(mask[:, None] == 0.0, -1e9, scores)   # (B,1,1,S) broadcast
    p = jax.nn.softmax(scores, axis=-1)
    o = jnp.einsum('bhqk,bkhd->bqhd', p, v).reshape(B, S, n_head * d_qkv)
    attn = o @ wo
    h1 = _layer_norm(x + attn, g0[0], be0[0])
    ff = jax.nn.relu(h1 @ w1 + b1[0]) @ w2 + b2[0]
    return _layer_norm(h1 + ff, g1[0], be1[0])


if __name__ == "__main__":
    # Small, lane-dense config consistent with the module (n_head=4, d_qkv=32).
    B, S = 2, 8
    d_model, d_ff, n_head, d_qkv = 128, 256, 4, 32
    hdk = n_head * d_qkv

    key = jax.random.PRNGKey(0)
    keys = jax.random.split(key, 16)

    x = jax.random.normal(keys[0], (B, S, d_model), jnp.float32)
    x0 = jax.random.normal(keys[1], (B, S, d_model), jnp.float32)  # unused by the module
    # Mask out the last 2 key positions of batch element 1.
    mask = jnp.ones((B, 1, S), jnp.float32)
    mask = mask.at[1, 0, S - 2:].set(0.0)

    s = 0.05
    wq = s * jax.random.normal(keys[2], (d_model, hdk), jnp.float32)
    wk = s * jax.random.normal(keys[3], (d_model, hdk), jnp.float32)
    wv = s * jax.random.normal(keys[4], (d_model, hdk), jnp.float32)
    wo = s * jax.random.normal(keys[5], (hdk, d_model), jnp.float32)
    w1 = s * jax.random.normal(keys[6], (d_model, d_ff), jnp.float32)
    b1 = s * jax.random.normal(keys[7], (1, d_ff), jnp.float32)
    w2 = s * jax.random.normal(keys[8], (d_ff, d_model), jnp.float32)
    b2 = s * jax.random.normal(keys[9], (1, d_model), jnp.float32)
    g0 = 1.0 + 0.1 * jax.random.normal(keys[10], (1, d_model), jnp.float32)
    be0 = 0.1 * jax.random.normal(keys[11], (1, d_model), jnp.float32)
    g1 = 1.0 + 0.1 * jax.random.normal(keys[12], (1, d_model), jnp.float32)
    be1 = 0.1 * jax.random.normal(keys[13], (1, d_model), jnp.float32)

    params = (wq, wk, wv, wo, w1, b1, w2, b2, g0, be0, g1, be1)

    out = embed_residual_encoder_layer(x, mask, x0, params,
                                       n_head=n_head, d_qkv=d_qkv)
    out = jax.block_until_ready(out)

    ref = reference(x, mask, params, n_head=n_head, d_qkv=d_qkv)
    assert out.shape == (B, S, d_model)
    max_err = float(jnp.max(jnp.abs(out - ref)))
    # bf16 MXU operands with f32 accumulation; f32 softmax/LayerNorm.
    assert jnp.allclose(out, ref, rtol=2e-2, atol=2e-2), (
        f"mismatch vs JAX reference (max abs err {max_err:.3e})")

    print("KERNEL_OK")
</pallas_src>

<mosaic_0001>
module attributes {stable_mosaic.version = 11 : i64} {
  func.func @encoder_layer_kernel(%arg0: i32, %arg1: i32, %arg2: memref<1x8x128xf32, #tpu.memory_space<vmem>>, %arg3: memref<1x8x128xf32, #tpu.memory_space<vmem>>, %arg4: memref<1x1x8xf32, #tpu.memory_space<vmem>>, %arg5: memref<128x128xbf16, #tpu.memory_space<vmem>>, %arg6: memref<128x256xbf16, #tpu.memory_space<vmem>>, %arg7: memref<128x128xbf16, #tpu.memory_space<vmem>>, %arg8: memref<128x256xbf16, #tpu.memory_space<vmem>>, %arg9: memref<1x256xf32, #tpu.memory_space<vmem>>, %arg10: memref<256x128xbf16, #tpu.memory_space<vmem>>, %arg11: memref<1x128xf32, #tpu.memory_space<vmem>>, %arg12: memref<1x128xf32, #tpu.memory_space<vmem>>, %arg13: memref<1x128xf32, #tpu.memory_space<vmem>>, %arg14: memref<1x128xf32, #tpu.memory_space<vmem>>, %arg15: memref<1x128xf32, #tpu.memory_space<vmem>>, %arg16: memref<1x8x128xf32, #tpu.memory_space<vmem>>) attributes {dimension_semantics = [#tpu.dimension_semantics<parallel>, #tpu.dimension_semantics<parallel>], iteration_bounds = array<i64: 2, 1>, scalar_prefetch = 0 : i64, scratch_operands = 0 : i64, tpu.core_type = #tpu.core_type<tc>, window_params = [{transform_indices = @transform_0, window_bounds = array<i64: 1, 8, 128>}, {transform_indices = @transform_1, window_bounds = array<i64: 1, 8, 128>}, {transform_indices = @transform_2, window_bounds = array<i64: 1, 1, 8>}, {pipeline_mode = #tpu.pipeline_mode<synchronous>, transform_indices = @transform_3, window_bounds = array<i64: 128, 128>}, {pipeline_mode = #tpu.pipeline_mode<synchronous>, transform_indices = @transform_4, window_bounds = array<i64: 128, 256>}, {pipeline_mode = #tpu.pipeline_mode<synchronous>, transform_indices = @transform_5, window_bounds = array<i64: 128, 128>}, {pipeline_mode = #tpu.pipeline_mode<synchronous>, transform_indices = @transform_6, window_bounds = array<i64: 128, 256>}, {pipeline_mode = #tpu.pipeline_mode<synchronous>, transform_indices = @transform_7, window_bounds = array<i64: 1, 256>}, {pipeline_mode = #tpu.pipeline_mode<synchronous>, transform_indices = @transform_8, window_bounds = array<i64: 256, 128>}, {pipeline_mode = #tpu.pipeline_mode<synchronous>, transform_indices = @transform_9, window_bounds = array<i64: 1, 128>}, {pipeline_mode = #tpu.pipeline_mode<synchronous>, transform_indices = @transform_10, window_bounds = array<i64: 1, 128>}, {pipeline_mode = #tpu.pipeline_mode<synchronous>, transform_indices = @transform_11, window_bounds = array<i64: 1, 128>}, {pipeline_mode = #tpu.pipeline_mode<synchronous>, transform_indices = @transform_12, window_bounds = array<i64: 1, 128>}, {pipeline_mode = #tpu.pipeline_mode<synchronous>, transform_indices = @transform_13, window_bounds = array<i64: 1, 128>}, {transform_indices = @transform_14, window_bounds = array<i64: 1, 8, 128>}]} {
    %c0 = arith.constant 0 : index
    %c0_0 = arith.constant 0 : index
    %c0_1 = arith.constant 0 : index
    %0 = vector.load %arg2[%c0, %c0_0, %c0_1] : memref<1x8x128xf32, #tpu.memory_space<vmem>>, vector<1x8x128xf32>
    %1 = vector.shape_cast %0 : vector<1x8x128xf32> to vector<8x128xf32>
    %c0_2 = arith.constant 0 : index
    %c0_3 = arith.constant 0 : index
    %c0_4 = arith.constant 0 : index
    %2 = vector.load %arg3[%c0_2, %c0_3, %c0_4] : memref<1x8x128xf32, #tpu.memory_space<vmem>>, vector<1x8x128xf32>
    %3 = vector.shape_cast %2 : vector<1x8x128xf32> to vector<8x128xf32>
    %c0_5 = arith.constant 0 : index
    %c0_6 = arith.constant 0 : index
    %c0_7 = arith.constant 0 : index
    %4 = vector.load %arg4[%c0_5, %c0_6, %c0_7] : memref<1x1x8xf32, #tpu.memory_space<vmem>>, vector<1x1x8xf32>
    %5 = vector.shape_cast %4 : vector<1x1x8xf32> to vector<1x8xf32>
    %cst = arith.constant 3.200000e+01 : f32
    %6 = math.sqrt %cst : f32
    %cst_8 = arith.constant 1.000000e+00 : f32
    %7 = arith.divf %cst_8, %6 : f32
    %c0_9 = arith.constant 0 : index
    %c0_10 = arith.constant 0 : index
    %8 = vector.load %arg5[%c0_9, %c0_10] : memref<128x128xbf16, #tpu.memory_space<vmem>>, vector<128x128xbf16>
    %9 = arith.truncf %1 : vector<8x128xf32> to vector<8x128xbf16>
    %cst_11 = arith.constant dense<0.000000e+00> : vector<8x128xf32>
    %10 = tpu.matmul %9, %8, %cst_11 {dimension_numbers = #tpu.dot_dimension_numbers<[1], [0], [0], [1], [0, 0, 1, 1], [], []>} : vector<8x128xbf16>, vector<128x128xbf16>, vector<8x128xf32> -> vector<8x128xf32>
    %11 = vector.broadcast %7 : f32 to vector<8x128xf32>
    %12 = arith.mulf %10, %11 : vector<8x128xf32>
    %c0_12 = arith.constant 0 : index
    %c0_13 = arith.constant 0 : index
    %13 = vector.load %arg6[%c0_12, %c0_13] : memref<128x256xbf16, #tpu.memory_space<vmem>>, vector<128x256xbf16>
    %14 = arith.truncf %3 : vector<8x128xf32> to vector<8x128xbf16>
    %cst_14 = arith.constant dense<0.000000e+00> : vector<8x256xf32>
    %15 = tpu.matmul %14, %13, %cst_14 {dimension_numbers = #tpu.dot_dimension_numbers<[1], [0], [0], [1], [0, 0, 1, 1], [], []>} : vector<8x128xbf16>, vector<128x256xbf16>, vector<8x256xf32> -> vector<8x256xf32>
    %16 = vector.extract_strided_slice %15 {offsets = [0, 0], sizes = [8, 128], strides = [1, 1]} : vector<8x256xf32> to vector<8x128xf32>
    %17 = vector.extract_strided_slice %15 {offsets = [0, 128], sizes = [8, 128], strides = [1, 1]} : vector<8x256xf32> to vector<8x128xf32>
    %18 = vector.shape_cast %12 : vector<8x128xf32> to vector<8x4x32xf32>
    %19 = vector.shape_cast %16 : vector<8x128xf32> to vector<8x4x32xf32>
    %20 = vector.shape_cast %17 : vector<8x128xf32> to vector<8x4x32xf32>
    %cst_15 = arith.constant 0.000000e+00 : f32
    %21 = vector.broadcast %cst_15 : f32 to vector<1x8xf32>
    %22 = arith.cmpf oeq, %5, %21 : vector<1x8xf32>
    %cst_16 = arith.constant -1.000000e+09 : f32
    %cst_17 = arith.constant 0.000000e+00 : f32
    %23 = vector.broadcast %cst_16 : f32 to vector<1x8xf32>
    %24 = vector.broadcast %cst_17 : f32 to vector<1x8xf32>
    %25 = arith.select %22, %23, %24 : vector<1x8xi1>, vector<1x8xf32>
    %26 = arith.truncf %18 : vector<8x4x32xf32> to vector<8x4x32xbf16>
    %27 = arith.truncf %19 : vector<8x4x32xf32> to vector<8x4x32xbf16>
    "tpu.trace_start"() <{level = 10 : i32, message = "qhd,khd->hqk"}> : () -> ()
    %cst_18 = arith.constant dense<0.000000e+00> : vector<4x8x8xf32>
    %28 = tpu.matmul %26, %27, %cst_18 {dimension_numbers = #tpu.dot_dimension_numbers<[2], [2], [0], [0], [0, 1, 0, 0, 1, 0], [1], [1]>} : vector<8x4x32xbf16>, vector<8x4x32xbf16>, vector<4x8x8xf32> -> vector<4x8x8xf32>
    "tpu.trace_stop"() : () -> ()
    %29 = vector.shape_cast %25 : vector<1x8xf32> to vector<1x1x8xf32>
    %30 = vector.broadcast %29 : vector<1x1x8xf32> to vector<4x8x8xf32>
    %31 = arith.addf %28, %30 : vector<4x8x8xf32>
    %cst_19 = arith.constant dense<0xFF800000> : vector<4x8xf32>
    %32 = vector.multi_reduction <maximumf>, %31, %cst_19 [2] : vector<4x8x8xf32> to vector<4x8xf32>
    %33 = vector.shape_cast %32 : vector<4x8xf32> to vector<4x8x1xf32>
    %34 = vector.broadcast %33 : vector<4x8x1xf32> to vector<4x8x8xf32>
    %35 = arith.subf %31, %34 : vector<4x8x8xf32>
    %36 = math.exp %35 : vector<4x8x8xf32>
    %cst_20 = arith.constant dense<0.000000e+00> : vector<4x8xf32>
    %37 = vector.multi_reduction <add>, %36, %cst_20 [2] : vector<4x8x8xf32> to vector<4x8xf32>
    %38 = vector.shape_cast %37 : vector<4x8xf32> to vector<4x8x1xf32>
    %39 = tpu.reciprocal %38 {approx = true} : vector<4x8x1xf32> -> vector<4x8x1xf32>
    %40 = vector.broadcast %39 : vector<4x8x1xf32> to vector<4x8x8xf32>
    %41 = arith.mulf %36, %40 : vector<4x8x8xf32>
    %42 = arith.truncf %41 : vector<4x8x8xf32> to vector<4x8x8xbf16>
    %43 = arith.truncf %20 : vector<8x4x32xf32> to vector<8x4x32xbf16>
    "tpu.trace_start"() <{level = 10 : i32, message = "hqk,khd->qhd"}> : () -> ()
    %cst_21 = arith.constant dense<0.000000e+00> : vector<4x32x8xf32>
    %44 = tpu.matmul %43, %42, %cst_21 {dimension_numbers = #tpu.dot_dimension_numbers<[0], [2], [2], [1], [0, 1, 0, 2, 1, 1], [1], [0]>} : vector<8x4x32xbf16>, vector<4x8x8xbf16>, vector<4x32x8xf32> -> vector<4x32x8xf32>
    %45 = tpu.transpose %44, [2, 0, 1] : vector<4x32x8xf32> -> vector<8x4x32xf32>
    "tpu.trace_stop"() : () -> ()
    %46 = vector.shape_cast %45 : vector<8x4x32xf32> to vector<8x128xf32>
    %c0_22 = arith.constant 0 : index
    %c0_23 = arith.constant 0 : index
    %47 = vector.load %arg7[%c0_22, %c0_23] : memref<128x128xbf16, #tpu.memory_space<vmem>>, vector<128x128xbf16>
    %48 = arith.truncf %46 : vector<8x128xf32> to vector<8x128xbf16>
    %cst_24 = arith.constant dense<0.000000e+00> : vector<8x128xf32>
    %49 = tpu.matmul %48, %47, %cst_24 {dimension_numbers = #tpu.dot_dimension_numbers<[1], [0], [0], [1], [0, 0, 1, 1], [], []>} : vector<8x128xbf16>, vector<128x128xbf16>, vector<8x128xf32> -> vector<8x128xf32>
    %50 = arith.addf %1, %49 : vector<8x128xf32>
    %c0_25 = arith.constant 0 : index
    %c0_26 = arith.constant 0 : index
    %51 = vector.load %arg12[%c0_25, %c0_26] : memref<1x128xf32, #tpu.memory_space<vmem>>, vector<1x128xf32>
    %52 = vector.shape_cast %51 : vector<1x128xf32> to vector<128xf32>
    %c0_27 = arith.constant 0 : index
    %c0_28 = arith.constant 0 : index
    %53 = vector.load %arg13[%c0_27, %c0_28] : memref<1x128xf32, #tpu.memory_space<vmem>>, vector<1x128xf32>
    %54 = vector.shape_cast %53 : vector<1x128xf32> to vector<128xf32>
    %cst_29 = arith.constant dense<0.000000e+00> : vector<8xf32>
    %55 = vector.multi_reduction <add>, %50, %cst_29 [1] : vector<8x128xf32> to vector<8xf32>
    %56 = vector.shape_cast %55 : vector<8xf32> to vector<8x1xf32>
    %cst_30 = arith.constant 1.280000e+02 : f32
    %57 = vector.broadcast %cst_30 : f32 to vector<8x1xf32>
    %58 = arith.divf %56, %57 : vector<8x1xf32>
    %59 = vector.broadcast %58 : vector<8x1xf32> to vector<8x128xf32>
    %60 = arith.subf %50, %59 : vector<8x128xf32>
    %61 = arith.mulf %60, %60 : vector<8x128xf32>
    %cst_31 = arith.constant dense<0.000000e+00> : vector<8xf32>
    %62 = vector.multi_reduction <add>, %61, %cst_31 [1] : vector<8x128xf32> to vector<8xf32>
    %63 = vector.shape_cast %62 : vector<8xf32> to vector<8x1xf32>
    %cst_32 = arith.constant 1.280000e+02 : f32
    %64 = vector.broadcast %cst_32 : f32 to vector<8x1xf32>
    %65 = arith.divf %63, %64 : vector<8x1xf32>
    %66 = vector.broadcast %58 : vector<8x1xf32> to vector<8x128xf32>
    %67 = arith.subf %50, %66 : vector<8x128xf32>
    %cst_33 = arith.constant 9.99999974E-6 : f32
    %68 = vector.broadcast %cst_33 : f32 to vector<8x1xf32>
    %69 = arith.addf %65, %68 : vector<8x1xf32>
    %70 = math.rsqrt %69 : vector<8x1xf32>
    %71 = vector.broadcast %70 : vector<8x1xf32> to vector<8x128xf32>
    %72 = arith.mulf %67, %71 : vector<8x128xf32>
    %73 = vector.shape_cast %52 : vector<128xf32> to vector<1x128xf32>
    %74 = vector.broadcast %73 : vector<1x128xf32> to vector<8x128xf32>
    %75 = arith.mulf %72, %74 : vector<8x128xf32>
    %76 = vector.shape_cast %54 : vector<128xf32> to vector<1x128xf32>
    %77 = vector.broadcast %76 : vector<1x128xf32> to vector<8x128xf32>
    %78 = arith.addf %75, %77 : vector<8x128xf32>
    %c0_34 = arith.constant 0 : index
    %c0_35 = arith.constant 0 : index
    %79 = vector.load %arg8[%c0_34, %c0_35] : memref<128x256xbf16, #tpu.memory_space<vmem>>, vector<128x256xbf16>
    %80 = arith.truncf %78 : vector<8x128xf32> to vector<8x128xbf16>
    %cst_36 = arith.constant dense<0.000000e+00> : vector<8x256xf32>
    %81 = tpu.matmul %80, %79, %cst_36 {dimension_numbers = #tpu.dot_dimension_numbers<[1], [0], [0], [1], [0, 0, 1, 1], [], []>} : vector<8x128xbf16>, vector<128x256xbf16>, vector<8x256xf32> -> vector<8x256xf32>
    %c0_37 = arith.constant 0 : index
    %c0_38 = arith.constant 0 : index
    %82 = vector.load %arg9[%c0_37, %c0_38] : memref<1x256xf32, #tpu.memory_space<vmem>>, vector<1x256xf32>
    %83 = vector.shape_cast %82 : vector<1x256xf32> to vector<256xf32>
    %84 = vector.shape_cast %83 : vector<256xf32> to vector<1x256xf32>
    %85 = vector.broadcast %84 : vector<1x256xf32> to vector<8x256xf32>
    %86 = arith.addf %81, %85 : vector<8x256xf32>
    %cst_39 = arith.constant 0.000000e+00 : f32
    %87 = vector.broadcast %cst_39 : f32 to vector<8x256xf32>
    %88 = arith.maximumf %86, %87 : vector<8x256xf32>
    %c0_40 = arith.constant 0 : index
    %c0_41 = arith.constant 0 : index
    %89 = vector.load %arg10[%c0_40, %c0_41] : memref<256x128xbf16, #tpu.memory_space<vmem>>, vector<256x128xbf16>
    %90 = arith.truncf %88 : vector<8x256xf32> to vector<8x256xbf16>
    %cst_42 = arith.constant dense<0.000000e+00> : vector<8x128xf32>
    %91 = tpu.matmul %90, %89, %cst_42 {dimension_numbers = #tpu.dot_dimension_numbers<[1], [0], [0], [1], [0, 0, 1, 1], [], []>} : vector<8x256xbf16>, vector<256x128xbf16>, vector<8x128xf32> -> vector<8x128xf32>
    %c0_43 = arith.constant 0 : index
    %c0_44 = arith.constant 0 : index
    %92 = vector.load %arg11[%c0_43, %c0_44] : memref<1x128xf32, #tpu.memory_space<vmem>>, vector<1x128xf32>
    %93 = vector.shape_cast %92 : vector<1x128xf32> to vector<128xf32>
    %94 = vector.shape_cast %93 : vector<128xf32> to vector<1x128xf32>
    %95 = vector.broadcast %94 : vector<1x128xf32> to vector<8x128xf32>
    %96 = arith.addf %91, %95 : vector<8x128xf32>
    %97 = arith.addf %78, %96 : vector<8x128xf32>
    %c0_45 = arith.constant 0 : index
    %c0_46 = arith.constant 0 : index
    %98 = vector.load %arg14[%c0_45, %c0_46] : memref<1x128xf32, #tpu.memory_space<vmem>>, vector<1x128xf32>
    %99 = vector.shape_cast %98 : vector<1x128xf32> to vector<128xf32>
    %c0_47 = arith.constant 0 : index
    %c0_48 = arith.constant 0 : index
    %100 = vector.load %arg15[%c0_47, %c0_48] : memref<1x128xf32, #tpu.memory_space<vmem>>, vector<1x128xf32>
    %101 = vector.shape_cast %100 : vector<1x128xf32> to vector<128xf32>
    %cst_49 = arith.constant dense<0.000000e+00> : vector<8xf32>
    %102 = vector.multi_reduction <add>, %97, %cst_49 [1] : vector<8x128xf32> to vector<8xf32>
    %103 = vector.shape_cast %102 : vector<8xf32> to vector<8x1xf32>
    %cst_50 = arith.constant 1.280000e+02 : f32
    %104 = vector.broadcast %cst_50 : f32 to vector<8x1xf32>
    %105 = arith.divf %103, %104 : vector<8x1xf32>
    %106 = vector.broadcast %105 : vector<8x1xf32> to vector<8x128xf32>
    %107 = arith.subf %97, %106 : vector<8x128xf32>
    %108 = arith.mulf %107, %107 : vector<8x128xf32>
    %cst_51 = arith.constant dense<0.000000e+00> : vector<8xf32>
    %109 = vector.multi_reduction <add>, %108, %cst_51 [1] : vector<8x128xf32> to vector<8xf32>
    %110 = vector.shape_cast %109 : vector<8xf32> to vector<8x1xf32>
    %cst_52 = arith.constant 1.280000e+02 : f32
    %111 = vector.broadcast %cst_52 : f32 to vector<8x1xf32>
    %112 = arith.divf %110, %111 : vector<8x1xf32>
    %113 = vector.broadcast %105 : vector<8x1xf32> to vector<8x128xf32>
    %114 = arith.subf %97, %113 : vector<8x128xf32>
    %cst_53 = arith.constant 9.99999974E-6 : f32
    %115 = vector.broadcast %cst_53 : f32 to vector<8x1xf32>
    %116 = arith.addf %112, %115 : vector<8x1xf32>
    %117 = math.rsqrt %116 : vector<8x1xf32>
    %118 = vector.broadcast %117 : vector<8x1xf32> to vector<8x128xf32>
    %119 = arith.mulf %114, %118 : vector<8x128xf32>
    %120 = vector.shape_cast %99 : vector<128xf32> to vector<1x128xf32>
    %121 = vector.broadcast %120 : vector<1x128xf32> to vector<8x128xf32>
    %122 = arith.mulf %119, %121 : vector<8x128xf32>
    %123 = vector.shape_cast %101 : vector<128xf32> to vector<1x128xf32>
    %124 = vector.broadcast %123 : vector<1x128xf32> to vector<8x128xf32>
    %125 = arith.addf %122, %124 : vector<8x128xf32>
    %c0_54 = arith.constant 0 : index
    %c0_55 = arith.constant 0 : index
    %c0_56 = arith.constant 0 : index
    %126 = vector.load %arg16[%c0_54, %c0_55, %c0_56] : memref<1x8x128xf32, #tpu.memory_space<vmem>>, vector<1x8x128xf32>
    %127 = vector.shape_cast %126 : vector<1x8x128xf32> to vector<8x128xf32>
    %128 = vector.shape_cast %125 : vector<8x128xf32> to vector<1x8x128xf32>
    tpu.vector_store %arg16[%c0_54, %c0_55, %c0_56], %128 {strides = array<i32>} : memref<1x8x128xf32, #tpu.memory_space<vmem>>, vector<1x8x128xf32>,
    return
  }
  func.func @transform_0(%arg0: i32, %arg1: i32) -> (i32, i32, i32) {
    %c0_i32 = arith.constant 0 : i32
    %c0_i32_0 = arith.constant 0 : i32
    return %arg0, %arg1, %c0_i32 : i32, i32, i32
  }
  func.func @transform_1(%arg0: i32, %arg1: i32) -> (i32, i32, i32) {
    %c0_i32 = arith.constant 0 : i32
    %c0_i32_0 = arith.constant 0 : i32
    %c0_i32_1 = arith.constant 0 : i32
    return %arg0, %c0_i32, %c0_i32_0 : i32, i32, i32
  }
  func.func @transform_2(%arg0: i32, %arg1: i32) -> (i32, i32, i32) {
    %c0_i32 = arith.constant 0 : i32
    %c0_i32_0 = arith.constant 0 : i32
    %c0_i32_1 = arith.constant 0 : i32
    return %arg0, %c0_i32, %c0_i32_0 : i32, i32, i32
  }
  func.func @transform_3(%arg0: i32, %arg1: i32) -> (i32, i32) {
    %c0_i32 = arith.constant 0 : i32
    %c0_i32_0 = arith.constant 0 : i32
    %c0_i32_1 = arith.constant 0 : i32
    return %c0_i32, %c0_i32_0 : i32, i32
  }
  func.func @transform_4(%arg0: i32, %arg1: i32) -> (i32, i32) {
    %c0_i32 = arith.constant 0 : i32
    %c0_i32_0 = arith.constant 0 : i32
    %c0_i32_1 = arith.constant 0 : i32
    return %c0_i32, %c0_i32_0 : i32, i32
  }
  func.func @transform_5(%arg0: i32, %arg1: i32) -> (i32, i32) {
    %c0_i32 = arith.constant 0 : i32
    %c0_i32_0 = arith.constant 0 : i32
    %c0_i32_1 = arith.constant 0 : i32
    return %c0_i32, %c0_i32_0 : i32, i32
  }
  func.func @transform_6(%arg0: i32, %arg1: i32) -> (i32, i32) {
    %c0_i32 = arith.constant 0 : i32
    %c0_i32_0 = arith.constant 0 : i32
    %c0_i32_1 = arith.constant 0 : i32
    return %c0_i32, %c0_i32_0 : i32, i32
  }
  func.func @transform_7(%arg0: i32, %arg1: i32) -> (i32, i32) {
    %c0_i32 = arith.constant 0 : i32
    %c0_i32_0 = arith.constant 0 : i32
    %c0_i32_1 = arith.constant 0 : i32
    return %c0_i32, %c0_i32_0 : i32, i32
  }
  func.func @transform_8(%arg0: i32, %arg1: i32) -> (i32, i32) {
    %c0_i32 = arith.constant 0 : i32
    %c0_i32_0 = arith.constant 0 : i32
    %c0_i32_1 = arith.constant 0 : i32
    return %c0_i32, %c0_i32_0 : i32, i32
  }
  func.func @transform_9(%arg0: i32, %arg1: i32) -> (i32, i32) {
    %c0_i32 = arith.constant 0 : i32
    %c0_i32_0 = arith.constant 0 : i32
    %c0_i32_1 = arith.constant 0 : i32
    return %c0_i32, %c0_i32_0 : i32, i32
  }
  func.func @transform_10(%arg0: i32, %arg1: i32) -> (i32, i32) {
    %c0_i32 = arith.constant 0 : i32
    %c0_i32_0 = arith.constant 0 : i32
    %c0_i32_1 = arith.constant 0 : i32
    return %c0_i32, %c0_i32_0 : i32, i32
  }
  func.func @transform_11(%arg0: i32, %arg1: i32) -> (i32, i32) {
    %c0_i32 = arith.constant 0 : i32
    %c0_i32_0 = arith.constant 0 : i32
    %c0_i32_1 = arith.constant 0 : i32
    return %c0_i32, %c0_i32_0 : i32, i32
  }
  func.func @transform_12(%arg0: i32, %arg1: i32) -> (i32, i32) {
    %c0_i32 = arith.constant 0 : i32
    %c0_i32_0 = arith.constant 0 : i32
    %c0_i32_1 = arith.constant 0 : i32
    return %c0_i32, %c0_i32_0 : i32, i32
  }
  func.func @transform_13(%arg0: i32, %arg1: i32) -> (i32, i32) {
    %c0_i32 = arith.constant 0 : i32
    %c0_i32_0 = arith.constant 0 : i32
    %c0_i32_1 = arith.constant 0 : i32
    return %c0_i32, %c0_i32_0 : i32, i32
  }
  func.func @transform_14(%arg0: i32, %arg1: i32) -> (i32, i32, i32) {
    %c0_i32 = arith.constant 0 : i32
    %c0_i32_0 = arith.constant 0 : i32
    return %arg0, %arg1, %c0_i32 : i32, i32, i32
  }
}

</mosaic_0001>

<llo_original>
// kernel: tpu_custom_call.1
$region0: #{tpu_custom_call.1}
  #allocation0 [shape = 'u32[]', space=smem, size = 0x4, offset = 0x4, fixed_abs, tag = 'smem constant byte address 0x4 - core index']
  #allocation1 [shape = 'u32[144,128]{1,0:T(1,128)}', space=vmem, size = 0x12000, scoped, tag = 'internal scratch']
  %s0 = inlined_call_operand.hbm [shape: f32[2,8,128], index: 0, kind: input, shape index: {}]
  %s1 = inlined_call_operand.hbm [shape: f32[2,8,128], index: 1, kind: input, shape index: {}]
  %s2 = inlined_call_operand.vmem [shape: f32[2,1,8], index: 2, kind: input, shape index: {}]
  %s3 = inlined_call_operand.hbm [shape: bf16[128,128], index: 3, kind: input, shape index: {}]
  %s4 = inlined_call_operand.hbm [shape: bf16[128,256], index: 4, kind: input, shape index: {}]
  %s5 = inlined_call_operand.hbm [shape: bf16[128,128], index: 5, kind: input, shape index: {}]
  %s6 = inlined_call_operand.hbm [shape: bf16[128,256], index: 6, kind: input, shape index: {}]
  %s7 = inlined_call_operand.vmem [shape: f32[1,256], index: 7, kind: input, shape index: {}]
  %s8 = inlined_call_operand.hbm [shape: bf16[256,128], index: 8, kind: input, shape index: {}]
  %s9 = inlined_call_operand.vmem [shape: f32[1,128], index: 9, kind: input, shape index: {}]
  %s10 = inlined_call_operand.vmem [shape: f32[1,128], index: 10, kind: input, shape index: {}]
  %s11 = inlined_call_operand.vmem [shape: f32[1,128], index: 11, kind: input, shape index: {}]
  %s12 = inlined_call_operand.vmem [shape: f32[1,128], index: 12, kind: input, shape index: {}]
  %s13 = inlined_call_operand.vmem [shape: f32[1,128], index: 13, kind: input, shape index: {}]
  %s14 = inlined_call_operand.hbm [shape: f32[2,8,128], index: 14, kind: output, shape index: {}]
  %s15 = sld [smem:[#allocation0]]
  $region117: #{tpu_custom_call.1} parent=0
    _
  %s17 = ssub.s32 1, %s15
  %s18 = scalar_select 0, %s17, %s15
  $region1: #{tpu_custom_call.1} parent=0
    #allocation2 [shape = 'u8[8192]{0}', space=vmem, size = 0x2000, scoped, tag = 'input window, operand 0']
    #allocation3 [shape = 's32[2]{0}', space=sflag, size = 0x8, scoped, tag = 'scoped memory for tpu_custom_call.1']
    #allocation4 [shape = 's32[2]{0}', space=sflag, size = 0x8, scoped, tag = 'scoped memory for tpu_custom_call.1']
    #allocation5 [shape = 'u8[8192]{0}', space=vmem, size = 0x2000, scoped, tag = 'input window, operand 1']
    #allocation6 [shape = 's32[2]{0}', space=sflag, size = 0x8, scoped, tag = 'scoped memory for tpu_custom_call.1']
    #allocation7 [shape = 'u8[32768]{0}', space=vmem, size = 0x8000, scoped, tag = 'input window, operand 3, single buffered']
    #allocation8 [shape = 'u8[65536]{0}', space=vmem, size = 0x10000, scoped, tag = 'input window, operand 4, single buffered']
    #allocation9 [shape = 's32[1]{0}', space=sflag, size = 0x4, scoped, tag = 'scoped memory for tpu_custom_call.1']
    #allocation10 [shape = 'u8[32768]{0}', space=vmem, size = 0x8000, scoped, tag = 'input window, operand 5, single buffered']
    #allocation11 [shape = 'u8[65536]{0}', space=vmem, size = 0x10000, scoped, tag = 'input window, operand 6, single buffered']
    #allocation12 [shape = 's32[1]{0}', space=sflag, size = 0x4, scoped, tag = 'scoped memory for tpu_custom_call.1']
    #allocation13 [shape = 'u8[65536]{0}', space=vmem, size = 0x10000, scoped, tag = 'input window, operand 8, single buffered']
    #allocation14 [shape = 'u8[8192]{0}', space=vmem, size = 0x2000, scoped, tag = 'output window, operand 0']
    %19 = vsyncpa [#allocation3], 0
    %s20 = scalar_lea.sflag [#allocation3], 1
    %21 = vsyncpa %s20, 0
    %22 = vsyncpa [#allocation6], 0
    %s23 = scalar_lea.sflag [#allocation6], 1
    %24 = vsyncpa %s23, 0
    %25 = vsyncpa [#allocation9], 0
    %26 = vsyncpa [#allocation12], 0
    %27 = vsyncpa [#allocation4], 0
    %s28 = scalar_lea.sflag [#allocation4], 1
    %29 = vsyncpa %s28, 0
    loop: start=0, step=1, limit=4
    $region2: #{tpu_custom_call.1} parent=1 // loop_pre_header
      _
    $region3: #{tpu_custom_call.1} parent=1 // loop_header
      %s31 = sphi 0, %s35
      %p32 = scmp.ge.s32.totalorder %s31, 4
      %s38 = sphi 0, %s50
      %s39 = sphi 0, %s46
      %s40 = sphi 0, %s38
      %s41 = sphi 0, %s39
      %s42 = sphi 0, %s40
      %s43 = sphi 0, %s41
      %s55 = sphi 0, %s57
      %s58 = sphi 0, %s55
      %s59 = sphi 0, %s58
      %s75 = sphi 0, %s59
      %s81 = sphi 0, %s83
      %s84 = sphi 0, %s81
      %s85 = sphi 0, %s84
      %s101 = sphi 0, %s85
      %s107 = sphi 0, %s109
      %s110 = sphi 0, %s107
      %s111 = sphi 0, %s110
      %s127 = sphi 0, %s111
      %s131 = sphi 0, %s131
      %s133 = sphi 0, %s131
      %s134 = sphi 0, %s133
      %s148 = sphi 0, %s134
      %s152 = sphi 0, %s152
      %s154 = sphi 0, %s152
      %s155 = sphi 0, %s154
      %s169 = sphi 0, %s155
      %s173 = sphi 0, %s173
      %s175 = sphi 0, %s173
      %s176 = sphi 0, %s175
      %s190 = sphi 0, %s176
      %s194 = sphi 0, %s194
      %s196 = sphi 0, %s194
      %s197 = sphi 0, %s196
      %s211 = sphi 0, %s197
      %s215 = sphi 0, %s215
      %s217 = sphi 0, %s215
      %s218 = sphi 0, %s217
      %s232 = sphi 0, %s218
      %s236 = sphi 0, %s236
      %s238 = sphi 0, %s236
      %s239 = sphi 0, %s238
      %s253 = sphi 0, %s239
      %s257 = sphi 0, %s257
      %s259 = sphi 0, %s257
      %s260 = sphi 0, %s259
      %s274 = sphi 0, %s260
      %s278 = sphi 0, %s278
      %s280 = sphi 0, %s278
      %s281 = sphi 0, %s280
      %s295 = sphi 0, %s281
      %s299 = sphi 0, %s299
      %s301 = sphi 0, %s299
      %s302 = sphi 0, %s301
      %s316 = sphi 0, %s302
      %s320 = sphi 0, %s320
      %s322 = sphi 0, %s320
      %s323 = sphi 0, %s322
      %s337 = sphi 0, %s323
      %s341 = sphi 0, %s341
      %s343 = sphi 0, %s341
      %s344 = sphi 0, %s343
      %s358 = sphi 0, %s344
      %s366 = sphi 0, %s368
      %s369 = sphi 0, %s366
      %s370 = sphi 0, %s369
      %s386 = sphi 0, %s370
    $region4: #{tpu_custom_call.1} parent=1 // loop_header_branch
      %34 = sbr.rel (%p32) target = $region8
    $region5: #{tpu_custom_call.1} parent=1 // loop_body
      %s36 = ssub.s32 %s31, 1
      %s37 = ssub.s32 %s31, 2
      %s44 = sadd.s32 1, %s39
      %p45 = scmp.ge.s32.totalorder %s44, 1
      %s46 = scalar_select %p45, 0, %s44
      %s47 = sadd.s32 1, %s38
      %s48 = scalar_select %p45, %s47, %s38
      %p49 = scmp.ge.s32.totalorder %s48, 2
      %s50 = scalar_select %p49, 0, %s48
      %s51 = ssub.s32 %s38, %s50
      %s52 = ssub.s32 %s39, %s46
      %s53 = sor.u32 %s51, %s52
      %p54 = scmp.eq.s32.totalorder %s53, 0
      %s56 = sadd.s32 %s55, 1
      %s57 = scalar_select %p54, %s55, %s56
      %p60 = pneg %p54
      %p61 = scmp.eq.s32.totalorder %s31, 1
      %p62 = por %p60, %p61
      %p63 = scmp.ne.s32.totalorder %s55, %s58
      %p64 = scmp.eq.s32.totalorder %s31, 0
      %p65 = por %p63, %p64
      %p66 = scmp.ne.s32.totalorder %s55, %s58
      %p67 = scmp.eq.s32.totalorder %s36, 1
      %p68 = por %p66, %p67
      %p69 = scmp.ne.s32.totalorder %s58, %s59
      %p70 = scmp.eq.s32.totalorder %s36, 0
      %p71 = por %p69, %p70
      %p72 = scmp.ne.s32.totalorder %s58, %s59
      %p73 = scmp.eq.s32.totalorder %s37, 1
      %p74 = por %p72, %p73
      %p76 = scmp.ne.s32.totalorder %s59, %s75
      %p77 = scmp.eq.s32.totalorder %s37, 0
      %p78 = por %p76, %p77
      %s79 = ssub.s32 %s38, %s50
      %p80 = scmp.eq.s32.totalorder %s79, 0
      %s82 = sadd.s32 %s81, 1
      %s83 = scalar_select %p80, %s81, %s82
      %p86 = pneg %p80
      %p87 = scmp.eq.s32.totalorder %s31, 1
      %p88 = por %p86, %p87
      %p89 = scmp.ne.s32.totalorder %s81, %s84
      %p90 = scmp.eq.s32.totalorder %s31, 0
      %p91 = por %p89, %p90
      %p92 = scmp.ne.s32.totalorder %s81, %s84
      %p93 = scmp.eq.s32.totalorder %s36, 1
      %p94 = por %p92, %p93
      %p95 = scmp.ne.s32.totalorder %s84, %s85
      %p96 = scmp.eq.s32.totalorder %s36, 0
      %p97 = por %p95, %p96
      %p98 = scmp.ne.s32.totalorder %s84, %s85
      %p99 = scmp.eq.s32.totalorder %s37, 1
      %p100 = por %p98, %p99
      %p102 = scmp.ne.s32.totalorder %s85, %s101
      %p103 = scmp.eq.s32.totalorder %s37, 0
      %p104 = por %p102, %p103
      %s105 = ssub.s32 %s38, %s50
      %p106 = scmp.eq.s32.totalorder %s105, 0
      %s108 = sadd.s32 %s107, 1
      %s109 = scalar_select %p106, %s107, %s108
      %p112 = pneg %p106
      %p113 = scmp.eq.s32.totalorder %s31, 1
      %p114 = por %p112, %p113
      %p115 = scmp.ne.s32.totalorder %s107, %s110
      %p116 = scmp.eq.s32.totalorder %s31, 0
      %p117 = por %p115, %p116
      %p118 = scmp.ne.s32.totalorder %s107, %s110
      %p119 = scmp.eq.s32.totalorder %s36, 1
      %p120 = por %p118, %p119
      %p121 = scmp.ne.s32.totalorder %s110, %s111
      %p122 = scmp.eq.s32.totalorder %s36, 0
      %p123 = por %p121, %p122
      %p124 = scmp.ne.s32.totalorder %s110, %s111
      %p125 = scmp.eq.s32.totalorder %s37, 1
      %p126 = por %p124, %p125
      %p128 = scmp.ne.s32.totalorder %s111, %s127
      %p129 = scmp.eq.s32.totalorder %s37, 0
      %p130 = por %p128, %p129
      %s132 = sadd.s32 %s131, 1
      %p135 = scmp.eq.s32.totalorder %s31, 1
      %p136 = scmp.ne.s32.totalorder %s131, %s133
      %p137 = scmp.eq.s32.totalorder %s31, 0
      %p138 = por %p136, %p137
      %p139 = scmp.ne.s32.totalorder %s131, %s133
      %p140 = scmp.eq.s32.totalorder %s36, 1
      %p141 = por %p139, %p140
      %p142 = scmp.ne.s32.totalorder %s133, %s134
      %p143 = scmp.eq.s32.totalorder %s36, 0
      %p144 = por %p142, %p143
      %p145 = scmp.ne.s32.totalorder %s133, %s134
      %p146 = scmp.eq.s32.totalorder %s37, 1
      %p147 = por %p145, %p146
      %p149 = scmp.ne.s32.totalorder %s134, %s148
      %p150 = scmp.eq.s32.totalorder %s37, 0
      %p151 = por %p149, %p150
      %s153 = sadd.s32 %s152, 1
      %p156 = scmp.eq.s32.totalorder %s31, 1
      %p157 = scmp.ne.s32.totalorder %s152, %s154
      %p158 = scmp.eq.s32.totalorder %s31, 0
      %p159 = por %p157, %p158
      %p160 = scmp.ne.s32.totalorder %s152, %s154
      %p161 = scmp.eq.s32.totalorder %s36, 1
      %p162 = por %p160, %p161
      %p163 = scmp.ne.s32.totalorder %s154, %s155
      %p164 = scmp.eq.s32.totalorder %s36, 0
      %p165 = por %p163, %p164
      %p166 = scmp.ne.s32.totalorder %s154, %s155
      %p167 = scmp.eq.s32.totalorder %s37, 1
      %p168 = por %p166, %p167
      %p170 = scmp.ne.s32.totalorder %s155, %s169
      %p171 = scmp.eq.s32.totalorder %s37, 0
      %p172 = por %p170, %p171
      %s174 = sadd.s32 %s173, 1
      %p177 = scmp.eq.s32.totalorder %s31, 1
      %p178 = scmp.ne.s32.totalorder %s173, %s175
      %p179 = scmp.eq.s32.totalorder %s31, 0
      %p180 = por %p178, %p179
      %p181 = scmp.ne.s32.totalorder %s173, %s175
      %p182 = scmp.eq.s32.totalorder %s36, 1
      %p183 = por %p181, %p182
      %p184 = scmp.ne.s32.totalorder %s175, %s176
      %p185 = scmp.eq.s32.totalorder %s36, 0
      %p186 = por %p184, %p185
      %p187 = scmp.ne.s32.totalorder %s175, %s176
      %p188 = scmp.eq.s32.totalorder %s37, 1
      %p189 = por %p187, %p188
      %p191 = scmp.ne.s32.totalorder %s176, %s190
      %p192 = scmp.eq.s32.totalorder %s37, 0
      %p193 = por %p191, %p192
      %s195 = sadd.s32 %s194, 1
      %p198 = scmp.eq.s32.totalorder %s31, 1
      %p199 = scmp.ne.s32.totalorder %s194, %s196
      %p200 = scmp.eq.s32.totalorder %s31, 0
      %p201 = por %p199, %p200
      %p202 = scmp.ne.s32.totalorder %s194, %s196
      %p203 = scmp.eq.s32.totalorder %s36, 1
      %p204 = por %p202, %p203
      %p205 = scmp.ne.s32.totalorder %s196, %s197
      %p206 = scmp.eq.s32.totalorder %s36, 0
      %p207 = por %p205, %p206
      %p208 = scmp.ne.s32.totalorder %s196, %s197
      %p209 = scmp.eq.s32.totalorder %s37, 1
      %p210 = por %p208, %p209
      %p212 = scmp.ne.s32.totalorder %s197, %s211
      %p213 = scmp.eq.s32.totalorder %s37, 0
      %p214 = por %p212, %p213
      %s216 = sadd.s32 %s215, 1
      %p219 = scmp.eq.s32.totalorder %s31, 1
      %p220 = scmp.ne.s32.totalorder %s215, %s217
      %p221 = scmp.eq.s32.totalorder %s31, 0
      %p222 = por %p220, %p221
      %p223 = scmp.ne.s32.totalorder %s215, %s217
      %p224 = scmp.eq.s32.totalorder %s36, 1
      %p225 = por %p223, %p224
      %p226 = scmp.ne.s32.totalorder %s217, %s218
      %p227 = scmp.eq.s32.totalorder %s36, 0
      %p228 = por %p226, %p227
      %p229 = scmp.ne.s32.totalorder %s217, %s218
      %p230 = scmp.eq.s32.totalorder %s37, 1
      %p231 = por %p229, %p230
      %p233 = scmp.ne.s32.totalorder %s218, %s232
      %p234 = scmp.eq.s32.totalorder %s37, 0
      %p235 = por %p233, %p234
      %s237 = sadd.s32 %s236, 1
      %p240 = scmp.eq.s32.totalorder %s31, 1
      %p241 = scmp.ne.s32.totalorder %s236, %s238
      %p242 = scmp.eq.s32.totalorder %s31, 0
      %p243 = por %p241, %p242
      %p244 = scmp.ne.s32.totalorder %s236, %s238
      %p245 = scmp.eq.s32.totalorder %s36, 1
      %p246 = por %p244, %p245
      %p247 = scmp.ne.s32.totalorder %s238, %s239
      %p248 = scmp.eq.s32.totalorder %s36, 0
      %p249 = por %p247, %p248
      %p250 = scmp.ne.s32.totalorder %s238, %s239
      %p251 = scmp.eq.s32.totalorder %s37, 1
      %p252 = por %p250, %p251
      %p254 = scmp.ne.s32.totalorder %s239, %s253
      %p255 = scmp.eq.s32.totalorder %s37, 0
      %p256 = por %p254, %p255
      %s258 = sadd.s32 %s257, 1
      %p261 = scmp.eq.s32.totalorder %s31, 1
      %p262 = scmp.ne.s32.totalorder %s257, %s259
      %p263 = scmp.eq.s32.totalorder %s31, 0
      %p264 = por %p262, %p263
      %p265 = scmp.ne.s32.totalorder %s257, %s259
      %p266 = scmp.eq.s32.totalorder %s36, 1
      %p267 = por %p265, %p266
      %p268 = scmp.ne.s32.totalorder %s259, %s260
      %p269 = scmp.eq.s32.totalorder %s36, 0
      %p270 = por %p268, %p269
      %p271 = scmp.ne.s32.totalorder %s259, %s260
      %p272 = scmp.eq.s32.totalorder %s37, 1
      %p273 = por %p271, %p272
      %p275 = scmp.ne.s32.totalorder %s260, %s274
      %p276 = scmp.eq.s32.totalorder %s37, 0
      %p277 = por %p275, %p276
      %s279 = sadd.s32 %s278, 1
      %p282 = scmp.eq.s32.totalorder %s31, 1
      %p283 = scmp.ne.s32.totalorder %s278, %s280
      %p284 = scmp.eq.s32.totalorder %s31, 0
      %p285 = por %p283, %p284
      %p286 = scmp.ne.s32.totalorder %s278, %s280
      %p287 = scmp.eq.s32.totalorder %s36, 1
      %p288 = por %p286, %p287
      %p289 = scmp.ne.s32.totalorder %s280, %s281
      %p290 = scmp.eq.s32.totalorder %s36, 0
      %p291 = por %p289, %p290
      %p292 = scmp.ne.s32.totalorder %s280, %s281
      %p293 = scmp.eq.s32.totalorder %s37, 1
      %p294 = por %p292, %p293
      %p296 = scmp.ne.s32.totalorder %s281, %s295
      %p297 = scmp.eq.s32.totalorder %s37, 0
      %p298 = por %p296, %p297
      %s300 = sadd.s32 %s299, 1
      %p303 = scmp.eq.s32.totalorder %s31, 1
      %p304 = scmp.ne.s32.totalorder %s299, %s301
      %p305 = scmp.eq.s32.totalorder %s31, 0
      %p306 = por %p304, %p305
      %p307 = scmp.ne.s32.totalorder %s299, %s301
      %p308 = scmp.eq.s32.totalorder %s36, 1
      %p309 = por %p307, %p308
      %p310 = scmp.ne.s32.totalorder %s301, %s302
      %p311 = scmp.eq.s32.totalorder %s36, 0
      %p312 = por %p310, %p311
      %p313 = scmp.ne.s32.totalorder %s301, %s302
      %p314 = scmp.eq.s32.totalorder %s37, 1
      %p315 = por %p313, %p314
      %p317 = scmp.ne.s32.totalorder %s302, %s316
      %p318 = scmp.eq.s32.totalorder %s37, 0
      %p319 = por %p317, %p318
      %s321 = sadd.s32 %s320, 1
      %p324 = scmp.eq.s32.totalorder %s31, 1
      %p325 = scmp.ne.s32.totalorder %s320, %s322
      %p326 = scmp.eq.s32.totalorder %s31, 0
      %p327 = por %p325, %p326
      %p328 = scmp.ne.s32.totalorder %s320, %s322
      %p329 = scmp.eq.s32.totalorder %s36, 1
      %p330 = por %p328, %p329
      %p331 = scmp.ne.s32.totalorder %s322, %s323
      %p332 = scmp.eq.s32.totalorder %s36, 0
      %p333 = por %p331, %p332
      %p334 = scmp.ne.s32.totalorder %s322, %s323
      %p335 = scmp.eq.s32.totalorder %s37, 1
      %p336 = por %p334, %p335
      %p338 = scmp.ne.s32.totalorder %s323, %s337
      %p339 = scmp.eq.s32.totalorder %s37, 0
      %p340 = por %p338, %p339
      %s342 = sadd.s32 %s341, 1
      %p345 = scmp.eq.s32.totalorder %s31, 1
      %p346 = scmp.ne.s32.totalorder %s341, %s343
      %p347 = scmp.eq.s32.totalorder %s31, 0
      %p348 = por %p346, %p347
      %p349 = scmp.ne.s32.totalorder %s341, %s343
      %p350 = scmp.eq.s32.totalorder %s36, 1
      %p351 = por %p349, %p350
      %p352 = scmp.ne.s32.totalorder %s343, %s344
      %p353 = scmp.eq.s32.totalorder %s36, 0
      %p354 = por %p352, %p353
      %p355 = scmp.ne.s32.totalorder %s343, %s344
      %p356 = scmp.eq.s32.totalorder %s37, 1
      %p357 = por %p355, %p356
      %p359 = scmp.ne.s32.totalorder %s344, %s358
      %p360 = scmp.eq.s32.totalorder %s37, 0
      %p361 = por %p359, %p360
      %s362 = ssub.s32 %s38, %s50
      %s363 = ssub.s32 %s39, %s46
      %s364 = sor.u32 %s362, %s363
      %p365 = scmp.eq.s32.totalorder %s364, 0
      %s367 = sadd.s32 %s366, 1
      %s368 = scalar_select %p365, %s366, %s367
      %p371 = pneg %p365
      %p372 = scmp.eq.s32.totalorder %s31, 1
      %p373 = por %p371, %p372
      %p374 = scmp.ne.s32.totalorder %s366, %s369
      %p375 = scmp.eq.s32.totalorder %s31, 0
      %p376 = por %p374, %p375
      %p377 = scmp.ne.s32.totalorder %s366, %s369
      %p378 = scmp.eq.s32.totalorder %s36, 1
      %p379 = por %p377, %p378
      %p380 = scmp.ne.s32.totalorder %s369, %s370
      %p381 = scmp.eq.s32.totalorder %s36, 0
      %p382 = por %p380, %p381
      %p383 = scmp.ne.s32.totalorder %s369, %s370
      %p384 = scmp.eq.s32.totalorder %s37, 1
      %p385 = por %p383, %p384
      %p387 = scmp.ne.s32.totalorder %s370, %s386
      %p388 = scmp.eq.s32.totalorder %s37, 0
      %p389 = por %p387, %p388
      %p390 = scmp.le.s32.totalorder 1, %s31
      %p391 = scmp.lt.s32.totalorder %s31, 3
      %p392 = pnand %p390, %p391
      %p393 = pneg %p392
      // Predicated region
      $region9: #{tpu_custom_call.1} parent=5 // pred_check
        _
      $region10: #{tpu_custom_call.1} parent=5 // pred_check_branch
        %395 = sbr.rel (%p392) target = $region12
      $region11: #{tpu_custom_call.1} parent=5 // pred_region
        %s396 = ssub.s32 %s31, 1
        // Predicated region
        $region13: #{tpu_custom_call.1} parent=11 // pred_check
          %p397 = pneg %p144
        $region14: #{tpu_custom_call.1} parent=11 // pred_check_branch
          %399 = sbr.rel (%p397) target = $region16
        $region15: #{tpu_custom_call.1} parent=11 // pred_region
          %s401 = ssub.s32 1024, 1024
          %402 = vsyncadd [#allocation6], %s401
          %s403 = sshll.u32 [#allocation7], 4
          %s404 = int_to_ptr.vmem [resolvable:$true] %s403
          %409 = dma.hbm_to_vmem [thread:$0]  %s3, 1024, %s404, [#allocation6], 64, 64, 4
        $region16: #{tpu_custom_call.1} parent=11 // pred_fallthru
          _
        // Predicated region
        $region17: #{tpu_custom_call.1} parent=11 // pred_check
          %p410 = pneg %p165
        $region18: #{tpu_custom_call.1} parent=11 // pred_check_branch
          %412 = sbr.rel (%p410) target = $region20
        $region19: #{tpu_custom_call.1} parent=11 // pred_region
          %s414 = ssub.s32 2048, 2048
          %415 = vsyncadd [#allocation9], %s414
          %s416 = sshll.u32 [#allocation8], 4
          %s417 = int_to_ptr.vmem [resolvable:$true] %s416
          %422 = dma.hbm_to_vmem [thread:$0]  %s4, 2048, %s417, [#allocation9], 128, 128, 8
        $region20: #{tpu_custom_call.1} parent=11 // pred_fallthru
          _
        // Predicated region
        $region21: #{tpu_custom_call.1} parent=11 // pred_check
          %p423 = pneg %p186
        $region22: #{tpu_custom_call.1} parent=11 // pred_check_branch
          %425 = sbr.rel (%p423) target = $region24
        $region23: #{tpu_custom_call.1} parent=11 // pred_region
          %s427 = ssub.s32 1024, 1024
          %428 = vsyncadd [#allocation9], %s427
          %s429 = sshll.u32 [#allocation10], 4
          %s430 = int_to_ptr.vmem [resolvable:$true] %s429
          %435 = dma.hbm_to_vmem [thread:$0]  %s5, 1024, %s430, [#allocation9], 64, 64, 4
        $region24: #{tpu_custom_call.1} parent=11 // pred_fallthru
          _
        // Predicated region
        $region25: #{tpu_custom_call.1} parent=11 // pred_check
          %p436 = pneg %p207
        $region26: #{tpu_custom_call.1} parent=11 // pred_check_branch
          %438 = sbr.rel (%p436) target = $region28
        $region27: #{tpu_custom_call.1} parent=11 // pred_region
          %s440 = ssub.s32 2048, 2048
          %441 = vsyncadd [#allocation12], %s440
          %s442 = sshll.u32 [#allocation11], 4
          %s443 = int_to_ptr.vmem [resolvable:$true] %s442
          %448 = dma.hbm_to_vmem [thread:$0]  %s6, 2048, %s443, [#allocation12], 128, 128, 8
        $region28: #{tpu_custom_call.1} parent=11 // pred_fallthru
          _
        // Predicated region
        $region29: #{tpu_custom_call.1} parent=11 // pred_check
          %p449 = pneg %p228
        $region30: #{tpu_custom_call.1} parent=11 // pred_check_branch
          %451 = sbr.rel (%p449) target = $region32
        $region31: #{tpu_custom_call.1} parent=11 // pred_region
          _
        $region32: #{tpu_custom_call.1} parent=11 // pred_fallthru
          _
        // Predicated region
        $region33: #{tpu_custom_call.1} parent=11 // pred_check
          %p452 = pneg %p249
        $region34: #{tpu_custom_call.1} parent=11 // pred_check_branch
          %454 = sbr.rel (%p452) target = $region36
        $region35: #{tpu_custom_call.1} parent=11 // pred_region
          %s456 = ssub.s32 2048, 2048
          %457 = vsyncadd [#allocation12], %s456
          %s458 = sshll.u32 [#allocation13], 4
          %s459 = int_to_ptr.vmem [resolvable:$true] %s458
          %464 = dma.hbm_to_vmem [thread:$0]  %s8, 2048, %s459, [#allocation12], 64, 64, 4
        $region36: #{tpu_custom_call.1} parent=11 // pred_fallthru
          _
        // Predicated region
        $region37: #{tpu_custom_call.1} parent=11 // pred_check
          %p465 = pneg %p270
        $region38: #{tpu_custom_call.1} parent=11 // pred_check_branch
          %467 = sbr.rel (%p465) target = $region40
        $region39: #{tpu_custom_call.1} parent=11 // pred_region
          _
        $region40: #{tpu_custom_call.1} parent=11 // pred_fallthru
          _
        // Predicated region
        $region41: #{tpu_custom_call.1} parent=11 // pred_check
          %p468 = pneg %p291
        $region42: #{tpu_custom_call.1} parent=11 // pred_check_branch
          %470 = sbr.rel (%p468) target = $region44
        $region43: #{tpu_custom_call.1} parent=11 // pred_region
          _
        $region44: #{tpu_custom_call.1} parent=11 // pred_fallthru
          _
        // Predicated region
        $region45: #{tpu_custom_call.1} parent=11 // pred_check
          %p471 = pneg %p312
        $region46: #{tpu_custom_call.1} parent=11 // pred_check_branch
          %473 = sbr.rel (%p471) target = $region48
        $region47: #{tpu_custom_call.1} parent=11 // pred_region
          _
        $region48: #{tpu_custom_call.1} parent=11 // pred_fallthru
          _
        // Predicated region
        $region49: #{tpu_custom_call.1} parent=11 // pred_check
          %p474 = pneg %p333
        $region50: #{tpu_custom_call.1} parent=11 // pred_check_branch
          %476 = sbr.rel (%p474) target = $region52
        $region51: #{tpu_custom_call.1} parent=11 // pred_region
          _
        $region52: #{tpu_custom_call.1} parent=11 // pred_fallthru
          _
        // Predicated region
        $region53: #{tpu_custom_call.1} parent=11 // pred_check
          %p477 = pneg %p354
        $region54: #{tpu_custom_call.1} parent=11 // pred_check_branch
          %479 = sbr.rel (%p477) target = $region56
        $region55: #{tpu_custom_call.1} parent=11 // pred_region
          _
        $region56: #{tpu_custom_call.1} parent=11 // pred_fallthru
          _
      $region12: #{tpu_custom_call.1} parent=5 // pred_fallthru
        _
      %p480 = scmp.lt.s32.totalorder %s31, 2
      // Predicated region
      $region57: #{tpu_custom_call.1} parent=5 // pred_check
        %p481 = pneg %p480
      $region58: #{tpu_custom_call.1} parent=5 // pred_check_branch
        %483 = sbr.rel (%p481) target = $region60
      $region59: #{tpu_custom_call.1} parent=5 // pred_region
        // Predicated region
        $region61: #{tpu_custom_call.1} parent=59 // pred_check
          %p484 = pneg %p65
        $region62: #{tpu_custom_call.1} parent=59 // pred_check_branch
          %486 = sbr.rel (%p484) target = $region64
        $region63: #{tpu_custom_call.1} parent=59 // pred_region
          %s487 = sand.u32 %s55, 1
          %s488 = scalar_lea.sflag [#allocation3], %s487
          %s489 = sand.u32 %s55, 1
          %s490 = smul.addr %s489, 8
          %s491 = scalar_lea.vmem [#allocation2], %s490
          %s493 = ssub.s32 128, 128
          %494 = vsyncadd %s488, %s493
          %s495 = sadd.s32 %s39, %s38
          %s496 = smul.addr %s495, 128
          %s497 = scalar_lea.hbm %s0, %s496
          %s499 = sshll.u32 %s491, 4
          %s500 = int_to_ptr.vmem [resolvable:$true] %s499
          %502 = dma.hbm_to_vmem [thread:$0]  %s497, 128, %s500, %s488
        $region64: #{tpu_custom_call.1} parent=59 // pred_fallthru
          _
        // Predicated region
        $region65: #{tpu_custom_call.1} parent=59 // pred_check
          %p503 = pneg %p91
        $region66: #{tpu_custom_call.1} parent=59 // pred_check_branch
          %505 = sbr.rel (%p503) target = $region68
        $region67: #{tpu_custom_call.1} parent=59 // pred_region
          %s506 = sand.u32 %s31, 1
          %s507 = scalar_lea.sflag [#allocation6], %s506
          %s508 = sand.u32 %s81, 1
          %s509 = smul.addr %s508, 8
          %s510 = scalar_lea.vmem [#allocation5], %s509
          %s512 = ssub.s32 128, 128
          %513 = vsyncadd %s507, %s512
          %s514 = smul.addr %s38, 128
          %s515 = scalar_lea.hbm %s1, %s514
          %s517 = sshll.u32 %s510, 4
          %s518 = int_to_ptr.vmem [resolvable:$true] %s517
          %520 = dma.hbm_to_vmem [thread:$0]  %s515, 128, %s518, %s507
        $region68: #{tpu_custom_call.1} parent=59 // pred_fallthru
          _
        // Predicated region
        $region69: #{tpu_custom_call.1} parent=59 // pred_check
          %p521 = pneg %p117
        $region70: #{tpu_custom_call.1} parent=59 // pred_check_branch
          %523 = sbr.rel (%p521) target = $region72
        $region71: #{tpu_custom_call.1} parent=59 // pred_region
          %p524 = scmp.lt.s32.totalorder %s38, 1
          %s525 = scalar_select %p524, %s38, 1
          %s526 = scalar_lea.vmem %s2, %s525
        $region72: #{tpu_custom_call.1} parent=59 // pred_fallthru
          _
      $region60: #{tpu_custom_call.1} parent=5 // pred_fallthru
        _
      %p527 = scmp.le.s32.totalorder 1, %s31
      %p528 = scmp.lt.s32.totalorder %s31, 3
      %p529 = pnand %p527, %p528
      %p530 = pneg %p529
      // Predicated region
      $region73: #{tpu_custom_call.1} parent=5 // pred_check
        _
      $region74: #{tpu_custom_call.1} parent=5 // pred_check_branch
        %532 = sbr.rel (%p529) target = $region76
      $region75: #{tpu_custom_call.1} parent=5 // pred_region
        %s533 = ssub.s32 %s31, 1
        %s534 = sand.u32 %s58, 1
        %s535 = scalar_lea.sflag [#allocation3], %s534
        %s536 = sand.u32 %s58, 1
        %s537 = smul.addr %s536, 8
        %s538 = scalar_lea.vmem [#allocation2], %s537
        // Predicated region
        $region77: #{tpu_custom_call.1} parent=75 // pred_check
          %p539 = pneg %p71
        $region78: #{tpu_custom_call.1} parent=75 // pred_check_branch
          %541 = sbr.rel (%p539) target = $region80
        $region79: #{tpu_custom_call.1} parent=75 // pred_region
          %542 = dma.done %s535, 128
        $region80: #{tpu_custom_call.1} parent=75 // pred_fallthru
          _
        %s543 = sand.u32 %s36, 1
        %s544 = scalar_lea.sflag [#allocation6], %s543
        %s545 = sand.u32 %s84, 1
        %s546 = smul.addr %s545, 8
        %s547 = scalar_lea.vmem [#allocation5], %s546
        // Predicated region
        $region81: #{tpu_custom_call.1} parent=75 // pred_check
          %p548 = pneg %p97
        $region82: #{tpu_custom_call.1} parent=75 // pred_check_branch
          %550 = sbr.rel (%p548) target = $region84
        $region83: #{tpu_custom_call.1} parent=75 // pred_region
          %551 = dma.done %s544, 128
        $region84: #{tpu_custom_call.1} parent=75 // pred_fallthru
          _
        // Predicated region
        $region85: #{tpu_custom_call.1} parent=75 // pred_check
          %p552 = pneg %p144
        $region86: #{tpu_custom_call.1} parent=75 // pred_check_branch
          %554 = sbr.rel (%p552) target = $region88
        $region87: #{tpu_custom_call.1} parent=75 // pred_region
          %555 = dma.done [#allocation6], 1024
        $region88: #{tpu_custom_call.1} parent=75 // pred_fallthru
          _
        // Predicated region
        $region89: #{tpu_custom_call.1} parent=75 // pred_check
          %p556 = pneg %p165
        $region90: #{tpu_custom_call.1} parent=75 // pred_check_branch
          %558 = sbr.rel (%p556) target = $region92
        $region91: #{tpu_custom_call.1} parent=75 // pred_region
          %559 = dma.done [#allocation9], 2048
        $region92: #{tpu_custom_call.1} parent=75 // pred_fallthru
          _
        // Predicated region
        $region93: #{tpu_custom_call.1} parent=75 // pred_check
          %p560 = pneg %p186
        $region94: #{tpu_custom_call.1} parent=75 // pred_check_branch
          %562 = sbr.rel (%p560) target = $region96
        $region95: #{tpu_custom_call.1} parent=75 // pred_region
          %563 = dma.done [#allocation9], 1024
        $region96: #{tpu_custom_call.1} parent=75 // pred_fallthru
          _
        // Predicated region
        $region97: #{tpu_custom_call.1} parent=75 // pred_check
          %p564 = pneg %p207
        $region98: #{tpu_custom_call.1} parent=75 // pred_check_branch
          %566 = sbr.rel (%p564) target = $region100
        $region99: #{tpu_custom_call.1} parent=75 // pred_region
          %567 = dma.done [#allocation12], 2048
        $region100: #{tpu_custom_call.1} parent=75 // pred_fallthru
          _
        // Predicated region
        $region101: #{tpu_custom_call.1} parent=75 // pred_check
          %p568 = pneg %p249
        $region102: #{tpu_custom_call.1} parent=75 // pred_check_branch
          %570 = sbr.rel (%p568) target = $region104
        $region103: #{tpu_custom_call.1} parent=75 // pred_region
          %571 = dma.done [#allocation12], 2048
        $region104: #{tpu_custom_call.1} parent=75 // pred_fallthru
          _
        %s572 = sand.u32 %s58, 1
        %s573 = scalar_lea.sflag [#allocation3], %s572
        %s574 = sand.u32 %s58, 1
        %s575 = smul.addr %s574, 8
        %s576 = scalar_lea.vmem [#allocation2], %s575
        %p577 = pneg %p71
        %p578 = pneg %p68
        %s579 = sand.u32 %s36, 1
        %s580 = scalar_lea.sflag [#allocation6], %s579
        %s581 = sand.u32 %s84, 1
        %s582 = smul.addr %s581, 8
        %s583 = scalar_lea.vmem [#allocation5], %s582
        %p584 = pneg %p97
        %p585 = pneg %p94
        %p586 = scmp.lt.s32.totalorder %s40, 1
        %s587 = scalar_select %p586, %s40, 1
        %s588 = scalar_lea.vmem %s2, %s587
        %p589 = pneg %p123
        %p590 = pneg %p120
        %p591 = pneg %p144
        %p592 = pneg %p141
        %p593 = pneg %p165
        %p594 = pneg %p162
        %p595 = pneg %p186
        %p596 = pneg %p183
        %p597 = pneg %p207
        %p598 = pneg %p204
        %p599 = pneg %p228
        %p600 = pneg %p225
        %p601 = pneg %p249
        %p602 = pneg %p246
        %p603 = pneg %p270
        %p604 = pneg %p267
        %p605 = pneg %p291
        %p606 = pneg %p288
        %p607 = pneg %p312
        %p608 = pneg %p309
        %p609 = pneg %p333
        %p610 = pneg %p330
        %p611 = pneg %p354
        %p612 = pneg %p351
        %p613 = pneg %p382
        %p614 = pneg %p379
        %s615 = sand.u32 %s369, 1
        %s616 = scalar_lea.sflag [#allocation4], %s615
        %s617 = sand.u32 %s369, 1
        %s618 = smul.addr %s617, 8
        %s619 = scalar_lea.vmem [#allocation14], %s618
        %p620 = scmp.lt.s32.totalorder %s40, 1
        %s621 = scalar_select %p620, %s40, 1
        %s622 = scalar_lea.vmem %s2, %s621
        %v624 = vld [vmem:[%s538] sm:$0xff]
        %v625 = vld [vmem:[%s547] sm:$0xff]
        %v626 = vld [vmem:[%s622] sm:$0x1]
        %v627 = vld [vmem:[#allocation7] sm:$0xf]
        %v628 = vld [vmem:[#allocation7 + $0x4] sm:$0xf]
        %v629 = vld [vmem:[#allocation7 + $0x8] sm:$0xf]
        %v630 = vld [vmem:[#allocation7 + $0xc] sm:$0xf]
        %v631 = vld [vmem:[#allocation7 + $0x10] sm:$0xf]
        %v632 = vld [vmem:[#allocation7 + $0x14] sm:$0xf]
        %v633 = vld [vmem:[#allocation7 + $0x18] sm:$0xf]
        %v634 = vld [vmem:[#allocation7 + $0x1c] sm:$0xf]
        %v635 = vld [vmem:[#allocation7 + $0x20] sm:$0xf]
        %v636 = vld [vmem:[#allocation7 + $0x24] sm:$0xf]
        %v637 = vld [vmem:[#allocation7 + $0x28] sm:$0xf]
        %v638 = vld [vmem:[#allocation7 + $0x2c] sm:$0xf]
        %v639 = vld [vmem:[#allocation7 + $0x30] sm:$0xf]
        %v640 = vld [vmem:[#allocation7 + $0x34] sm:$0xf]
        %v641 = vld [vmem:[#allocation7 + $0x38] sm:$0xf]
        %v642 = vld [vmem:[#allocation7 + $0x3c] sm:$0xf]
        %v643 = vpack.c.bf16 %v624, %v624
        %v660 = vunpack.c.l.b16 %v627
        %v661 = vunpack.c.l.b16 %v628
        %v662 = vunpack.c.l.b16 %v629
        %v663 = vunpack.c.l.b16 %v630
        %v664 = vunpack.c.l.b16 %v631
        %v665 = vunpack.c.l.b16 %v632
        %v666 = vunpack.c.l.b16 %v633
        %v667 = vunpack.c.l.b16 %v634
        %v668 = vunpack.c.l.b16 %v635
        %v669 = vunpack.c.l.b16 %v636
        %v670 = vunpack.c.l.b16 %v637
        %v671 = vunpack.c.l.b16 %v638
        %v672 = vunpack.c.l.b16 %v639
        %v673 = vunpack.c.l.b16 %v640
        %v674 = vunpack.c.l.b16 %v641
        %v675 = vunpack.c.l.b16 %v642
        %v676 = vpack.c.b16 %v661, %v660
        %v677 = vpack.c.b16 %v663, %v662
        %v678 = vpack.c.b16 %v665, %v664
        %v679 = vpack.c.b16 %v667, %v666
        %v680 = vpack.c.b16 %v669, %v668
        %v681 = vpack.c.b16 %v671, %v670
        %v682 = vpack.c.b16 %v673, %v672
        %v683 = vpack.c.b16 %v675, %v674
        %692 = vmatprep.subr.bf16.mxu0 0
        %693 = vmatpush1.bf16.msra.mxu0 %v676
        %694 = vmatprep.subr.bf16.mxu0 0
        %695 = vmatpush1.bf16.msra.mxu0 %v677
        %696 = vmatprep.subr.bf16.mxu0 0
        %697 = vmatpush1.bf16.msra.mxu0 %v678
        %698 = vmatprep.subr.bf16.mxu0 0
        %699 = vmatpush1.bf16.msra.mxu0 %v679
        %700 = vmatprep.subr.bf16.mxu0 0
        %701 = vmatpush1.bf16.msra.mxu0 %v680
        %702 = vmatprep.subr.bf16.mxu0 0
        %703 = vmatpush1.bf16.msra.mxu0 %v681
        %704 = vmatprep.subr.bf16.mxu0 0
        %705 = vmatpush1.bf16.msra.mxu0 %v682
        %706 = vmatprep.subr.bf16.mxu0 0
        %707 = vmatpush1.bf16.msra.mxu0 %v683
        %708 = vmatprep.subr.bf16.mxu0 0
        %709 = vmatpush1.bf16.msra.mxu0 0
        %710 = vmatprep.subr.bf16.mxu0 0
        %711 = vmatpush1.bf16.msra.mxu0 0
        %712 = vmatprep.subr.bf16.mxu0 0
        %713 = vmatpush1.bf16.msra.mxu0 0
        %714 = vmatprep.subr.bf16.mxu0 0
        %715 = vmatpush1.bf16.msra.mxu0 0
        %716 = vmatprep.subr.bf16.mxu0 0
        %717 = vmatpush1.bf16.msra.mxu0 0
        %718 = vmatprep.subr.bf16.mxu0 0
        %719 = vmatpush1.bf16.msra.mxu0 0
        %720 = vmatprep.subr.bf16.mxu0 0
        %721 = vmatpush1.bf16.msra.mxu0 0
        %722 = vmatprep.subr.bf16.mxu0 0
        %723 = vmatpush1.bf16.msra.mxu0 0
        %724 = vmatprep.mubr.bf16.mxu0 0
        %725 = vmatmul.mubr.bf16.gmra.mrb[0].mxu0 %v643
        %v726 = vpop.f32.mrb[0].mxu0
        %v727 = vadd.f32 0.0, %v726
        %v728 = vpop.f32.mrb[0].mxu0
        %v729 = vpop.f32.mrb[0].mxu0
        %v730 = vpop.f32.mrb[0].mxu0
        %731 = vdwg.mxu0
        %v732 = vmul.f32 %v727, 0.17677669
        %v733 = vld [vmem:[#allocation8] sm:$0xff]
        %v734 = vld [vmem:[#allocation8 + $0x8] sm:$0xff]
        %v735 = vld [vmem:[#allocation8 + $0x10] sm:$0xff]
        %v736 = vld [vmem:[#allocation8 + $0x18] sm:$0xff]
        %v737 = vld [vmem:[#allocation8 + $0x20] sm:$0xff]
        %v738 = vld [vmem:[#allocation8 + $0x28] sm:$0xff]
        %v739 = vld [vmem:[#allocation8 + $0x30] sm:$0xff]
        %v740 = vld [vmem:[#allocation8 + $0x38] sm:$0xff]
        %v741 = vld [vmem:[#allocation8 + $0x40] sm:$0xff]
        %v742 = vld [vmem:[#allocation8 + $0x48] sm:$0xff]
        %v743 = vld [vmem:[#allocation8 + $0x50] sm:$0xff]
        %v744 = vld [vmem:[#allocation8 + $0x58] sm:$0xff]
        %v745 = vld [vmem:[#allocation8 + $0x60] sm:$0xff]
        %v746 = vld [vmem:[#allocation8 + $0x68] sm:$0xff]
        %v747 = vld [vmem:[#allocation8 + $0x70] sm:$0xff]
        %v748 = vld [vmem:[#allocation8 + $0x78] sm:$0xff]
        %v749 = vpack.c.bf16 %v625, %v625
        %v766 = vunpack.c.l.b16 %v733
        %v767 = vunpack.c.h.b16 %v733
        %v768 = vunpack.c.l.b16 %v734
        %v769 = vunpack.c.h.b16 %v734
        %v770 = vunpack.c.l.b16 %v735
        %v771 = vunpack.c.h.b16 %v735
        %v772 = vunpack.c.l.b16 %v736
        %v773 = vunpack.c.h.b16 %v736
        %v774 = vunpack.c.l.b16 %v737
        %v775 = vunpack.c.h.b16 %v737
        %v776 = vunpack.c.l.b16 %v738
        %v777 = vunpack.c.h.b16 %v738
        %v778 = vunpack.c.l.b16 %v739
        %v779 = vunpack.c.h.b16 %v739
        %v780 = vunpack.c.l.b16 %v740
        %v781 = vunpack.c.h.b16 %v740
        %v782 = vunpack.c.l.b16 %v741
        %v783 = vunpack.c.h.b16 %v741
        %v784 = vunpack.c.l.b16 %v742
        %v785 = vunpack.c.h.b16 %v742
        %v786 = vunpack.c.l.b16 %v743
        %v787 = vunpack.c.h.b16 %v743
        %v788 = vunpack.c.l.b16 %v744
        %v789 = vunpack.c.h.b16 %v744
        %v790 = vunpack.c.l.b16 %v745
        %v791 = vunpack.c.h.b16 %v745
        %v792 = vunpack.c.l.b16 %v746
        %v793 = vunpack.c.h.b16 %v746
        %v794 = vunpack.c.l.b16 %v747
        %v795 = vunpack.c.h.b16 %v747
        %v796 = vunpack.c.l.b16 %v748
        %v797 = vunpack.c.h.b16 %v748
        %v798 = vpack.c.b16 %v768, %v766
        %v799 = vpack.c.b16 %v769, %v767
        %v800 = vpack.c.b16 %v772, %v770
        %v801 = vpack.c.b16 %v773, %v771
        %v802 = vpack.c.b16 %v776, %v774
        %v803 = vpack.c.b16 %v777, %v775
        %v804 = vpack.c.b16 %v780, %v778
        %v805 = vpack.c.b16 %v781, %v779
        %v806 = vpack.c.b16 %v784, %v782
        %v807 = vpack.c.b16 %v785, %v783
        %v808 = vpack.c.b16 %v788, %v786
        %v809 = vpack.c.b16 %v789, %v787
        %v810 = vpack.c.b16 %v792, %v790
        %v811 = vpack.c.b16 %v793, %v791
        %v812 = vpack.c.b16 %v796, %v794
        %v813 = vpack.c.b16 %v797, %v795
        %830 = vmatprep.subr.bf16.mxu0 %v799
        %831 = vmatpush1.bf16.msra.mxu0 %v798
        %832 = vmatprep.subr.bf16.mxu0 %v801
        %833 = vmatpush1.bf16.msra.mxu0 %v800
        %834 = vmatprep.subr.bf16.mxu0 %v803
        %835 = vmatpush1.bf16.msra.mxu0 %v802
        %836 = vmatprep.subr.bf16.mxu0 %v805
        %837 = vmatpush1.bf16.msra.mxu0 %v804
        %838 = vmatprep.subr.bf16.mxu0 %v807
        %839 = vmatpush1.bf16.msra.mxu0 %v806
        %840 = vmatprep.subr.bf16.mxu0 %v809
        %841 = vmatpush1.bf16.msra.mxu0 %v808
        %842 = vmatprep.subr.bf16.mxu0 %v811
        %843 = vmatpush1.bf16.msra.mxu0 %v810
        %844 = vmatprep.subr.bf16.mxu0 %v813
        %845 = vmatpush1.bf16.msra.mxu0 %v812
        %846 = vmatprep.subr.bf16.mxu0 0
        %847 = vmatpush1.bf16.msra.mxu0 0
        %848 = vmatprep.subr.bf16.mxu0 0
        %849 = vmatpush1.bf16.msra.mxu0 0
        %850 = vmatprep.subr.bf16.mxu0 0
        %851 = vmatpush1.bf16.msra.mxu0 0
        %852 = vmatprep.subr.bf16.mxu0 0
        %853 = vmatpush1.bf16.msra.mxu0 0
        %854 = vmatprep.subr.bf16.mxu0 0
        %855 = vmatpush1.bf16.msra.mxu0 0
        %856 = vmatprep.subr.bf16.mxu0 0
        %857 = vmatpush1.bf16.msra.mxu0 0
        %858 = vmatprep.subr.bf16.mxu0 0
        %859 = vmatpush1.bf16.msra.mxu0 0
        %860 = vmatprep.subr.bf16.mxu0 0
        %861 = vmatpush1.bf16.msra.mxu0 0
        %862 = vmatprep.mubr.bf16.mxu0 0
        %863 = vmatmul.mubr.bf16.gmra.mrb[0].mxu0 %v749
        %v864 = vpop.f32.mrb[0].mxu0
        %v865 = vadd.f32 0.0, %v864
        %v866 = vpop.f32.mrb[0].mxu0
        %v867 = vadd.f32 0.0, %v866
        %v868 = vpop.f32.mrb[0].mxu0
        %v869 = vpop.f32.mrb[0].mxu0
        %870 = vdwg.mxu0
        %872 = vrot.lane.b32.xlu0 %v732, 96
        %v873 = vpop.permute.xlu0 %872
        %875 = vrot.lane.b32.xlu0 %v732, 64
        %v876 = vpop.permute.xlu0 %875
        %878 = vrot.lane.b32.xlu0 %v732, 32
        %v879 = vpop.permute.xlu0 %878
        %v881 = vcombine.low %v732, %v876
        %v882 = vcombine.high %v732, %v876
        %v884 = vunpack.c.l.s4 1983009808
        %v885 = vunpack.c.0.s8 %v884
        %v886 = vlaneseq
        %v887 = vshrl.u32 %v886, 7
        %v888 = vsub.s32 %v885, %v887
        %v889 = vrot.slane %v881, %v888
        %v891 = vunpack.c.l.s4 1983009808
        %v892 = vunpack.c.0.s8 %v891
        %v893 = vlaneseq
        %v894 = vshrl.u32 %v893, 7
        %v895 = vsub.s32 %v892, %v894
        %v896 = vrot.slane %v882, %v895
        %v897 = vcombine.low %v873, %v879
        %v898 = vcombine.high %v873, %v879
        %v900 = vunpack.c.l.s4 1983009808
        %v901 = vunpack.c.0.s8 %v900
        %v902 = vlaneseq
        %v903 = vshrl.u32 %v902, 7
        %v904 = vsub.s32 %v901, %v903
        %v905 = vrot.slane %v897, %v904
        %v907 = vunpack.c.l.s4 1983009808
        %v908 = vunpack.c.0.s8 %v907
        %v909 = vlaneseq
        %v910 = vshrl.u32 %v909, 7
        %v911 = vsub.s32 %v908, %v910
        %v912 = vrot.slane %v898, %v911
        %v913 = vcombine.low %v889, %v905
        %v914 = vcombine.high %v889, %v905
        %v916 = vunpack.c.l.s4 1934713408
        %v917 = vunpack.c.0.s8 %v916
        %v918 = vlaneseq
        %v919 = vshrl.u32 %v918, 7
        %v920 = vsub.s32 %v917, %v919
        %v921 = vrot.slane %v913, %v920
        %v923 = vunpack.c.l.s4 1934713408
        %v924 = vunpack.c.0.s8 %v923
        %v925 = vlaneseq
        %v926 = vshrl.u32 %v925, 7
        %v927 = vsub.s32 %v924, %v926
        %v928 = vrot.slane %v914, %v927
        %v929 = vcombine.low %v896, %v912
        %v930 = vcombine.high %v896, %v912
        %v932 = vunpack.c.l.s4 1934713408
        %v933 = vunpack.c.0.s8 %v932
        %v934 = vlaneseq
        %v935 = vshrl.u32 %v934, 7
        %v936 = vsub.s32 %v933, %v935
        %v937 = vrot.slane %v929, %v936
        %v939 = vunpack.c.l.s4 1934713408
        %v940 = vunpack.c.0.s8 %v939
        %v941 = vlaneseq
        %v942 = vshrl.u32 %v941, 7
        %v943 = vsub.s32 %v940, %v942
        %v944 = vrot.slane %v930, %v943
        %v945 = vcombine.high %v921, 0.0
        %v946 = vcombine.high %v928, 0.0
        %v947 = vcombine.high %v937, 0.0
        %v948 = vcombine.high %v944, 0.0
        %950 = vrot.lane.b32.xlu0 %v865, 96
        %v951 = vpop.permute.xlu0 %950
        %953 = vrot.lane.b32.xlu0 %v865, 64
        %v954 = vpop.permute.xlu0 %953
        %956 = vrot.lane.b32.xlu0 %v865, 32
        %v957 = vpop.permute.xlu0 %956
        %v959 = vcombine.low %v865, %v954
        %v960 = vcombine.high %v865, %v954
        %v962 = vunpack.c.l.s4 1983009808
        %v963 = vunpack.c.0.s8 %v962
        %v964 = vlaneseq
        %v965 = vshrl.u32 %v964, 7
        %v966 = vsub.s32 %v963, %v965
        %v967 = vrot.slane %v959, %v966
        %v969 = vunpack.c.l.s4 1983009808
        %v970 = vunpack.c.0.s8 %v969
        %v971 = vlaneseq
        %v972 = vshrl.u32 %v971, 7
        %v973 = vsub.s32 %v970, %v972
        %v974 = vrot.slane %v960, %v973
        %v975 = vcombine.low %v951, %v957
        %v976 = vcombine.high %v951, %v957
        %v978 = vunpack.c.l.s4 1983009808
        %v979 = vunpack.c.0.s8 %v978
        %v980 = vlaneseq
        %v981 = vshrl.u32 %v980, 7
        %v982 = vsub.s32 %v979, %v981
        %v983 = vrot.slane %v975, %v982
        %v985 = vunpack.c.l.s4 1983009808
        %v986 = vunpack.c.0.s8 %v985
        %v987 = vlaneseq
        %v988 = vshrl.u32 %v987, 7
        %v989 = vsub.s32 %v986, %v988
        %v990 = vrot.slane %v976, %v989
        %v991 = vcombine.low %v967, %v983
        %v992 = vcombine.high %v967, %v983
        %v994 = vunpack.c.l.s4 1934713408
        %v995 = vunpack.c.0.s8 %v994
        %v996 = vlaneseq
        %v997 = vshrl.u32 %v996, 7
        %v998 = vsub.s32 %v995, %v997
        %v999 = vrot.slane %v991, %v998
        %v1001 = vunpack.c.l.s4 1934713408
        %v1002 = vunpack.c.0.s8 %v1001
        %v1003 = vlaneseq
        %v1004 = vshrl.u32 %v1003, 7
        %v1005 = vsub.s32 %v1002, %v1004
        %v1006 = vrot.slane %v992, %v1005
        %v1007 = vcombine.low %v974, %v990
        %v1008 = vcombine.high %v974, %v990
        %v1010 = vunpack.c.l.s4 1934713408
        %v1011 = vunpack.c.0.s8 %v1010
        %v1012 = vlaneseq
        %v1013 = vshrl.u32 %v1012, 7
        %v1014 = vsub.s32 %v1011, %v1013
        %v1015 = vrot.slane %v1007, %v1014
        %v1017 = vunpack.c.l.s4 1934713408
        %v1018 = vunpack.c.0.s8 %v1017
        %v1019 = vlaneseq
        %v1020 = vshrl.u32 %v1019, 7
        %v1021 = vsub.s32 %v1018, %v1020
        %v1022 = vrot.slane %v1008, %v1021
        %v1023 = vcombine.high %v999, 0.0
        %v1024 = vcombine.high %v1006, 0.0
        %v1025 = vcombine.high %v1015, 0.0
        %v1026 = vcombine.high %v1022, 0.0
        %1028 = vrot.lane.b32.xlu0 %v867, 96
        %v1029 = vpop.permute.xlu0 %1028
        %1031 = vrot.lane.b32.xlu0 %v867, 64
        %v1032 = vpop.permute.xlu0 %1031
        %1034 = vrot.lane.b32.xlu0 %v867, 32
        %v1035 = vpop.permute.xlu0 %1034
        %v1037 = vcombine.low %v867, %v1032
        %v1038 = vcombine.high %v867, %v1032
        %v1040 = vunpack.c.l.s4 1983009808
        %v1041 = vunpack.c.0.s8 %v1040
        %v1042 = vlaneseq
        %v1043 = vshrl.u32 %v1042, 7
        %v1044 = vsub.s32 %v1041, %v1043
        %v1045 = vrot.slane %v1037, %v1044
        %v1047 = vunpack.c.l.s4 1983009808
        %v1048 = vunpack.c.0.s8 %v1047
        %v1049 = vlaneseq
        %v1050 = vshrl.u32 %v1049, 7
        %v1051 = vsub.s32 %v1048, %v1050
        %v1052 = vrot.slane %v1038, %v1051
        %v1053 = vcombine.low %v1029, %v1035
        %v1054 = vcombine.high %v1029, %v1035
        %v1056 = vunpack.c.l.s4 1983009808
        %v1057 = vunpack.c.0.s8 %v1056
        %v1058 = vlaneseq
        %v1059 = vshrl.u32 %v1058, 7
        %v1060 = vsub.s32 %v1057, %v1059
        %v1061 = vrot.slane %v1053, %v1060
        %v1063 = vunpack.c.l.s4 1983009808
        %v1064 = vunpack.c.0.s8 %v1063
        %v1065 = vlaneseq
        %v1066 = vshrl.u32 %v1065, 7
        %v1067 = vsub.s32 %v1064, %v1066
        %v1068 = vrot.slane %v1054, %v1067
        %v1069 = vcombine.low %v1045, %v1061
        %v1070 = vcombine.high %v1045, %v1061
        %v1072 = vunpack.c.l.s4 1934713408
        %v1073 = vunpack.c.0.s8 %v1072
        %v1074 = vlaneseq
        %v1075 = vshrl.u32 %v1074, 7
        %v1076 = vsub.s32 %v1073, %v1075
        %v1077 = vrot.slane %v1069, %v1076
        %v1079 = vunpack.c.l.s4 1934713408
        %v1080 = vunpack.c.0.s8 %v1079
        %v1081 = vlaneseq
        %v1082 = vshrl.u32 %v1081, 7
        %v1083 = vsub.s32 %v1080, %v1082
        %v1084 = vrot.slane %v1070, %v1083
        %v1085 = vcombine.low %v1052, %v1068
        %v1086 = vcombine.high %v1052, %v1068
        %v1088 = vunpack.c.l.s4 1934713408
        %v1089 = vunpack.c.0.s8 %v1088
        %v1090 = vlaneseq
        %v1091 = vshrl.u32 %v1090, 7
        %v1092 = vsub.s32 %v1089, %v1091
        %v1093 = vrot.slane %v1085, %v1092
        %v1095 = vunpack.c.l.s4 1934713408
        %v1096 = vunpack.c.0.s8 %v1095
        %v1097 = vlaneseq
        %v1098 = vshrl.u32 %v1097, 7
        %v1099 = vsub.s32 %v1096, %v1098
        %v1100 = vrot.slane %v1086, %v1099
        %v1101 = vcombine.high %v1077, 0.0
        %v1102 = vcombine.high %v1084, 0.0
        %v1103 = vcombine.high %v1093, 0.0
        %v1104 = vcombine.high %v1100, 0.0
        %vm1105 = vcmp.eq.f32.partialorder %v626, 0.0
        %v1106 = vsel %vm1105, -1e+09, 0.0
        %v1107 = vpack.c.bf16 %v921, %v921
        %v1108 = vpack.c.bf16 %v945, %v945
        %v1109 = vpack.c.bf16 %v928, %v928
        %v1110 = vpack.c.bf16 %v946, %v946
        %v1111 = vpack.c.bf16 %v937, %v937
        %v1112 = vpack.c.bf16 %v947, %v947
        %v1113 = vpack.c.bf16 %v944, %v944
        %v1114 = vpack.c.bf16 %v948, %v948
        %v1115 = vpack.c.bf16 %v999, %v999
        %v1116 = vpack.c.bf16 %v1023, %v1023
        %v1117 = vpack.c.bf16 %v1006, %v1006
        %v1118 = vpack.c.bf16 %v1024, %v1024
        %v1119 = vpack.c.bf16 %v1015, %v1015
        %v1120 = vpack.c.bf16 %v1025, %v1025
        %v1121 = vpack.c.bf16 %v1022, %v1022
        %v1122 = vpack.c.bf16 %v1026, %v1026
        %v1124 = vlaneseq
        %v1125 = vshrl.u32 %v1124, 7
        %v1126 = vsub.s32 0, %v1125
        %v1127 = vrot.slane %v1106, %v1126
        %v1129 = vcombine.low %v1107, %v1111
        %v1131 = vunpack.c.l.s4 1983009808
        %v1132 = vunpack.c.0.s8 %v1131
        %v1133 = vlaneseq
        %v1134 = vshrl.u32 %v1133, 7
        %v1135 = vsub.s32 %v1132, %v1134
        %v1136 = vrot.slane %v1129, %v1135
        %v1137 = vcombine.low %v1109, %v1113
        %v1139 = vunpack.c.l.s4 1983009808
        %v1140 = vunpack.c.0.s8 %v1139
        %v1141 = vlaneseq
        %v1142 = vshrl.u32 %v1141, 7
        %v1143 = vsub.s32 %v1140, %v1142
        %v1144 = vrot.slane %v1137, %v1143
        %v1145 = vcombine.low %v1136, %v1144
        %v1147 = vunpack.c.l.s4 1934713408
        %v1148 = vunpack.c.0.s8 %v1147
        %v1149 = vlaneseq
        %v1150 = vshrl.u32 %v1149, 7
        %v1151 = vsub.s32 %v1148, %v1150
        %v1152 = vrot.slane %v1145, %v1151
        %v1153 = vcombine.high %v1152, 0
        %v1154 = vcombine.low %v1108, %v1112
        %v1156 = vunpack.c.l.s4 1983009808
        %v1157 = vunpack.c.0.s8 %v1156
        %v1158 = vlaneseq
        %v1159 = vshrl.u32 %v1158, 7
        %v1160 = vsub.s32 %v1157, %v1159
        %v1161 = vrot.slane %v1154, %v1160
        %v1162 = vcombine.low %v1110, %v1114
        %v1164 = vunpack.c.l.s4 1983009808
        %v1165 = vunpack.c.0.s8 %v1164
        %v1166 = vlaneseq
        %v1167 = vshrl.u32 %v1166, 7
        %v1168 = vsub.s32 %v1165, %v1167
        %v1169 = vrot.slane %v1162, %v1168
        %v1170 = vcombine.low %v1161, %v1169
        %v1172 = vunpack.c.l.s4 1934713408
        %v1173 = vunpack.c.0.s8 %v1172
        %v1174 = vlaneseq
        %v1175 = vshrl.u32 %v1174, 7
        %v1176 = vsub.s32 %v1173, %v1175
        %v1177 = vrot.slane %v1170, %v1176
        %v1178 = vcombine.high %v1177, 0
        %v1181 = vpack.i.b16 %v1177, %v1152
        %v1182 = vshrl.u32 %v1152, 16
        %v1183 = vshrl.u32 %v1177, 16
        %v1184 = vpack.i.b16 %v1183, %v1182
        %v1187 = vpack.i.b16 %v1178, %v1153
        %v1188 = vshrl.u32 %v1153, 16
        %v1189 = vshrl.u32 %v1178, 16
        %v1190 = vpack.i.b16 %v1189, %v1188
        %1191 = vxpose.xlu0.c.b16.start [1/8] %v1115, 128
        %1192 = vxpose.xlu0.c.b16.cont [2/8] 0, 128
        %1193 = vxpose.xlu0.c.b16.cont [3/8] 0, 128
        %1194 = vxpose.xlu0.c.b16.cont [4/8] 0, 128
        %1195 = vxpose.xlu0.c.b16.cont [5/8] 0, 128
        %1196 = vxpose.xlu0.c.b16.cont [6/8] 0, 128
        %1197 = vxpose.xlu0.c.b16.cont [7/8] 0, 128
        %1198 = vxpose.xlu0.c.b16.end [8/8] 0, 128
        %v1199 = vpop.trf.xlu0
        %v1200 = vpop.trf.xlu0
        %v1201 = vpop.trf.xlu0
        %v1202 = vpop.trf.xlu0
        %v1203 = vpop.trf.xlu0
        %v1204 = vpop.trf.xlu0
        %v1205 = vpop.trf.xlu0
        %v1206 = vpop.trf.xlu0
        %1207 = vxpose.xlu0.c.b16.start [1/8] %v1116, 128
        %1208 = vxpose.xlu0.c.b16.cont [2/8] 0, 128
        %1209 = vxpose.xlu0.c.b16.cont [3/8] 0, 128
        %1210 = vxpose.xlu0.c.b16.cont [4/8] 0, 128
        %1211 = vxpose.xlu0.c.b16.cont [5/8] 0, 128
        %1212 = vxpose.xlu0.c.b16.cont [6/8] 0, 128
        %1213 = vxpose.xlu0.c.b16.cont [7/8] 0, 128
        %1214 = vxpose.xlu0.c.b16.end [8/8] 0, 128
        %v1215 = vpop.trf.xlu0
        %v1216 = vpop.trf.xlu0
        %v1217 = vpop.trf.xlu0
        %v1218 = vpop.trf.xlu0
        %v1219 = vpop.trf.xlu0
        %v1220 = vpop.trf.xlu0
        %v1221 = vpop.trf.xlu0
        %v1222 = vpop.trf.xlu0
        %1223 = vxpose.xlu0.c.b16.start [1/8] %v1117, 128
        %1224 = vxpose.xlu0.c.b16.cont [2/8] 0, 128
        %1225 = vxpose.xlu0.c.b16.cont [3/8] 0, 128
        %1226 = vxpose.xlu0.c.b16.cont [4/8] 0, 128
        %1227 = vxpose.xlu0.c.b16.cont [5/8] 0, 128
        %1228 = vxpose.xlu0.c.b16.cont [6/8] 0, 128
        %1229 = vxpose.xlu0.c.b16.cont [7/8] 0, 128
        %1230 = vxpose.xlu0.c.b16.end [8/8] 0, 128
        %v1231 = vpop.trf.xlu0
        %v1232 = vpop.trf.xlu0
        %v1233 = vpop.trf.xlu0
        %v1234 = vpop.trf.xlu0
        %v1235 = vpop.trf.xlu0
        %v1236 = vpop.trf.xlu0
        %v1237 = vpop.trf.xlu0
        %v1238 = vpop.trf.xlu0
        %1239 = vxpose.xlu0.c.b16.start [1/8] %v1118, 128
        %1240 = vxpose.xlu0.c.b16.cont [2/8] 0, 128
        %1241 = vxpose.xlu0.c.b16.cont [3/8] 0, 128
        %1242 = vxpose.xlu0.c.b16.cont [4/8] 0, 128
        %1243 = vxpose.xlu0.c.b16.cont [5/8] 0, 128
        %1244 = vxpose.xlu0.c.b16.cont [6/8] 0, 128
        %1245 = vxpose.xlu0.c.b16.cont [7/8] 0, 128
        %1246 = vxpose.xlu0.c.b16.end [8/8] 0, 128
        %v1247 = vpop.trf.xlu0
        %v1248 = vpop.trf.xlu0
        %v1249 = vpop.trf.xlu0
        %v1250 = vpop.trf.xlu0
        %v1251 = vpop.trf.xlu0
        %v1252 = vpop.trf.xlu0
        %v1253 = vpop.trf.xlu0
        %v1254 = vpop.trf.xlu0
        %1255 = vxpose.xlu0.c.b16.start [1/8] %v1119, 128
        %1256 = vxpose.xlu0.c.b16.cont [2/8] 0, 128
        %1257 = vxpose.xlu0.c.b16.cont [3/8] 0, 128
        %1258 = vxpose.xlu0.c.b16.cont [4/8] 0, 128
        %1259 = vxpose.xlu0.c.b16.cont [5/8] 0, 128
        %1260 = vxpose.xlu0.c.b16.cont [6/8] 0, 128
        %1261 = vxpose.xlu0.c.b16.cont [7/8] 0, 128
        %1262 = vxpose.xlu0.c.b16.end [8/8] 0, 128
        %v1263 = vpop.trf.xlu0
        %v1264 = vpop.trf.xlu0
        %v1265 = vpop.trf.xlu0
        %v1266 = vpop.trf.xlu0
        %v1267 = vpop.trf.xlu0
        %v1268 = vpop.trf.xlu0
        %v1269 = vpop.trf.xlu0
        %v1270 = vpop.trf.xlu0
        %1271 = vxpose.xlu0.c.b16.start [1/8] %v1120, 128
        %1272 = vxpose.xlu0.c.b16.cont [2/8] 0, 128
        %1273 = vxpose.xlu0.c.b16.cont [3/8] 0, 128
        %1274 = vxpose.xlu0.c.b16.cont [4/8] 0, 128
        %1275 = vxpose.xlu0.c.b16.cont [5/8] 0, 128
        %1276 = vxpose.xlu0.c.b16.cont [6/8] 0, 128
        %1277 = vxpose.xlu0.c.b16.cont [7/8] 0, 128
        %1278 = vxpose.xlu0.c.b16.end [8/8] 0, 128
        %v1279 = vpop.trf.xlu0
        %v1280 = vpop.trf.xlu0
        %v1281 = vpop.trf.xlu0
        %v1282 = vpop.trf.xlu0
        %v1283 = vpop.trf.xlu0
        %v1284 = vpop.trf.xlu0
        %v1285 = vpop.trf.xlu0
        %v1286 = vpop.trf.xlu0
        %1287 = vxpose.xlu0.c.b16.start [1/8] %v1121, 128
        %1288 = vxpose.xlu0.c.b16.cont [2/8] 0, 128
        %1289 = vxpose.xlu0.c.b16.cont [3/8] 0, 128
        %1290 = vxpose.xlu0.c.b16.cont [4/8] 0, 128
        %1291 = vxpose.xlu0.c.b16.cont [5/8] 0, 128
        %1292 = vxpose.xlu0.c.b16.cont [6/8] 0, 128
        %1293 = vxpose.xlu0.c.b16.cont [7/8] 0, 128
        %1294 = vxpose.xlu0.c.b16.end [8/8] 0, 128
        %v1295 = vpop.trf.xlu0
        %v1296 = vpop.trf.xlu0
        %v1297 = vpop.trf.xlu0
        %v1298 = vpop.trf.xlu0
        %v1299 = vpop.trf.xlu0
        %v1300 = vpop.trf.xlu0
        %v1301 = vpop.trf.xlu0
        %v1302 = vpop.trf.xlu0
        %1303 = vxpose.xlu0.c.b16.start [1/8] %v1122, 128
        %1304 = vxpose.xlu0.c.b16.cont [2/8] 0, 128
        %1305 = vxpose.xlu0.c.b16.cont [3/8] 0, 128
        %1306 = vxpose.xlu0.c.b16.cont [4/8] 0, 128
        %1307 = vxpose.xlu0.c.b16.cont [5/8] 0, 128
        %1308 = vxpose.xlu0.c.b16.cont [6/8] 0, 128
        %1309 = vxpose.xlu0.c.b16.cont [7/8] 0, 128
        %1310 = vxpose.xlu0.c.b16.end [8/8] 0, 128
        %v1311 = vpop.trf.xlu0
        %v1312 = vpop.trf.xlu0
        %v1313 = vpop.trf.xlu0
        %v1314 = vpop.trf.xlu0
        %v1315 = vpop.trf.xlu0
        %v1316 = vpop.trf.xlu0
        %v1317 = vpop.trf.xlu0
        %v1318 = vpop.trf.xlu0
        %v1321 = vpack.i.b16 %v1215, %v1199
        %v1323 = vshrl.u32 %v1199, 16
        %v1324 = vshrl.u32 %v1215, 16
        %v1325 = vpack.i.b16 %v1324, %v1323
        %v1329 = vpack.i.b16 %v1247, %v1231
        %v1331 = vshrl.u32 %v1231, 16
        %v1332 = vshrl.u32 %v1247, 16
        %v1333 = vpack.i.b16 %v1332, %v1331
        %v1337 = vpack.i.b16 %v1279, %v1263
        %v1339 = vshrl.u32 %v1263, 16
        %v1340 = vshrl.u32 %v1279, 16
        %v1341 = vpack.i.b16 %v1340, %v1339
        %v1345 = vpack.i.b16 %v1311, %v1295
        %v1347 = vshrl.u32 %v1295, 16
        %v1348 = vshrl.u32 %v1311, 16
        %v1349 = vpack.i.b16 %v1348, %v1347
        %v1353 = vpack.i.b16 %v1216, %v1200
        %v1355 = vshrl.u32 %v1200, 16
        %v1356 = vshrl.u32 %v1216, 16
        %v1357 = vpack.i.b16 %v1356, %v1355
        %v1361 = vpack.i.b16 %v1248, %v1232
        %v1363 = vshrl.u32 %v1232, 16
        %v1364 = vshrl.u32 %v1248, 16
        %v1365 = vpack.i.b16 %v1364, %v1363
        %v1369 = vpack.i.b16 %v1280, %v1264
        %v1371 = vshrl.u32 %v1264, 16
        %v1372 = vshrl.u32 %v1280, 16
        %v1373 = vpack.i.b16 %v1372, %v1371
        %v1377 = vpack.i.b16 %v1312, %v1296
        %v1379 = vshrl.u32 %v1296, 16
        %v1380 = vshrl.u32 %v1312, 16
        %v1381 = vpack.i.b16 %v1380, %v1379
        %v1383 = vcombine.low %v1321, %v1337
        %v1384 = vcombine.high %v1321, %v1337
        %v1386 = vunpack.c.l.s4 1983009808
        %v1387 = vunpack.c.0.s8 %v1386
        %v1388 = vlaneseq
        %v1389 = vshrl.u32 %v1388, 7
        %v1390 = vsub.s32 %v1387, %v1389
        %v1391 = vrot.slane %v1383, %v1390
        %v1393 = vunpack.c.l.s4 1983009808
        %v1394 = vunpack.c.0.s8 %v1393
        %v1395 = vlaneseq
        %v1396 = vshrl.u32 %v1395, 7
        %v1397 = vsub.s32 %v1394, %v1396
        %v1398 = vrot.slane %v1384, %v1397
        %v1399 = vcombine.low %v1329, %v1345
        %v1400 = vcombine.high %v1329, %v1345
        %v1402 = vunpack.c.l.s4 1983009808
        %v1403 = vunpack.c.0.s8 %v1402
        %v1404 = vlaneseq
        %v1405 = vshrl.u32 %v1404, 7
        %v1406 = vsub.s32 %v1403, %v1405
        %v1407 = vrot.slane %v1399, %v1406
        %v1409 = vunpack.c.l.s4 1983009808
        %v1410 = vunpack.c.0.s8 %v1409
        %v1411 = vlaneseq
        %v1412 = vshrl.u32 %v1411, 7
        %v1413 = vsub.s32 %v1410, %v1412
        %v1414 = vrot.slane %v1400, %v1413
        %v1415 = vcombine.low %v1391, %v1407
        %v1416 = vcombine.high %v1391, %v1407
        %v1418 = vunpack.c.l.s4 1934713408
        %v1419 = vunpack.c.0.s8 %v1418
        %v1420 = vlaneseq
        %v1421 = vshrl.u32 %v1420, 7
        %v1422 = vsub.s32 %v1419, %v1421
        %v1423 = vrot.slane %v1415, %v1422
        %v1425 = vunpack.c.l.s4 1934713408
        %v1426 = vunpack.c.0.s8 %v1425
        %v1427 = vlaneseq
        %v1428 = vshrl.u32 %v1427, 7
        %v1429 = vsub.s32 %v1426, %v1428
        %v1430 = vrot.slane %v1416, %v1429
        %v1431 = vcombine.low %v1398, %v1414
        %v1432 = vcombine.high %v1398, %v1414
        %v1434 = vunpack.c.l.s4 1934713408
        %v1435 = vunpack.c.0.s8 %v1434
        %v1436 = vlaneseq
        %v1437 = vshrl.u32 %v1436, 7
        %v1438 = vsub.s32 %v1435, %v1437
        %v1439 = vrot.slane %v1431, %v1438
        %v1441 = vunpack.c.l.s4 1934713408
        %v1442 = vunpack.c.0.s8 %v1441
        %v1443 = vlaneseq
        %v1444 = vshrl.u32 %v1443, 7
        %v1445 = vsub.s32 %v1442, %v1444
        %v1446 = vrot.slane %v1432, %v1445
        %v1447 = vcombine.high %v1423, 0
        %v1448 = vcombine.high %v1430, 0
        %v1449 = vcombine.high %v1439, 0
        %v1450 = vcombine.high %v1446, 0
        %v1451 = vcombine.low %v1325, %v1341
        %v1452 = vcombine.high %v1325, %v1341
        %v1454 = vunpack.c.l.s4 1983009808
        %v1455 = vunpack.c.0.s8 %v1454
        %v1456 = vlaneseq
        %v1457 = vshrl.u32 %v1456, 7
        %v1458 = vsub.s32 %v1455, %v1457
        %v1459 = vrot.slane %v1451, %v1458
        %v1461 = vunpack.c.l.s4 1983009808
        %v1462 = vunpack.c.0.s8 %v1461
        %v1463 = vlaneseq
        %v1464 = vshrl.u32 %v1463, 7
        %v1465 = vsub.s32 %v1462, %v1464
        %v1466 = vrot.slane %v1452, %v1465
        %v1467 = vcombine.low %v1333, %v1349
        %v1468 = vcombine.high %v1333, %v1349
        %v1470 = vunpack.c.l.s4 1983009808
        %v1471 = vunpack.c.0.s8 %v1470
        %v1472 = vlaneseq
        %v1473 = vshrl.u32 %v1472, 7
        %v1474 = vsub.s32 %v1471, %v1473
        %v1475 = vrot.slane %v1467, %v1474
        %v1477 = vunpack.c.l.s4 1983009808
        %v1478 = vunpack.c.0.s8 %v1477
        %v1479 = vlaneseq
        %v1480 = vshrl.u32 %v1479, 7
        %v1481 = vsub.s32 %v1478, %v1480
        %v1482 = vrot.slane %v1468, %v1481
        %v1483 = vcombine.low %v1459, %v1475
        %v1484 = vcombine.high %v1459, %v1475
        %v1486 = vunpack.c.l.s4 1934713408
        %v1487 = vunpack.c.0.s8 %v1486
        %v1488 = vlaneseq
        %v1489 = vshrl.u32 %v1488, 7
        %v1490 = vsub.s32 %v1487, %v1489
        %v1491 = vrot.slane %v1483, %v1490
        %v1493 = vunpack.c.l.s4 1934713408
        %v1494 = vunpack.c.0.s8 %v1493
        %v1495 = vlaneseq
        %v1496 = vshrl.u32 %v1495, 7
        %v1497 = vsub.s32 %v1494, %v1496
        %v1498 = vrot.slane %v1484, %v1497
        %v1499 = vcombine.low %v1466, %v1482
        %v1500 = vcombine.high %v1466, %v1482
        %v1502 = vunpack.c.l.s4 1934713408
        %v1503 = vunpack.c.0.s8 %v1502
        %v1504 = vlaneseq
        %v1505 = vshrl.u32 %v1504, 7
        %v1506 = vsub.s32 %v1503, %v1505
        %v1507 = vrot.slane %v1499, %v1506
        %v1509 = vunpack.c.l.s4 1934713408
        %v1510 = vunpack.c.0.s8 %v1509
        %v1511 = vlaneseq
        %v1512 = vshrl.u32 %v1511, 7
        %v1513 = vsub.s32 %v1510, %v1512
        %v1514 = vrot.slane %v1500, %v1513
        %v1515 = vcombine.high %v1491, 0
        %v1516 = vcombine.high %v1498, 0
        %v1517 = vcombine.high %v1507, 0
        %v1518 = vcombine.high %v1514, 0
        %v1519 = vcombine.low %v1353, %v1369
        %v1520 = vcombine.high %v1353, %v1369
        %v1522 = vunpack.c.l.s4 1983009808
        %v1523 = vunpack.c.0.s8 %v1522
        %v1524 = vlaneseq
        %v1525 = vshrl.u32 %v1524, 7
        %v1526 = vsub.s32 %v1523, %v1525
        %v1527 = vrot.slane %v1519, %v1526
        %v1529 = vunpack.c.l.s4 1983009808
        %v1530 = vunpack.c.0.s8 %v1529
        %v1531 = vlaneseq
        %v1532 = vshrl.u32 %v1531, 7
        %v1533 = vsub.s32 %v1530, %v1532
        %v1534 = vrot.slane %v1520, %v1533
        %v1535 = vcombine.low %v1361, %v1377
        %v1536 = vcombine.high %v1361, %v1377
        %v1538 = vunpack.c.l.s4 1983009808
        %v1539 = vunpack.c.0.s8 %v1538
        %v1540 = vlaneseq
        %v1541 = vshrl.u32 %v1540, 7
        %v1542 = vsub.s32 %v1539, %v1541
        %v1543 = vrot.slane %v1535, %v1542
        %v1545 = vunpack.c.l.s4 1983009808
        %v1546 = vunpack.c.0.s8 %v1545
        %v1547 = vlaneseq
        %v1548 = vshrl.u32 %v1547, 7
        %v1549 = vsub.s32 %v1546, %v1548
        %v1550 = vrot.slane %v1536, %v1549
        %v1551 = vcombine.low %v1527, %v1543
        %v1552 = vcombine.high %v1527, %v1543
        %v1554 = vunpack.c.l.s4 1934713408
        %v1555 = vunpack.c.0.s8 %v1554
        %v1556 = vlaneseq
        %v1557 = vshrl.u32 %v1556, 7
        %v1558 = vsub.s32 %v1555, %v1557
        %v1559 = vrot.slane %v1551, %v1558
        %v1561 = vunpack.c.l.s4 1934713408
        %v1562 = vunpack.c.0.s8 %v1561
        %v1563 = vlaneseq
        %v1564 = vshrl.u32 %v1563, 7
        %v1565 = vsub.s32 %v1562, %v1564
        %v1566 = vrot.slane %v1552, %v1565
        %v1567 = vcombine.low %v1534, %v1550
        %v1568 = vcombine.high %v1534, %v1550
        %v1570 = vunpack.c.l.s4 1934713408
        %v1571 = vunpack.c.0.s8 %v1570
        %v1572 = vlaneseq
        %v1573 = vshrl.u32 %v1572, 7
        %v1574 = vsub.s32 %v1571, %v1573
        %v1575 = vrot.slane %v1567, %v1574
        %v1577 = vunpack.c.l.s4 1934713408
        %v1578 = vunpack.c.0.s8 %v1577
        %v1579 = vlaneseq
        %v1580 = vshrl.u32 %v1579, 7
        %v1581 = vsub.s32 %v1578, %v1580
        %v1582 = vrot.slane %v1568, %v1581
        %v1583 = vcombine.high %v1559, 0
        %v1584 = vcombine.high %v1566, 0
        %v1585 = vcombine.high %v1575, 0
        %v1586 = vcombine.high %v1582, 0
        %v1587 = vcombine.low %v1357, %v1373
        %v1588 = vcombine.high %v1357, %v1373
        %v1590 = vunpack.c.l.s4 1983009808
        %v1591 = vunpack.c.0.s8 %v1590
        %v1592 = vlaneseq
        %v1593 = vshrl.u32 %v1592, 7
        %v1594 = vsub.s32 %v1591, %v1593
        %v1595 = vrot.slane %v1587, %v1594
        %v1597 = vunpack.c.l.s4 1983009808
        %v1598 = vunpack.c.0.s8 %v1597
        %v1599 = vlaneseq
        %v1600 = vshrl.u32 %v1599, 7
        %v1601 = vsub.s32 %v1598, %v1600
        %v1602 = vrot.slane %v1588, %v1601
        %v1603 = vcombine.low %v1365, %v1381
        %v1604 = vcombine.high %v1365, %v1381
        %v1606 = vunpack.c.l.s4 1983009808
        %v1607 = vunpack.c.0.s8 %v1606
        %v1608 = vlaneseq
        %v1609 = vshrl.u32 %v1608, 7
        %v1610 = vsub.s32 %v1607, %v1609
        %v1611 = vrot.slane %v1603, %v1610
        %v1613 = vunpack.c.l.s4 1983009808
        %v1614 = vunpack.c.0.s8 %v1613
        %v1615 = vlaneseq
        %v1616 = vshrl.u32 %v1615, 7
        %v1617 = vsub.s32 %v1614, %v1616
        %v1618 = vrot.slane %v1604, %v1617
        %v1619 = vcombine.low %v1595, %v1611
        %v1620 = vcombine.high %v1595, %v1611
        %v1622 = vunpack.c.l.s4 1934713408
        %v1623 = vunpack.c.0.s8 %v1622
        %v1624 = vlaneseq
        %v1625 = vshrl.u32 %v1624, 7
        %v1626 = vsub.s32 %v1623, %v1625
        %v1627 = vrot.slane %v1619, %v1626
        %v1629 = vunpack.c.l.s4 1934713408
        %v1630 = vunpack.c.0.s8 %v1629
        %v1631 = vlaneseq
        %v1632 = vshrl.u32 %v1631, 7
        %v1633 = vsub.s32 %v1630, %v1632
        %v1634 = vrot.slane %v1620, %v1633
        %v1635 = vcombine.low %v1602, %v1618
        %v1636 = vcombine.high %v1602, %v1618
        %v1638 = vunpack.c.l.s4 1934713408
        %v1639 = vunpack.c.0.s8 %v1638
        %v1640 = vlaneseq
        %v1641 = vshrl.u32 %v1640, 7
        %v1642 = vsub.s32 %v1639, %v1641
        %v1643 = vrot.slane %v1635, %v1642
        %v1645 = vunpack.c.l.s4 1934713408
        %v1646 = vunpack.c.0.s8 %v1645
        %v1647 = vlaneseq
        %v1648 = vshrl.u32 %v1647, 7
        %v1649 = vsub.s32 %v1646, %v1648
        %v1650 = vrot.slane %v1636, %v1649
        %v1651 = vcombine.high %v1627, 0
        %v1652 = vcombine.high %v1634, 0
        %v1653 = vcombine.high %v1643, 0
        %v1654 = vcombine.high %v1650, 0
        %1655 = vxpose.xlu0.c.b16.start [1/8] %v1423, 128
        %1656 = vxpose.xlu0.c.b16.cont [2/8] 0, 128
        %1657 = vxpose.xlu0.c.b16.cont [3/8] 0, 128
        %1658 = vxpose.xlu0.c.b16.cont [4/8] 0, 128
        %1659 = vxpose.xlu0.c.b16.cont [5/8] 0, 128
        %1660 = vxpose.xlu0.c.b16.cont [6/8] 0, 128
        %1661 = vxpose.xlu0.c.b16.cont [7/8] 0, 128
        %1662 = vxpose.xlu0.c.b16.end [8/8] 0, 128
        %v1663 = vpop.trf.xlu0
        %v1664 = vpop.trf.xlu0
        %v1665 = vpop.trf.xlu0
        %v1666 = vpop.trf.xlu0
        %v1667 = vpop.trf.xlu0
        %v1668 = vpop.trf.xlu0
        %v1669 = vpop.trf.xlu0
        %v1670 = vpop.trf.xlu0
        %1671 = vxpose.xlu0.c.b16.start [1/8] %v1491, 128
        %1672 = vxpose.xlu0.c.b16.cont [2/8] 0, 128
        %1673 = vxpose.xlu0.c.b16.cont [3/8] 0, 128
        %1674 = vxpose.xlu0.c.b16.cont [4/8] 0, 128
        %1675 = vxpose.xlu0.c.b16.cont [5/8] 0, 128
        %1676 = vxpose.xlu0.c.b16.cont [6/8] 0, 128
        %1677 = vxpose.xlu0.c.b16.cont [7/8] 0, 128
        %1678 = vxpose.xlu0.c.b16.end [8/8] 0, 128
        %v1679 = vpop.trf.xlu0
        %v1680 = vpop.trf.xlu0
        %v1681 = vpop.trf.xlu0
        %v1682 = vpop.trf.xlu0
        %v1683 = vpop.trf.xlu0
        %v1684 = vpop.trf.xlu0
        %v1685 = vpop.trf.xlu0
        %v1686 = vpop.trf.xlu0
        %1687 = vxpose.xlu0.c.b16.start [1/8] %v1447, 128
        %1688 = vxpose.xlu0.c.b16.cont [2/8] 0, 128
        %1689 = vxpose.xlu0.c.b16.cont [3/8] 0, 128
        %1690 = vxpose.xlu0.c.b16.cont [4/8] 0, 128
        %1691 = vxpose.xlu0.c.b16.cont [5/8] 0, 128
        %1692 = vxpose.xlu0.c.b16.cont [6/8] 0, 128
        %1693 = vxpose.xlu0.c.b16.cont [7/8] 0, 128
        %1694 = vxpose.xlu0.c.b16.end [8/8] 0, 128
        %v1695 = vpop.trf.xlu0
        %v1696 = vpop.trf.xlu0
        %v1697 = vpop.trf.xlu0
        %v1698 = vpop.trf.xlu0
        %v1699 = vpop.trf.xlu0
        %v1700 = vpop.trf.xlu0
        %v1701 = vpop.trf.xlu0
        %v1702 = vpop.trf.xlu0
        %1703 = vxpose.xlu0.c.b16.start [1/8] %v1515, 128
        %1704 = vxpose.xlu0.c.b16.cont [2/8] 0, 128
        %1705 = vxpose.xlu0.c.b16.cont [3/8] 0, 128
        %1706 = vxpose.xlu0.c.b16.cont [4/8] 0, 128
        %1707 = vxpose.xlu0.c.b16.cont [5/8] 0, 128
        %1708 = vxpose.xlu0.c.b16.cont [6/8] 0, 128
        %1709 = vxpose.xlu0.c.b16.cont [7/8] 0, 128
        %1710 = vxpose.xlu0.c.b16.end [8/8] 0, 128
        %v1711 = vpop.trf.xlu0
        %v1712 = vpop.trf.xlu0
        %v1713 = vpop.trf.xlu0
        %v1714 = vpop.trf.xlu0
        %v1715 = vpop.trf.xlu0
        %v1716 = vpop.trf.xlu0
        %v1717 = vpop.trf.xlu0
        %v1718 = vpop.trf.xlu0
        %1719 = vxpose.xlu0.c.b16.start [1/8] %v1430, 128
        %1720 = vxpose.xlu0.c.b16.cont [2/8] 0, 128
        %1721 = vxpose.xlu0.c.b16.cont [3/8] 0, 128
        %1722 = vxpose.xlu0.c.b16.cont [4/8] 0, 128
        %1723 = vxpose.xlu0.c.b16.cont [5/8] 0, 128
        %1724 = vxpose.xlu0.c.b16.cont [6/8] 0, 128
        %1725 = vxpose.xlu0.c.b16.cont [7/8] 0, 128
        %1726 = vxpose.xlu0.c.b16.end [8/8] 0, 128
        %v1727 = vpop.trf.xlu0
        %v1728 = vpop.trf.xlu0
        %v1729 = vpop.trf.xlu0
        %v1730 = vpop.trf.xlu0
        %v1731 = vpop.trf.xlu0
        %v1732 = vpop.trf.xlu0
        %v1733 = vpop.trf.xlu0
        %v1734 = vpop.trf.xlu0
        %1735 = vxpose.xlu0.c.b16.start [1/8] %v1498, 128
        %1736 = vxpose.xlu0.c.b16.cont [2/8] 0, 128
        %1737 = vxpose.xlu0.c.b16.cont [3/8] 0, 128
        %1738 = vxpose.xlu0.c.b16.cont [4/8] 0, 128
        %1739 = vxpose.xlu0.c.b16.cont [5/8] 0, 128
        %1740 = vxpose.xlu0.c.b16.cont [6/8] 0, 128
        %1741 = vxpose.xlu0.c.b16.cont [7/8] 0, 128
        %1742 = vxpose.xlu0.c.b16.end [8/8] 0, 128
        %v1743 = vpop.trf.xlu0
        %v1744 = vpop.trf.xlu0
        %v1745 = vpop.trf.xlu0
        %v1746 = vpop.trf.xlu0
        %v1747 = vpop.trf.xlu0
        %v1748 = vpop.trf.xlu0
        %v1749 = vpop.trf.xlu0
        %v1750 = vpop.trf.xlu0
        %1751 = vxpose.xlu0.c.b16.start [1/8] %v1448, 128
        %1752 = vxpose.xlu0.c.b16.cont [2/8] 0, 128
        %1753 = vxpose.xlu0.c.b16.cont [3/8] 0, 128
        %1754 = vxpose.xlu0.c.b16.cont [4/8] 0, 128
        %1755 = vxpose.xlu0.c.b16.cont [5/8] 0, 128
        %1756 = vxpose.xlu0.c.b16.cont [6/8] 0, 128
        %1757 = vxpose.xlu0.c.b16.cont [7/8] 0, 128
        %1758 = vxpose.xlu0.c.b16.end [8/8] 0, 128
        %v1759 = vpop.trf.xlu0
        %v1760 = vpop.trf.xlu0
        %v1761 = vpop.trf.xlu0
        %v1762 = vpop.trf.xlu0
        %v1763 = vpop.trf.xlu0
        %v1764 = vpop.trf.xlu0
        %v1765 = vpop.trf.xlu0
        %v1766 = vpop.trf.xlu0
        %1767 = vxpose.xlu0.c.b16.start [1/8] %v1516, 128
        %1768 = vxpose.xlu0.c.b16.cont [2/8] 0, 128
        %1769 = vxpose.xlu0.c.b16.cont [3/8] 0, 128
        %1770 = vxpose.xlu0.c.b16.cont [4/8] 0, 128
        %1771 = vxpose.xlu0.c.b16.cont [5/8] 0, 128
        %1772 = vxpose.xlu0.c.b16.cont [6/8] 0, 128
        %1773 = vxpose.xlu0.c.b16.cont [7/8] 0, 128
        %1774 = vxpose.xlu0.c.b16.end [8/8] 0, 128
        %v1775 = vpop.trf.xlu0
        %v1776 = vpop.trf.xlu0
        %v1777 = vpop.trf.xlu0
        %v1778 = vpop.trf.xlu0
        %v1779 = vpop.trf.xlu0
        %v1780 = vpop.trf.xlu0
        %v1781 = vpop.trf.xlu0
        %v1782 = vpop.trf.xlu0
        %1783 = vxpose.xlu0.c.b16.start [1/8] %v1439, 128
        %1784 = vxpose.xlu0.c.b16.cont [2/8] 0, 128
        %1785 = vxpose.xlu0.c.b16.cont [3/8] 0, 128
        %1786 = vxpose.xlu0.c.b16.cont [4/8] 0, 128
        %1787 = vxpose.xlu0.c.b16.cont [5/8] 0, 128
        %1788 = vxpose.xlu0.c.b16.cont [6/8] 0, 128
        %1789 = vxpose.xlu0.c.b16.cont [7/8] 0, 128
        %1790 = vxpose.xlu0.c.b16.end [8/8] 0, 128
        %v1791 = vpop.trf.xlu0
        %v1792 = vpop.trf.xlu0
        %v1793 = vpop.trf.xlu0
        %v1794 = vpop.trf.xlu0
        %v1795 = vpop.trf.xlu0
        %v1796 = vpop.trf.xlu0
        %v1797 = vpop.trf.xlu0
        %v1798 = vpop.trf.xlu0
        %1799 = vxpose.xlu0.c.b16.start [1/8] %v1507, 128
        %1800 = vxpose.xlu0.c.b16.cont [2/8] 0, 128
        %1801 = vxpose.xlu0.c.b16.cont [3/8] 0, 128
        %1802 = vxpose.xlu0.c.b16.cont [4/8] 0, 128
        %1803 = vxpose.xlu0.c.b16.cont [5/8] 0, 128
        %1804 = vxpose.xlu0.c.b16.cont [6/8] 0, 128
        %1805 = vxpose.xlu0.c.b16.cont [7/8] 0, 128
        %1806 = vxpose.xlu0.c.b16.end [8/8] 0, 128
        %v1807 = vpop.trf.xlu0
        %v1808 = vpop.trf.xlu0
        %v1809 = vpop.trf.xlu0
        %v1810 = vpop.trf.xlu0
        %v1811 = vpop.trf.xlu0
        %v1812 = vpop.trf.xlu0
        %v1813 = vpop.trf.xlu0
        %v1814 = vpop.trf.xlu0
        %1815 = vxpose.xlu0.c.b16.start [1/8] %v1449, 128
        %1816 = vxpose.xlu0.c.b16.cont [2/8] 0, 128
        %1817 = vxpose.xlu0.c.b16.cont [3/8] 0, 128
        %1818 = vxpose.xlu0.c.b16.cont [4/8] 0, 128
        %1819 = vxpose.xlu0.c.b16.cont [5/8] 0, 128
        %1820 = vxpose.xlu0.c.b16.cont [6/8] 0, 128
        %1821 = vxpose.xlu0.c.b16.cont [7/8] 0, 128
        %1822 = vxpose.xlu0.c.b16.end [8/8] 0, 128
        %v1823 = vpop.trf.xlu0
        %v1824 = vpop.trf.xlu0
        %v1825 = vpop.trf.xlu0
        %v1826 = vpop.trf.xlu0
        %v1827 = vpop.trf.xlu0
        %v1828 = vpop.trf.xlu0
        %v1829 = vpop.trf.xlu0
        %v1830 = vpop.trf.xlu0
        %1831 = vxpose.xlu0.c.b16.start [1/8] %v1517, 128
        %1832 = vxpose.xlu0.c.b16.cont [2/8] 0, 128
        %1833 = vxpose.xlu0.c.b16.cont [3/8] 0, 128
        %1834 = vxpose.xlu0.c.b16.cont [4/8] 0, 128
        %1835 = vxpose.xlu0.c.b16.cont [5/8] 0, 128
        %1836 = vxpose.xlu0.c.b16.cont [6/8] 0, 128
        %1837 = vxpose.xlu0.c.b16.cont [7/8] 0, 128
        %1838 = vxpose.xlu0.c.b16.end [8/8] 0, 128
        %v1839 = vpop.trf.xlu0
        %v1840 = vpop.trf.xlu0
        %v1841 = vpop.trf.xlu0
        %v1842 = vpop.trf.xlu0
        %v1843 = vpop.trf.xlu0
        %v1844 = vpop.trf.xlu0
        %v1845 = vpop.trf.xlu0
        %v1846 = vpop.trf.xlu0
        %1847 = vxpose.xlu0.c.b16.start [1/8] %v1446, 128
        %1848 = vxpose.xlu0.c.b16.cont [2/8] 0, 128
        %1849 = vxpose.xlu0.c.b16.cont [3/8] 0, 128
        %1850 = vxpose.xlu0.c.b16.cont [4/8] 0, 128
        %1851 = vxpose.xlu0.c.b16.cont [5/8] 0, 128
        %1852 = vxpose.xlu0.c.b16.cont [6/8] 0, 128
        %1853 = vxpose.xlu0.c.b16.cont [7/8] 0, 128
        %1854 = vxpose.xlu0.c.b16.end [8/8] 0, 128
        %v1855 = vpop.trf.xlu0
        %v1856 = vpop.trf.xlu0
        %v1857 = vpop.trf.xlu0
        %v1858 = vpop.trf.xlu0
        %v1859 = vpop.trf.xlu0
        %v1860 = vpop.trf.xlu0
        %v1861 = vpop.trf.xlu0
        %v1862 = vpop.trf.xlu0
        %1863 = vxpose.xlu0.c.b16.start [1/8] %v1514, 128
        %1864 = vxpose.xlu0.c.b16.cont [2/8] 0, 128
        %1865 = vxpose.xlu0.c.b16.cont [3/8] 0, 128
        %1866 = vxpose.xlu0.c.b16.cont [4/8] 0, 128
        %1867 = vxpose.xlu0.c.b16.cont [5/8] 0, 128
        %1868 = vxpose.xlu0.c.b16.cont [6/8] 0, 128
        %1869 = vxpose.xlu0.c.b16.cont [7/8] 0, 128
        %1870 = vxpose.xlu0.c.b16.end [8/8] 0, 128
        %v1871 = vpop.trf.xlu0
        %v1872 = vpop.trf.xlu0
        %v1873 = vpop.trf.xlu0
        %v1874 = vpop.trf.xlu0
        %v1875 = vpop.trf.xlu0
        %v1876 = vpop.trf.xlu0
        %v1877 = vpop.trf.xlu0
        %v1878 = vpop.trf.xlu0
        %1879 = vxpose.xlu0.c.b16.start [1/8] %v1450, 128
        %1880 = vxpose.xlu0.c.b16.cont [2/8] 0, 128
        %1881 = vxpose.xlu0.c.b16.cont [3/8] 0, 128
        %1882 = vxpose.xlu0.c.b16.cont [4/8] 0, 128
        %1883 = vxpose.xlu0.c.b16.cont [5/8] 0, 128
        %1884 = vxpose.xlu0.c.b16.cont [6/8] 0, 128
        %1885 = vxpose.xlu0.c.b16.cont [7/8] 0, 128
        %1886 = vxpose.xlu0.c.b16.end [8/8] 0, 128
        %v1887 = vpop.trf.xlu0
        %v1888 = vpop.trf.xlu0
        %v1889 = vpop.trf.xlu0
        %v1890 = vpop.trf.xlu0
        %v1891 = vpop.trf.xlu0
        %v1892 = vpop.trf.xlu0
        %v1893 = vpop.trf.xlu0
        %v1894 = vpop.trf.xlu0
        %1895 = vxpose.xlu0.c.b16.start [1/8] %v1518, 128
        %1896 = vxpose.xlu0.c.b16.cont [2/8] 0, 128
        %1897 = vxpose.xlu0.c.b16.cont [3/8] 0, 128
        %1898 = vxpose.xlu0.c.b16.cont [4/8] 0, 128
        %1899 = vxpose.xlu0.c.b16.cont [5/8] 0, 128
        %1900 = vxpose.xlu0.c.b16.cont [6/8] 0, 128
        %1901 = vxpose.xlu0.c.b16.cont [7/8] 0, 128
        %1902 = vxpose.xlu0.c.b16.end [8/8] 0, 128
        %v1903 = vpop.trf.xlu0
        %v1904 = vpop.trf.xlu0
        %v1905 = vpop.trf.xlu0
        %v1906 = vpop.trf.xlu0
        %v1907 = vpop.trf.xlu0
        %v1908 = vpop.trf.xlu0
        %v1909 = vpop.trf.xlu0
        %v1910 = vpop.trf.xlu0
        %1911 = vxpose.xlu0.c.b16.start [1/8] %v1559, 128
        %1912 = vxpose.xlu0.c.b16.cont [2/8] 0, 128
        %1913 = vxpose.xlu0.c.b16.cont [3/8] 0, 128
        %1914 = vxpose.xlu0.c.b16.cont [4/8] 0, 128
        %1915 = vxpose.xlu0.c.b16.cont [5/8] 0, 128
        %1916 = vxpose.xlu0.c.b16.cont [6/8] 0, 128
        %1917 = vxpose.xlu0.c.b16.cont [7/8] 0, 128
        %1918 = vxpose.xlu0.c.b16.end [8/8] 0, 128
        %v1919 = vpop.trf.xlu0
        %v1920 = vpop.trf.xlu0
        %v1921 = vpop.trf.xlu0
        %v1922 = vpop.trf.xlu0
        %v1923 = vpop.trf.xlu0
        %v1924 = vpop.trf.xlu0
        %v1925 = vpop.trf.xlu0
        %v1926 = vpop.trf.xlu0
        %1927 = vxpose.xlu0.c.b16.start [1/8] %v1627, 128
        %1928 = vxpose.xlu0.c.b16.cont [2/8] 0, 128
        %1929 = vxpose.xlu0.c.b16.cont [3/8] 0, 128
        %1930 = vxpose.xlu0.c.b16.cont [4/8] 0, 128
        %1931 = vxpose.xlu0.c.b16.cont [5/8] 0, 128
        %1932 = vxpose.xlu0.c.b16.cont [6/8] 0, 128
        %1933 = vxpose.xlu0.c.b16.cont [7/8] 0, 128
        %1934 = vxpose.xlu0.c.b16.end [8/8] 0, 128
        %v1935 = vpop.trf.xlu0
        %v1936 = vpop.trf.xlu0
        %v1937 = vpop.trf.xlu0
        %v1938 = vpop.trf.xlu0
        %v1939 = vpop.trf.xlu0
        %v1940 = vpop.trf.xlu0
        %v1941 = vpop.trf.xlu0
        %v1942 = vpop.trf.xlu0
        %1943 = vxpose.xlu0.c.b16.start [1/8] %v1583, 128
        %1944 = vxpose.xlu0.c.b16.cont [2/8] 0, 128
        %1945 = vxpose.xlu0.c.b16.cont [3/8] 0, 128
        %1946 = vxpose.xlu0.c.b16.cont [4/8] 0, 128
        %1947 = vxpose.xlu0.c.b16.cont [5/8] 0, 128
        %1948 = vxpose.xlu0.c.b16.cont [6/8] 0, 128
        %1949 = vxpose.xlu0.c.b16.cont [7/8] 0, 128
        %1950 = vxpose.xlu0.c.b16.end [8/8] 0, 128
        %v1951 = vpop.trf.xlu0
        %v1952 = vpop.trf.xlu0
        %v1953 = vpop.trf.xlu0
        %v1954 = vpop.trf.xlu0
        %v1955 = vpop.trf.xlu0
        %v1956 = vpop.trf.xlu0
        %v1957 = vpop.trf.xlu0
        %v1958 = vpop.trf.xlu0
        %1959 = vxpose.xlu0.c.b16.start [1/8] %v1651, 128
        %1960 = vxpose.xlu0.c.b16.cont [2/8] 0, 128
        %1961 = vxpose.xlu0.c.b16.cont [3/8] 0, 128
        %1962 = vxpose.xlu0.c.b16.cont [4/8] 0, 128
        %1963 = vxpose.xlu0.c.b16.cont [5/8] 0, 128
        %1964 = vxpose.xlu0.c.b16.cont [6/8] 0, 128
        %1965 = vxpose.xlu0.c.b16.cont [7/8] 0, 128
        %1966 = vxpose.xlu0.c.b16.end [8/8] 0, 128
        %v1967 = vpop.trf.xlu0
        %v1968 = vpop.trf.xlu0
        %v1969 = vpop.trf.xlu0
        %v1970 = vpop.trf.xlu0
        %v1971 = vpop.trf.xlu0
        %v1972 = vpop.trf.xlu0
        %v1973 = vpop.trf.xlu0
        %v1974 = vpop.trf.xlu0
        %1975 = vxpose.xlu0.c.b16.start [1/8] %v1566, 128
        %1976 = vxpose.xlu0.c.b16.cont [2/8] 0, 128
        %1977 = vxpose.xlu0.c.b16.cont [3/8] 0, 128
        %1978 = vxpose.xlu0.c.b16.cont [4/8] 0, 128
        %1979 = vxpose.xlu0.c.b16.cont [5/8] 0, 128
        %1980 = vxpose.xlu0.c.b16.cont [6/8] 0, 128
        %1981 = vxpose.xlu0.c.b16.cont [7/8] 0, 128
        %1982 = vxpose.xlu0.c.b16.end [8/8] 0, 128
        %v1983 = vpop.trf.xlu0
        %v1984 = vpop.trf.xlu0
        %v1985 = vpop.trf.xlu0
        %v1986 = vpop.trf.xlu0
        %v1987 = vpop.trf.xlu0
        %v1988 = vpop.trf.xlu0
        %v1989 = vpop.trf.xlu0
        %v1990 = vpop.trf.xlu0
        %1991 = vxpose.xlu0.c.b16.start [1/8] %v1634, 128
        %1992 = vxpose.xlu0.c.b16.cont [2/8] 0, 128
        %1993 = vxpose.xlu0.c.b16.cont [3/8] 0, 128
        %1994 = vxpose.xlu0.c.b16.cont [4/8] 0, 128
        %1995 = vxpose.xlu0.c.b16.cont [5/8] 0, 128
        %1996 = vxpose.xlu0.c.b16.cont [6/8] 0, 128
        %1997 = vxpose.xlu0.c.b16.cont [7/8] 0, 128
        %1998 = vxpose.xlu0.c.b16.end [8/8] 0, 128
        %v1999 = vpop.trf.xlu0
        %v2000 = vpop.trf.xlu0
        %v2001 = vpop.trf.xlu0
        %v2002 = vpop.trf.xlu0
        %v2003 = vpop.trf.xlu0
        %v2004 = vpop.trf.xlu0
        %v2005 = vpop.trf.xlu0
        %v2006 = vpop.trf.xlu0
        %2007 = vxpose.xlu0.c.b16.start [1/8] %v1584, 128
        %2008 = vxpose.xlu0.c.b16.cont [2/8] 0, 128
        %2009 = vxpose.xlu0.c.b16.cont [3/8] 0, 128
        %2010 = vxpose.xlu0.c.b16.cont [4/8] 0, 128
        %2011 = vxpose.xlu0.c.b16.cont [5/8] 0, 128
        %2012 = vxpose.xlu0.c.b16.cont [6/8] 0, 128
        %2013 = vxpose.xlu0.c.b16.cont [7/8] 0, 128
        %2014 = vxpose.xlu0.c.b16.end [8/8] 0, 128
        %v2015 = vpop.trf.xlu0
        %v2016 = vpop.trf.xlu0
        %v2017 = vpop.trf.xlu0
        %v2018 = vpop.trf.xlu0
        %v2019 = vpop.trf.xlu0
        %v2020 = vpop.trf.xlu0
        %v2021 = vpop.trf.xlu0
        %v2022 = vpop.trf.xlu0
        %2023 = vxpose.xlu0.c.b16.start [1/8] %v1652, 128
        %2024 = vxpose.xlu0.c.b16.cont [2/8] 0, 128
        %2025 = vxpose.xlu0.c.b16.cont [3/8] 0, 128
        %2026 = vxpose.xlu0.c.b16.cont [4/8] 0, 128
        %2027 = vxpose.xlu0.c.b16.cont [5/8] 0, 128
        %2028 = vxpose.xlu0.c.b16.cont [6/8] 0, 128
        %2029 = vxpose.xlu0.c.b16.cont [7/8] 0, 128
        %2030 = vxpose.xlu0.c.b16.end [8/8] 0, 128
        %v2031 = vpop.trf.xlu0
        %v2032 = vpop.trf.xlu0
        %v2033 = vpop.trf.xlu0
        %v2034 = vpop.trf.xlu0
        %v2035 = vpop.trf.xlu0
        %v2036 = vpop.trf.xlu0
        %v2037 = vpop.trf.xlu0
        %v2038 = vpop.trf.xlu0
        %2039 = vxpose.xlu0.c.b16.start [1/8] %v1575, 128
        %2040 = vxpose.xlu0.c.b16.cont [2/8] 0, 128
        %2041 = vxpose.xlu0.c.b16.cont [3/8] 0, 128
        %2042 = vxpose.xlu0.c.b16.cont [4/8] 0, 128
        %2043 = vxpose.xlu0.c.b16.cont [5/8] 0, 128
        %2044 = vxpose.xlu0.c.b16.cont [6/8] 0, 128
        %2045 = vxpose.xlu0.c.b16.cont [7/8] 0, 128
        %2046 = vxpose.xlu0.c.b16.end [8/8] 0, 128
        %v2047 = vpop.trf.xlu0
        %v2048 = vpop.trf.xlu0
        %v2049 = vpop.trf.xlu0
        %v2050 = vpop.trf.xlu0
        %v2051 = vpop.trf.xlu0
        %v2052 = vpop.trf.xlu0
        %v2053 = vpop.trf.xlu0
        %v2054 = vpop.trf.xlu0
        %2055 = vxpose.xlu0.c.b16.start [1/8] %v1643, 128
        %2056 = vxpose.xlu0.c.b16.cont [2/8] 0, 128
        %2057 = vxpose.xlu0.c.b16.cont [3/8] 0, 128
        %2058 = vxpose.xlu0.c.b16.cont [4/8] 0, 128
        %2059 = vxpose.xlu0.c.b16.cont [5/8] 0, 128
        %2060 = vxpose.xlu0.c.b16.cont [6/8] 0, 128
        %2061 = vxpose.xlu0.c.b16.cont [7/8] 0, 128
        %2062 = vxpose.xlu0.c.b16.end [8/8] 0, 128
        %v2063 = vpop.trf.xlu0
        %v2064 = vpop.trf.xlu0
        %v2065 = vpop.trf.xlu0
        %v2066 = vpop.trf.xlu0
        %v2067 = vpop.trf.xlu0
        %v2068 = vpop.trf.xlu0
        %v2069 = vpop.trf.xlu0
        %v2070 = vpop.trf.xlu0
        %2071 = vxpose.xlu0.c.b16.start [1/8] %v1585, 128
        %2072 = vxpose.xlu0.c.b16.cont [2/8] 0, 128
        %2073 = vxpose.xlu0.c.b16.cont [3/8] 0, 128
        %2074 = vxpose.xlu0.c.b16.cont [4/8] 0, 128
        %2075 = vxpose.xlu0.c.b16.cont [5/8] 0, 128
        %2076 = vxpose.xlu0.c.b16.cont [6/8] 0, 128
        %2077 = vxpose.xlu0.c.b16.cont [7/8] 0, 128
        %2078 = vxpose.xlu0.c.b16.end [8/8] 0, 128
        %v2079 = vpop.trf.xlu0
        %v2080 = vpop.trf.xlu0
        %v2081 = vpop.trf.xlu0
        %v2082 = vpop.trf.xlu0
        %v2083 = vpop.trf.xlu0
        %v2084 = vpop.trf.xlu0
        %v2085 = vpop.trf.xlu0
        %v2086 = vpop.trf.xlu0
        %2087 = vxpose.xlu0.c.b16.start [1/8] %v1653, 128
        %2088 = vxpose.xlu0.c.b16.cont [2/8] 0, 128
        %2089 = vxpose.xlu0.c.b16.cont [3/8] 0, 128
        %2090 = vxpose.xlu0.c.b16.cont [4/8] 0, 128
        %2091 = vxpose.xlu0.c.b16.cont [5/8] 0, 128
        %2092 = vxpose.xlu0.c.b16.cont [6/8] 0, 128
        %2093 = vxpose.xlu0.c.b16.cont [7/8] 0, 128
        %2094 = vxpose.xlu0.c.b16.end [8/8] 0, 128
        %v2095 = vpop.trf.xlu0
        %v2096 = vpop.trf.xlu0
        %v2097 = vpop.trf.xlu0
        %v2098 = vpop.trf.xlu0
        %v2099 = vpop.trf.xlu0
        %v2100 = vpop.trf.xlu0
        %v2101 = vpop.trf.xlu0
        %v2102 = vpop.trf.xlu0
        %2103 = vxpose.xlu0.c.b16.start [1/8] %v1582, 128
        %2104 = vxpose.xlu0.c.b16.cont [2/8] 0, 128
        %2105 = vxpose.xlu0.c.b16.cont [3/8] 0, 128
        %2106 = vxpose.xlu0.c.b16.cont [4/8] 0, 128
        %2107 = vxpose.xlu0.c.b16.cont [5/8] 0, 128
        %2108 = vxpose.xlu0.c.b16.cont [6/8] 0, 128
        %2109 = vxpose.xlu0.c.b16.cont [7/8] 0, 128
        %2110 = vxpose.xlu0.c.b16.end [8/8] 0, 128
        %v2111 = vpop.trf.xlu0
        %v2112 = vpop.trf.xlu0
        %v2113 = vpop.trf.xlu0
        %v2114 = vpop.trf.xlu0
        %v2115 = vpop.trf.xlu0
        %v2116 = vpop.trf.xlu0
        %v2117 = vpop.trf.xlu0
        %v2118 = vpop.trf.xlu0
        %2119 = vxpose.xlu0.c.b16.start [1/8] %v1650, 128
        %2120 = vxpose.xlu0.c.b16.cont [2/8] 0, 128
        %2121 = vxpose.xlu0.c.b16.cont [3/8] 0, 128
        %2122 = vxpose.xlu0.c.b16.cont [4/8] 0, 128
        %2123 = vxpose.xlu0.c.b16.cont [5/8] 0, 128
        %2124 = vxpose.xlu0.c.b16.cont [6/8] 0, 128
        %2125 = vxpose.xlu0.c.b16.cont [7/8] 0, 128
        %2126 = vxpose.xlu0.c.b16.end [8/8] 0, 128
        %v2127 = vpop.trf.xlu0
        %v2128 = vpop.trf.xlu0
        %v2129 = vpop.trf.xlu0
        %v2130 = vpop.trf.xlu0
        %v2131 = vpop.trf.xlu0
        %v2132 = vpop.trf.xlu0
        %v2133 = vpop.trf.xlu0
        %v2134 = vpop.trf.xlu0
        %2135 = vxpose.xlu0.c.b16.start [1/8] %v1586, 128
        %2136 = vxpose.xlu0.c.b16.cont [2/8] 0, 128
        %2137 = vxpose.xlu0.c.b16.cont [3/8] 0, 128
        %2138 = vxpose.xlu0.c.b16.cont [4/8] 0, 128
        %2139 = vxpose.xlu0.c.b16.cont [5/8] 0, 128
        %2140 = vxpose.xlu0.c.b16.cont [6/8] 0, 128
        %2141 = vxpose.xlu0.c.b16.cont [7/8] 0, 128
        %2142 = vxpose.xlu0.c.b16.end [8/8] 0, 128
        %v2143 = vpop.trf.xlu0
        %v2144 = vpop.trf.xlu0
        %v2145 = vpop.trf.xlu0
        %v2146 = vpop.trf.xlu0
        %v2147 = vpop.trf.xlu0
        %v2148 = vpop.trf.xlu0
        %v2149 = vpop.trf.xlu0
        %v2150 = vpop.trf.xlu0
        %2151 = vxpose.xlu0.c.b16.start [1/8] %v1654, 128
        %2152 = vxpose.xlu0.c.b16.cont [2/8] 0, 128
        %2153 = vxpose.xlu0.c.b16.cont [3/8] 0, 128
        %2154 = vxpose.xlu0.c.b16.cont [4/8] 0, 128
        %2155 = vxpose.xlu0.c.b16.cont [5/8] 0, 128
        %2156 = vxpose.xlu0.c.b16.cont [6/8] 0, 128
        %2157 = vxpose.xlu0.c.b16.cont [7/8] 0, 128
        %2158 = vxpose.xlu0.c.b16.end [8/8] 0, 128
        %v2159 = vpop.trf.xlu0
        %v2160 = vpop.trf.xlu0
        %v2161 = vpop.trf.xlu0
        %v2162 = vpop.trf.xlu0
        %v2163 = vpop.trf.xlu0
        %v2164 = vpop.trf.xlu0
        %v2165 = vpop.trf.xlu0
        %v2166 = vpop.trf.xlu0
        %v2167 = vcombine.low %v1663, %v1727
        %v2169 = vunpack.c.l.s4 1983009808
        %v2170 = vunpack.c.0.s8 %v2169
        %v2171 = vlaneseq
        %v2172 = vshrl.u32 %v2171, 7
        %v2173 = vsub.s32 %v2170, %v2172
        %v2174 = vrot.slane %v2167, %v2173
        %v2175 = vcombine.low %v1695, %v1759
        %v2177 = vunpack.c.l.s4 1983009808
        %v2178 = vunpack.c.0.s8 %v2177
        %v2179 = vlaneseq
        %v2180 = vshrl.u32 %v2179, 7
        %v2181 = vsub.s32 %v2178, %v2180
        %v2182 = vrot.slane %v2175, %v2181
        %v2183 = vcombine.low %v1791, %v1855
        %v2185 = vunpack.c.l.s4 1983009808
        %v2186 = vunpack.c.0.s8 %v2185
        %v2187 = vlaneseq
        %v2188 = vshrl.u32 %v2187, 7
        %v2189 = vsub.s32 %v2186, %v2188
        %v2190 = vrot.slane %v2183, %v2189
        %v2191 = vcombine.low %v1823, %v1887
        %v2193 = vunpack.c.l.s4 1983009808
        %v2194 = vunpack.c.0.s8 %v2193
        %v2195 = vlaneseq
        %v2196 = vshrl.u32 %v2195, 7
        %v2197 = vsub.s32 %v2194, %v2196
        %v2198 = vrot.slane %v2191, %v2197
        %v2199 = vcombine.low %v2174, %v2182
        %v2201 = vunpack.c.l.s4 1934713408
        %v2202 = vunpack.c.0.s8 %v2201
        %v2203 = vlaneseq
        %v2204 = vshrl.u32 %v2203, 7
        %v2205 = vsub.s32 %v2202, %v2204
        %v2206 = vrot.slane %v2199, %v2205
        %v2207 = vcombine.low %v2190, %v2198
        %v2209 = vunpack.c.l.s4 1934713408
        %v2210 = vunpack.c.0.s8 %v2209
        %v2211 = vlaneseq
        %v2212 = vshrl.u32 %v2211, 7
        %v2213 = vsub.s32 %v2210, %v2212
        %v2214 = vrot.slane %v2207, %v2213
        %v2215 = vcombine.low %v2206, %v2214
        %v2216 = vcombine.high %v2206, %v2214
        %v2217 = vcombine.low %v1679, %v1743
        %v2219 = vunpack.c.l.s4 1983009808
        %v2220 = vunpack.c.0.s8 %v2219
        %v2221 = vlaneseq
        %v2222 = vshrl.u32 %v2221, 7
        %v2223 = vsub.s32 %v2220, %v2222
        %v2224 = vrot.slane %v2217, %v2223
        %v2225 = vcombine.low %v1711, %v1775
        %v2227 = vunpack.c.l.s4 1983009808
        %v2228 = vunpack.c.0.s8 %v2227
        %v2229 = vlaneseq
        %v2230 = vshrl.u32 %v2229, 7
        %v2231 = vsub.s32 %v2228, %v2230
        %v2232 = vrot.slane %v2225, %v2231
        %v2233 = vcombine.low %v1807, %v1871
        %v2235 = vunpack.c.l.s4 1983009808
        %v2236 = vunpack.c.0.s8 %v2235
        %v2237 = vlaneseq
        %v2238 = vshrl.u32 %v2237, 7
        %v2239 = vsub.s32 %v2236, %v2238
        %v2240 = vrot.slane %v2233, %v2239
        %v2241 = vcombine.low %v1839, %v1903
        %v2243 = vunpack.c.l.s4 1983009808
        %v2244 = vunpack.c.0.s8 %v2243
        %v2245 = vlaneseq
        %v2246 = vshrl.u32 %v2245, 7
        %v2247 = vsub.s32 %v2244, %v2246
        %v2248 = vrot.slane %v2241, %v2247
        %v2249 = vcombine.low %v2224, %v2232
        %v2251 = vunpack.c.l.s4 1934713408
        %v2252 = vunpack.c.0.s8 %v2251
        %v2253 = vlaneseq
        %v2254 = vshrl.u32 %v2253, 7
        %v2255 = vsub.s32 %v2252, %v2254
        %v2256 = vrot.slane %v2249, %v2255
        %v2257 = vcombine.low %v2240, %v2248
        %v2259 = vunpack.c.l.s4 1934713408
        %v2260 = vunpack.c.0.s8 %v2259
        %v2261 = vlaneseq
        %v2262 = vshrl.u32 %v2261, 7
        %v2263 = vsub.s32 %v2260, %v2262
        %v2264 = vrot.slane %v2257, %v2263
        %v2265 = vcombine.low %v2256, %v2264
        %v2266 = vcombine.high %v2256, %v2264
        %v2267 = vcombine.low %v1919, %v1983
        %v2269 = vunpack.c.l.s4 1983009808
        %v2270 = vunpack.c.0.s8 %v2269
        %v2271 = vlaneseq
        %v2272 = vshrl.u32 %v2271, 7
        %v2273 = vsub.s32 %v2270, %v2272
        %v2274 = vrot.slane %v2267, %v2273
        %v2275 = vcombine.low %v1951, %v2015
        %v2277 = vunpack.c.l.s4 1983009808
        %v2278 = vunpack.c.0.s8 %v2277
        %v2279 = vlaneseq
        %v2280 = vshrl.u32 %v2279, 7
        %v2281 = vsub.s32 %v2278, %v2280
        %v2282 = vrot.slane %v2275, %v2281
        %v2283 = vcombine.low %v2047, %v2111
        %v2285 = vunpack.c.l.s4 1983009808
        %v2286 = vunpack.c.0.s8 %v2285
        %v2287 = vlaneseq
        %v2288 = vshrl.u32 %v2287, 7
        %v2289 = vsub.s32 %v2286, %v2288
        %v2290 = vrot.slane %v2283, %v2289
        %v2291 = vcombine.low %v2079, %v2143
        %v2293 = vunpack.c.l.s4 1983009808
        %v2294 = vunpack.c.0.s8 %v2293
        %v2295 = vlaneseq
        %v2296 = vshrl.u32 %v2295, 7
        %v2297 = vsub.s32 %v2294, %v2296
        %v2298 = vrot.slane %v2291, %v2297
        %v2299 = vcombine.low %v2274, %v2282
        %v2301 = vunpack.c.l.s4 1934713408
        %v2302 = vunpack.c.0.s8 %v2301
        %v2303 = vlaneseq
        %v2304 = vshrl.u32 %v2303, 7
        %v2305 = vsub.s32 %v2302, %v2304
        %v2306 = vrot.slane %v2299, %v2305
        %v2307 = vcombine.low %v2290, %v2298
        %v2309 = vunpack.c.l.s4 1934713408
        %v2310 = vunpack.c.0.s8 %v2309
        %v2311 = vlaneseq
        %v2312 = vshrl.u32 %v2311, 7
        %v2313 = vsub.s32 %v2310, %v2312
        %v2314 = vrot.slane %v2307, %v2313
        %v2315 = vcombine.low %v2306, %v2314
        %v2316 = vcombine.high %v2306, %v2314
        %v2317 = vcombine.low %v1935, %v1999
        %v2319 = vunpack.c.l.s4 1983009808
        %v2320 = vunpack.c.0.s8 %v2319
        %v2321 = vlaneseq
        %v2322 = vshrl.u32 %v2321, 7
        %v2323 = vsub.s32 %v2320, %v2322
        %v2324 = vrot.slane %v2317, %v2323
        %v2325 = vcombine.low %v1967, %v2031
        %v2327 = vunpack.c.l.s4 1983009808
        %v2328 = vunpack.c.0.s8 %v2327
        %v2329 = vlaneseq
        %v2330 = vshrl.u32 %v2329, 7
        %v2331 = vsub.s32 %v2328, %v2330
        %v2332 = vrot.slane %v2325, %v2331
        %v2333 = vcombine.low %v2063, %v2127
        %v2335 = vunpack.c.l.s4 1983009808
        %v2336 = vunpack.c.0.s8 %v2335
        %v2337 = vlaneseq
        %v2338 = vshrl.u32 %v2337, 7
        %v2339 = vsub.s32 %v2336, %v2338
        %v2340 = vrot.slane %v2333, %v2339
        %v2341 = vcombine.low %v2095, %v2159
        %v2343 = vunpack.c.l.s4 1983009808
        %v2344 = vunpack.c.0.s8 %v2343
        %v2345 = vlaneseq
        %v2346 = vshrl.u32 %v2345, 7
        %v2347 = vsub.s32 %v2344, %v2346
        %v2348 = vrot.slane %v2341, %v2347
        %v2349 = vcombine.low %v2324, %v2332
        %v2351 = vunpack.c.l.s4 1934713408
        %v2352 = vunpack.c.0.s8 %v2351
        %v2353 = vlaneseq
        %v2354 = vshrl.u32 %v2353, 7
        %v2355 = vsub.s32 %v2352, %v2354
        %v2356 = vrot.slane %v2349, %v2355
        %v2357 = vcombine.low %v2340, %v2348
        %v2359 = vunpack.c.l.s4 1934713408
        %v2360 = vunpack.c.0.s8 %v2359
        %v2361 = vlaneseq
        %v2362 = vshrl.u32 %v2361, 7
        %v2363 = vsub.s32 %v2360, %v2362
        %v2364 = vrot.slane %v2357, %v2363
        %v2365 = vcombine.low %v2356, %v2364
        %v2366 = vcombine.high %v2356, %v2364
        %v2369 = vpack.i.b16 %v2265, %v2215
        %v2371 = vshrl.u32 %v2215, 16
        %v2372 = vshrl.u32 %v2265, 16
        %v2373 = vpack.i.b16 %v2372, %v2371
        %v2377 = vpack.i.b16 %v2266, %v2216
        %v2379 = vshrl.u32 %v2216, 16
        %v2380 = vshrl.u32 %v2266, 16
        %v2381 = vpack.i.b16 %v2380, %v2379
        %v2385 = vpack.i.b16 %v2365, %v2315
        %v2387 = vshrl.u32 %v2315, 16
        %v2388 = vshrl.u32 %v2365, 16
        %v2389 = vpack.i.b16 %v2388, %v2387
        %v2393 = vpack.i.b16 %v2366, %v2316
        %v2395 = vshrl.u32 %v2316, 16
        %v2396 = vshrl.u32 %v2366, 16
        %v2397 = vpack.i.b16 %v2396, %v2395
        %vm2399 = vcmask 261120
        %v2401 = vsel %vm2399, %v1181, 0
        %2403 = vmatprep.subr.bf16.mxu0 0
        %2404 = vmatpush1.bf16.msra.mxu0 %v2369
        %2405 = vmatprep.subr.bf16.mxu0 0
        %2406 = vmatpush1.bf16.msra.mxu0 %v2385
        %2407 = vmatprep.subr.bf16.mxu0 0
        %2408 = vmatpush1.bf16.msra.mxu0 0
        %2409 = vmatprep.subr.bf16.mxu0 0
        %2410 = vmatpush1.bf16.msra.mxu0 0
        %2411 = vmatprep.subr.bf16.mxu0 0
        %2412 = vmatpush1.bf16.msra.mxu0 0
        %2413 = vmatprep.subr.bf16.mxu0 0
        %2414 = vmatpush1.bf16.msra.mxu0 0
        %2415 = vmatprep.subr.bf16.mxu0 0
        %2416 = vmatpush1.bf16.msra.mxu0 0
        %2417 = vmatprep.subr.bf16.mxu0 0
        %2418 = vmatpush1.bf16.msra.mxu0 0
        %2419 = vmatprep.subr.bf16.mxu0 0
        %2420 = vmatpush1.bf16.msra.mxu0 0
        %2421 = vmatprep.subr.bf16.mxu0 0
        %2422 = vmatpush1.bf16.msra.mxu0 0
        %2423 = vmatprep.subr.bf16.mxu0 0
        %2424 = vmatpush1.bf16.msra.mxu0 0
        %2425 = vmatprep.subr.bf16.mxu0 0
        %2426 = vmatpush1.bf16.msra.mxu0 0
        %2427 = vmatprep.subr.bf16.mxu0 0
        %2428 = vmatpush1.bf16.msra.mxu0 0
        %2429 = vmatprep.subr.bf16.mxu0 0
        %2430 = vmatpush1.bf16.msra.mxu0 0
        %2431 = vmatprep.subr.bf16.mxu0 0
        %2432 = vmatpush1.bf16.msra.mxu0 0
        %2433 = vmatprep.subr.bf16.mxu0 0
        %2434 = vmatpush1.bf16.msra.mxu0 0
        %2435 = vmatprep.mubr.bf16.mxu0 0
        %2436 = vmatmul.mubr.bf16.gmra.mrb[0].mxu0 %v2401
        %v2437 = vpop.f32.mrb[0].mxu0
        %v2438 = vadd.f32 %v1127, %v2437
        %v2439 = vpop.f32.mrb[0].mxu0
        %v2440 = vpop.f32.mrb[0].mxu0
        %v2441 = vpop.f32.mrb[0].mxu0
        %2442 = vdwg.mxu0
        %v2444 = vsel %vm2399, %v1184, 0
        %2446 = vmatprep.subr.bf16.mxu0 0
        %2447 = vmatpush1.bf16.msra.mxu0 %v2373
        %2448 = vmatprep.subr.bf16.mxu0 0
        %2449 = vmatpush1.bf16.msra.mxu0 %v2389
        %2450 = vmatprep.subr.bf16.mxu0 0
        %2451 = vmatpush1.bf16.msra.mxu0 0
        %2452 = vmatprep.subr.bf16.mxu0 0
        %2453 = vmatpush1.bf16.msra.mxu0 0
        %2454 = vmatprep.subr.bf16.mxu0 0
        %2455 = vmatpush1.bf16.msra.mxu0 0
        %2456 = vmatprep.subr.bf16.mxu0 0
        %2457 = vmatpush1.bf16.msra.mxu0 0
        %2458 = vmatprep.subr.bf16.mxu0 0
        %2459 = vmatpush1.bf16.msra.mxu0 0
        %2460 = vmatprep.subr.bf16.mxu0 0
        %2461 = vmatpush1.bf16.msra.mxu0 0
        %2462 = vmatprep.subr.bf16.mxu0 0
        %2463 = vmatpush1.bf16.msra.mxu0 0
        %2464 = vmatprep.subr.bf16.mxu0 0
        %2465 = vmatpush1.bf16.msra.mxu0 0
        %2466 = vmatprep.subr.bf16.mxu0 0
        %2467 = vmatpush1.bf16.msra.mxu0 0
        %2468 = vmatprep.subr.bf16.mxu0 0
        %2469 = vmatpush1.bf16.msra.mxu0 0
        %2470 = vmatprep.subr.bf16.mxu0 0
        %2471 = vmatpush1.bf16.msra.mxu0 0
        %2472 = vmatprep.subr.bf16.mxu0 0
        %2473 = vmatpush1.bf16.msra.mxu0 0
        %2474 = vmatprep.subr.bf16.mxu0 0
        %2475 = vmatpush1.bf16.msra.mxu0 0
        %2476 = vmatprep.subr.bf16.mxu0 0
        %2477 = vmatpush1.bf16.msra.mxu0 0
        %2478 = vmatprep.mubr.bf16.mxu0 0
        %2479 = vmatmul.mubr.bf16.gmra.mrb[0].mxu0 %v2444
        %v2480 = vpop.f32.mrb[0].mxu0
        %v2481 = vadd.f32 %v1127, %v2480
        %v2482 = vpop.f32.mrb[0].mxu0
        %v2483 = vpop.f32.mrb[0].mxu0
        %v2484 = vpop.f32.mrb[0].mxu0
        %2485 = vdwg.mxu0
        %v2487 = vsel %vm2399, %v1187, 0
        %2489 = vmatprep.subr.bf16.mxu0 0
        %2490 = vmatpush1.bf16.msra.mxu0 %v2377
        %2491 = vmatprep.subr.bf16.mxu0 0
        %2492 = vmatpush1.bf16.msra.mxu0 %v2393
        %2493 = vmatprep.subr.bf16.mxu0 0
        %2494 = vmatpush1.bf16.msra.mxu0 0
        %2495 = vmatprep.subr.bf16.mxu0 0
        %2496 = vmatpush1.bf16.msra.mxu0 0
        %2497 = vmatprep.subr.bf16.mxu0 0
        %2498 = vmatpush1.bf16.msra.mxu0 0
        %2499 = vmatprep.subr.bf16.mxu0 0
        %2500 = vmatpush1.bf16.msra.mxu0 0
        %2501 = vmatprep.subr.bf16.mxu0 0
        %2502 = vmatpush1.bf16.msra.mxu0 0
        %2503 = vmatprep.subr.bf16.mxu0 0
        %2504 = vmatpush1.bf16.msra.mxu0 0
        %2505 = vmatprep.subr.bf16.mxu0 0
        %2506 = vmatpush1.bf16.msra.mxu0 0
        %2507 = vmatprep.subr.bf16.mxu0 0
        %2508 = vmatpush1.bf16.msra.mxu0 0
        %2509 = vmatprep.subr.bf16.mxu0 0
        %2510 = vmatpush1.bf16.msra.mxu0 0
        %2511 = vmatprep.subr.bf16.mxu0 0
        %2512 = vmatpush1.bf16.msra.mxu0 0
        %2513 = vmatprep.subr.bf16.mxu0 0
        %2514 = vmatpush1.bf16.msra.mxu0 0
        %2515 = vmatprep.subr.bf16.mxu0 0
        %2516 = vmatpush1.bf16.msra.mxu0 0
        %2517 = vmatprep.subr.bf16.mxu0 0
        %2518 = vmatpush1.bf16.msra.mxu0 0
        %2519 = vmatprep.subr.bf16.mxu0 0
        %2520 = vmatpush1.bf16.msra.mxu0 0
        %2521 = vmatprep.mubr.bf16.mxu0 0
        %2522 = vmatmul.mubr.bf16.gmra.mrb[0].mxu0 %v2487
        %v2523 = vpop.f32.mrb[0].mxu0
        %v2524 = vadd.f32 %v1127, %v2523
        %v2525 = vpop.f32.mrb[0].mxu0
        %v2526 = vpop.f32.mrb[0].mxu0
        %v2527 = vpop.f32.mrb[0].mxu0
        %2528 = vdwg.mxu0
        %v2530 = vsel %vm2399, %v1190, 0
        %2532 = vmatprep.subr.bf16.mxu0 0
        %2533 = vmatpush1.bf16.msra.mxu0 %v2381
        %2534 = vmatprep.subr.bf16.mxu0 0
        %2535 = vmatpush1.bf16.msra.mxu0 %v2397
        %2536 = vmatprep.subr.bf16.mxu0 0
        %2537 = vmatpush1.bf16.msra.mxu0 0
        %2538 = vmatprep.subr.bf16.mxu0 0
        %2539 = vmatpush1.bf16.msra.mxu0 0
        %2540 = vmatprep.subr.bf16.mxu0 0
        %2541 = vmatpush1.bf16.msra.mxu0 0
        %2542 = vmatprep.subr.bf16.mxu0 0
        %2543 = vmatpush1.bf16.msra.mxu0 0
        %2544 = vmatprep.subr.bf16.mxu0 0
        %2545 = vmatpush1.bf16.msra.mxu0 0
        %2546 = vmatprep.subr.bf16.mxu0 0
        %2547 = vmatpush1.bf16.msra.mxu0 0
        %2548 = vmatprep.subr.bf16.mxu0 0
        %2549 = vmatpush1.bf16.msra.mxu0 0
        %2550 = vmatprep.subr.bf16.mxu0 0
        %2551 = vmatpush1.bf16.msra.mxu0 0
        %2552 = vmatprep.subr.bf16.mxu0 0
        %2553 = vmatpush1.bf16.msra.mxu0 0
        %2554 = vmatprep.subr.bf16.mxu0 0
        %2555 = vmatpush1.bf16.msra.mxu0 0
        %2556 = vmatprep.subr.bf16.mxu0 0
        %2557 = vmatpush1.bf16.msra.mxu0 0
        %2558 = vmatprep.subr.bf16.mxu0 0
        %2559 = vmatpush1.bf16.msra.mxu0 0
        %2560 = vmatprep.subr.bf16.mxu0 0
        %2561 = vmatpush1.bf16.msra.mxu0 0
        %2562 = vmatprep.subr.bf16.mxu0 0
        %2563 = vmatpush1.bf16.msra.mxu0 0
        %2564 = vmatprep.mubr.bf16.mxu0 0
        %2565 = vmatmul.mubr.bf16.gmra.mrb[0].mxu0 %v2530
        %v2566 = vpop.f32.mrb[0].mxu0
        %v2567 = vadd.f32 %v1127, %v2566
        %v2568 = vpop.f32.mrb[0].mxu0
        %v2569 = vpop.f32.mrb[0].mxu0
        %v2570 = vpop.f32.mrb[0].mxu0
        %2571 = vdwg.mxu0
        %vm2572 = vcmask 64512
        %v2573 = vsel %vm2572, %v2438, -inf
        %2574 = vmax.xlane.f32.xlu0 %v2573
        %v2575 = vpop.xlane.xlu0 %2574
        %v2576 = vsel %vm2572, %v2481, -inf
        %2577 = vmax.xlane.f32.xlu0 %v2576
        %v2578 = vpop.xlane.xlu0 %2577
        %v2579 = vsel %vm2572, %v2524, -inf
        %2580 = vmax.xlane.f32.xlu0 %v2579
        %v2581 = vpop.xlane.xlu0 %2580
        %v2582 = vsel %vm2572, %v2567, -inf
        %2583 = vmax.xlane.f32.xlu0 %v2582
        %v2584 = vpop.xlane.xlu0 %2583
        %v2585 = vsub.f32 %v2438, %v2575
        %v2586 = vsub.f32 %v2481, %v2578
        %v2587 = vsub.f32 %v2524, %v2581
        %v2588 = vsub.f32 %v2567, %v2584
        %v2589 = vmul.f32 %v2585, 1.442695
        %v2590 = vpow.pop %v2589
        %v2591 = vmul.f32 %v2586, 1.442695
        %v2592 = vpow.pop %v2591
        %v2593 = vmul.f32 %v2587, 1.442695
        %v2594 = vpow.pop %v2593
        %v2595 = vmul.f32 %v2588, 1.442695
        %v2596 = vpow.pop %v2595
        %v2597 = vsel %vm2572, %v2590, 0.0
        %2598 = vadd.xlane.f32.xlu0 %v2597
        %v2599 = vpop.xlane.xlu0 %2598
        %v2600 = vsel %vm2572, %v2592, 0.0
        %2601 = vadd.xlane.f32.xlu0 %v2600
        %v2602 = vpop.xlane.xlu0 %2601
        %v2603 = vsel %vm2572, %v2594, 0.0
        %2604 = vadd.xlane.f32.xlu0 %v2603
        %v2605 = vpop.xlane.xlu0 %2604
        %v2606 = vsel %vm2572, %v2596, 0.0
        %2607 = vadd.xlane.f32.xlu0 %v2606
        %v2608 = vpop.xlane.xlu0 %2607
        %v2609 = vrcp.pop %v2599
        %v2610 = vrcp.pop %v2602
        %v2611 = vrcp.pop %v2605
        %v2612 = vrcp.pop %v2608
        %v2613 = vmul.f32 %v2590, %v2609
        %v2614 = vmul.f32 %v2592, %v2610
        %v2615 = vmul.f32 %v2594, %v2611
        %v2616 = vmul.f32 %v2596, %v2612
        %v2617 = vpack.c.bf16 %v2613, %v2613
        %v2618 = vpack.c.bf16 %v2614, %v2614
        %v2619 = vpack.c.bf16 %v2615, %v2615
        %v2620 = vpack.c.bf16 %v2616, %v2616
        %v2621 = vpack.c.bf16 %v1077, %v1077
        %v2622 = vpack.c.bf16 %v1101, %v1101
        %v2623 = vpack.c.bf16 %v1084, %v1084
        %v2624 = vpack.c.bf16 %v1102, %v1102
        %v2625 = vpack.c.bf16 %v1093, %v1093
        %v2626 = vpack.c.bf16 %v1103, %v1103
        %v2627 = vpack.c.bf16 %v1100, %v1100
        %v2628 = vpack.c.bf16 %v1104, %v1104
        %2629 = vxpose.xlu0.c.b16.start [1/8] %v2621, 128
        %2630 = vxpose.xlu0.c.b16.cont [2/8] 0, 128
        %2631 = vxpose.xlu0.c.b16.cont [3/8] 0, 128
        %2632 = vxpose.xlu0.c.b16.cont [4/8] 0, 128
        %2633 = vxpose.xlu0.c.b16.cont [5/8] 0, 128
        %2634 = vxpose.xlu0.c.b16.cont [6/8] 0, 128
        %2635 = vxpose.xlu0.c.b16.cont [7/8] 0, 128
        %2636 = vxpose.xlu0.c.b16.end [8/8] 0, 128
        %v2637 = vpop.trf.xlu0
        %v2638 = vpop.trf.xlu0
        %v2639 = vpop.trf.xlu0
        %v2640 = vpop.trf.xlu0
        %v2641 = vpop.trf.xlu0
        %v2642 = vpop.trf.xlu0
        %v2643 = vpop.trf.xlu0
        %v2644 = vpop.trf.xlu0
        %2645 = vxpose.xlu0.c.b16.start [1/8] %v2622, 128
        %2646 = vxpose.xlu0.c.b16.cont [2/8] 0, 128
        %2647 = vxpose.xlu0.c.b16.cont [3/8] 0, 128
        %2648 = vxpose.xlu0.c.b16.cont [4/8] 0, 128
        %2649 = vxpose.xlu0.c.b16.cont [5/8] 0, 128
        %2650 = vxpose.xlu0.c.b16.cont [6/8] 0, 128
        %2651 = vxpose.xlu0.c.b16.cont [7/8] 0, 128
        %2652 = vxpose.xlu0.c.b16.end [8/8] 0, 128
        %v2653 = vpop.trf.xlu0
        %v2654 = vpop.trf.xlu0
        %v2655 = vpop.trf.xlu0
        %v2656 = vpop.trf.xlu0
        %v2657 = vpop.trf.xlu0
        %v2658 = vpop.trf.xlu0
        %v2659 = vpop.trf.xlu0
        %v2660 = vpop.trf.xlu0
        %2661 = vxpose.xlu0.c.b16.start [1/8] %v2623, 128
        %2662 = vxpose.xlu0.c.b16.cont [2/8] 0, 128
        %2663 = vxpose.xlu0.c.b16.cont [3/8] 0, 128
        %2664 = vxpose.xlu0.c.b16.cont [4/8] 0, 128
        %2665 = vxpose.xlu0.c.b16.cont [5/8] 0, 128
        %2666 = vxpose.xlu0.c.b16.cont [6/8] 0, 128
        %2667 = vxpose.xlu0.c.b16.cont [7/8] 0, 128
        %2668 = vxpose.xlu0.c.b16.end [8/8] 0, 128
        %v2669 = vpop.trf.xlu0
        %v2670 = vpop.trf.xlu0
        %v2671 = vpop.trf.xlu0
        %v2672 = vpop.trf.xlu0
        %v2673 = vpop.trf.xlu0
        %v2674 = vpop.trf.xlu0
        %v2675 = vpop.trf.xlu0
        %v2676 = vpop.trf.xlu0
        %2677 = vxpose.xlu0.c.b16.start [1/8] %v2624, 128
        %2678 = vxpose.xlu0.c.b16.cont [2/8] 0, 128
        %2679 = vxpose.xlu0.c.b16.cont [3/8] 0, 128
        %2680 = vxpose.xlu0.c.b16.cont [4/8] 0, 128
        %2681 = vxpose.xlu0.c.b16.cont [5/8] 0, 128
        %2682 = vxpose.xlu0.c.b16.cont [6/8] 0, 128
        %2683 = vxpose.xlu0.c.b16.cont [7/8] 0, 128
        %2684 = vxpose.xlu0.c.b16.end [8/8] 0, 128
        %v2685 = vpop.trf.xlu0
        %v2686 = vpop.trf.xlu0
        %v2687 = vpop.trf.xlu0
        %v2688 = vpop.trf.xlu0
        %v2689 = vpop.trf.xlu0
        %v2690 = vpop.trf.xlu0
        %v2691 = vpop.trf.xlu0
        %v2692 = vpop.trf.xlu0
        %2693 = vxpose.xlu0.c.b16.start [1/8] %v2625, 128
        %2694 = vxpose.xlu0.c.b16.cont [2/8] 0, 128
        %2695 = vxpose.xlu0.c.b16.cont [3/8] 0, 128
        %2696 = vxpose.xlu0.c.b16.cont [4/8] 0, 128
        %2697 = vxpose.xlu0.c.b16.cont [5/8] 0, 128
        %2698 = vxpose.xlu0.c.b16.cont [6/8] 0, 128
        %2699 = vxpose.xlu0.c.b16.cont [7/8] 0, 128
        %2700 = vxpose.xlu0.c.b16.end [8/8] 0, 128
        %v2701 = vpop.trf.xlu0
        %v2702 = vpop.trf.xlu0
        %v2703 = vpop.trf.xlu0
        %v2704 = vpop.trf.xlu0
        %v2705 = vpop.trf.xlu0
        %v2706 = vpop.trf.xlu0
        %v2707 = vpop.trf.xlu0
        %v2708 = vpop.trf.xlu0
        %2709 = vxpose.xlu0.c.b16.start [1/8] %v2626, 128
        %2710 = vxpose.xlu0.c.b16.cont [2/8] 0, 128
        %2711 = vxpose.xlu0.c.b16.cont [3/8] 0, 128
        %2712 = vxpose.xlu0.c.b16.cont [4/8] 0, 128
        %2713 = vxpose.xlu0.c.b16.cont [5/8] 0, 128
        %2714 = vxpose.xlu0.c.b16.cont [6/8] 0, 128
        %2715 = vxpose.xlu0.c.b16.cont [7/8] 0, 128
        %2716 = vxpose.xlu0.c.b16.end [8/8] 0, 128
        %v2717 = vpop.trf.xlu0
        %v2718 = vpop.trf.xlu0
        %v2719 = vpop.trf.xlu0
        %v2720 = vpop.trf.xlu0
        %v2721 = vpop.trf.xlu0
        %v2722 = vpop.trf.xlu0
        %v2723 = vpop.trf.xlu0
        %v2724 = vpop.trf.xlu0
        %2725 = vxpose.xlu0.c.b16.start [1/8] %v2627, 128
        %2726 = vxpose.xlu0.c.b16.cont [2/8] 0, 128
        %2727 = vxpose.xlu0.c.b16.cont [3/8] 0, 128
        %2728 = vxpose.xlu0.c.b16.cont [4/8] 0, 128
        %2729 = vxpose.xlu0.c.b16.cont [5/8] 0, 128
        %2730 = vxpose.xlu0.c.b16.cont [6/8] 0, 128
        %2731 = vxpose.xlu0.c.b16.cont [7/8] 0, 128
        %2732 = vxpose.xlu0.c.b16.end [8/8] 0, 128
        %v2733 = vpop.trf.xlu0
        %v2734 = vpop.trf.xlu0
        %v2735 = vpop.trf.xlu0
        %v2736 = vpop.trf.xlu0
        %v2737 = vpop.trf.xlu0
        %v2738 = vpop.trf.xlu0
        %v2739 = vpop.trf.xlu0
        %v2740 = vpop.trf.xlu0
        %2741 = vxpose.xlu0.c.b16.start [1/8] %v2628, 128
        %2742 = vxpose.xlu0.c.b16.cont [2/8] 0, 128
        %2743 = vxpose.xlu0.c.b16.cont [3/8] 0, 128
        %2744 = vxpose.xlu0.c.b16.cont [4/8] 0, 128
        %2745 = vxpose.xlu0.c.b16.cont [5/8] 0, 128
        %2746 = vxpose.xlu0.c.b16.cont [6/8] 0, 128
        %2747 = vxpose.xlu0.c.b16.cont [7/8] 0, 128
        %2748 = vxpose.xlu0.c.b16.end [8/8] 0, 128
        %v2749 = vpop.trf.xlu0
        %v2750 = vpop.trf.xlu0
        %v2751 = vpop.trf.xlu0
        %v2752 = vpop.trf.xlu0
        %v2753 = vpop.trf.xlu0
        %v2754 = vpop.trf.xlu0
        %v2755 = vpop.trf.xlu0
        %v2756 = vpop.trf.xlu0
        %v2759 = vpack.i.b16 %v2653, %v2637
        %v2761 = vshrl.u32 %v2637, 16
        %v2762 = vshrl.u32 %v2653, 16
        %v2763 = vpack.i.b16 %v2762, %v2761
        %v2767 = vpack.i.b16 %v2685, %v2669
        %v2769 = vshrl.u32 %v2669, 16
        %v2770 = vshrl.u32 %v2685, 16
        %v2771 = vpack.i.b16 %v2770, %v2769
        %v2775 = vpack.i.b16 %v2717, %v2701
        %v2777 = vshrl.u32 %v2701, 16
        %v2778 = vshrl.u32 %v2717, 16
        %v2779 = vpack.i.b16 %v2778, %v2777
        %v2783 = vpack.i.b16 %v2749, %v2733
        %v2785 = vshrl.u32 %v2733, 16
        %v2786 = vshrl.u32 %v2749, 16
        %v2787 = vpack.i.b16 %v2786, %v2785
        %v2791 = vpack.i.b16 %v2654, %v2638
        %v2793 = vshrl.u32 %v2638, 16
        %v2794 = vshrl.u32 %v2654, 16
        %v2795 = vpack.i.b16 %v2794, %v2793
        %v2799 = vpack.i.b16 %v2686, %v2670
        %v2801 = vshrl.u32 %v2670, 16
        %v2802 = vshrl.u32 %v2686, 16
        %v2803 = vpack.i.b16 %v2802, %v2801
        %v2807 = vpack.i.b16 %v2718, %v2702
        %v2809 = vshrl.u32 %v2702, 16
        %v2810 = vshrl.u32 %v2718, 16
        %v2811 = vpack.i.b16 %v2810, %v2809
        %v2815 = vpack.i.b16 %v2750, %v2734
        %v2817 = vshrl.u32 %v2734, 16
        %v2818 = vshrl.u32 %v2750, 16
        %v2819 = vpack.i.b16 %v2818, %v2817
        %v2821 = vcombine.low %v2759, %v2775
        %v2822 = vcombine.high %v2759, %v2775
        %v2824 = vunpack.c.l.s4 1983009808
        %v2825 = vunpack.c.0.s8 %v2824
        %v2826 = vlaneseq
        %v2827 = vshrl.u32 %v2826, 7
        %v2828 = vsub.s32 %v2825, %v2827
        %v2829 = vrot.slane %v2821, %v2828
        %v2831 = vunpack.c.l.s4 1983009808
        %v2832 = vunpack.c.0.s8 %v2831
        %v2833 = vlaneseq
        %v2834 = vshrl.u32 %v2833, 7
        %v2835 = vsub.s32 %v2832, %v2834
        %v2836 = vrot.slane %v2822, %v2835
        %v2837 = vcombine.low %v2767, %v2783
        %v2838 = vcombine.high %v2767, %v2783
        %v2840 = vunpack.c.l.s4 1983009808
        %v2841 = vunpack.c.0.s8 %v2840
        %v2842 = vlaneseq
        %v2843 = vshrl.u32 %v2842, 7
        %v2844 = vsub.s32 %v2841, %v2843
        %v2845 = vrot.slane %v2837, %v2844
        %v2847 = vunpack.c.l.s4 1983009808
        %v2848 = vunpack.c.0.s8 %v2847
        %v2849 = vlaneseq
        %v2850 = vshrl.u32 %v2849, 7
        %v2851 = vsub.s32 %v2848, %v2850
        %v2852 = vrot.slane %v2838, %v2851
        %v2853 = vcombine.low %v2829, %v2845
        %v2854 = vcombine.high %v2829, %v2845
        %v2856 = vunpack.c.l.s4 1934713408
        %v2857 = vunpack.c.0.s8 %v2856
        %v2858 = vlaneseq
        %v2859 = vshrl.u32 %v2858, 7
        %v2860 = vsub.s32 %v2857, %v2859
        %v2861 = vrot.slane %v2853, %v2860
        %v2863 = vunpack.c.l.s4 1934713408
        %v2864 = vunpack.c.0.s8 %v2863
        %v2865 = vlaneseq
        %v2866 = vshrl.u32 %v2865, 7
        %v2867 = vsub.s32 %v2864, %v2866
        %v2868 = vrot.slane %v2854, %v2867
        %v2869 = vcombine.low %v2836, %v2852
        %v2870 = vcombine.high %v2836, %v2852
        %v2872 = vunpack.c.l.s4 1934713408
        %v2873 = vunpack.c.0.s8 %v2872
        %v2874 = vlaneseq
        %v2875 = vshrl.u32 %v2874, 7
        %v2876 = vsub.s32 %v2873, %v2875
        %v2877 = vrot.slane %v2869, %v2876
        %v2879 = vunpack.c.l.s4 1934713408
        %v2880 = vunpack.c.0.s8 %v2879
        %v2881 = vlaneseq
        %v2882 = vshrl.u32 %v2881, 7
        %v2883 = vsub.s32 %v2880, %v2882
        %v2884 = vrot.slane %v2870, %v2883
        %v2885 = vcombine.high %v2861, 0
        %v2886 = vcombine.high %v2868, 0
        %v2887 = vcombine.high %v2877, 0
        %v2888 = vcombine.high %v2884, 0
        %v2889 = vcombine.low %v2763, %v2779
        %v2890 = vcombine.high %v2763, %v2779
        %v2892 = vunpack.c.l.s4 1983009808
        %v2893 = vunpack.c.0.s8 %v2892
        %v2894 = vlaneseq
        %v2895 = vshrl.u32 %v2894, 7
        %v2896 = vsub.s32 %v2893, %v2895
        %v2897 = vrot.slane %v2889, %v2896
        %v2899 = vunpack.c.l.s4 1983009808
        %v2900 = vunpack.c.0.s8 %v2899
        %v2901 = vlaneseq
        %v2902 = vshrl.u32 %v2901, 7
        %v2903 = vsub.s32 %v2900, %v2902
        %v2904 = vrot.slane %v2890, %v2903
        %v2905 = vcombine.low %v2771, %v2787
        %v2906 = vcombine.high %v2771, %v2787
        %v2908 = vunpack.c.l.s4 1983009808
        %v2909 = vunpack.c.0.s8 %v2908
        %v2910 = vlaneseq
        %v2911 = vshrl.u32 %v2910, 7
        %v2912 = vsub.s32 %v2909, %v2911
        %v2913 = vrot.slane %v2905, %v2912
        %v2915 = vunpack.c.l.s4 1983009808
        %v2916 = vunpack.c.0.s8 %v2915
        %v2917 = vlaneseq
        %v2918 = vshrl.u32 %v2917, 7
        %v2919 = vsub.s32 %v2916, %v2918
        %v2920 = vrot.slane %v2906, %v2919
        %v2921 = vcombine.low %v2897, %v2913
        %v2922 = vcombine.high %v2897, %v2913
        %v2924 = vunpack.c.l.s4 1934713408
        %v2925 = vunpack.c.0.s8 %v2924
        %v2926 = vlaneseq
        %v2927 = vshrl.u32 %v2926, 7
        %v2928 = vsub.s32 %v2925, %v2927
        %v2929 = vrot.slane %v2921, %v2928
        %v2931 = vunpack.c.l.s4 1934713408
        %v2932 = vunpack.c.0.s8 %v2931
        %v2933 = vlaneseq
        %v2934 = vshrl.u32 %v2933, 7
        %v2935 = vsub.s32 %v2932, %v2934
        %v2936 = vrot.slane %v2922, %v2935
        %v2937 = vcombine.low %v2904, %v2920
        %v2938 = vcombine.high %v2904, %v2920
        %v2940 = vunpack.c.l.s4 1934713408
        %v2941 = vunpack.c.0.s8 %v2940
        %v2942 = vlaneseq
        %v2943 = vshrl.u32 %v2942, 7
        %v2944 = vsub.s32 %v2941, %v2943
        %v2945 = vrot.slane %v2937, %v2944
        %v2947 = vunpack.c.l.s4 1934713408
        %v2948 = vunpack.c.0.s8 %v2947
        %v2949 = vlaneseq
        %v2950 = vshrl.u32 %v2949, 7
        %v2951 = vsub.s32 %v2948, %v2950
        %v2952 = vrot.slane %v2938, %v2951
        %v2953 = vcombine.high %v2929, 0
        %v2954 = vcombine.high %v2936, 0
        %v2955 = vcombine.high %v2945, 0
        %v2956 = vcombine.high %v2952, 0
        %v2957 = vcombine.low %v2791, %v2807
        %v2958 = vcombine.high %v2791, %v2807
        %v2960 = vunpack.c.l.s4 1983009808
        %v2961 = vunpack.c.0.s8 %v2960
        %v2962 = vlaneseq
        %v2963 = vshrl.u32 %v2962, 7
        %v2964 = vsub.s32 %v2961, %v2963
        %v2965 = vrot.slane %v2957, %v2964
        %v2967 = vunpack.c.l.s4 1983009808
        %v2968 = vunpack.c.0.s8 %v2967
        %v2969 = vlaneseq
        %v2970 = vshrl.u32 %v2969, 7
        %v2971 = vsub.s32 %v2968, %v2970
        %v2972 = vrot.slane %v2958, %v2971
        %v2973 = vcombine.low %v2799, %v2815
        %v2974 = vcombine.high %v2799, %v2815
        %v2976 = vunpack.c.l.s4 1983009808
        %v2977 = vunpack.c.0.s8 %v2976
        %v2978 = vlaneseq
        %v2979 = vshrl.u32 %v2978, 7
        %v2980 = vsub.s32 %v2977, %v2979
        %v2981 = vrot.slane %v2973, %v2980
        %v2983 = vunpack.c.l.s4 1983009808
        %v2984 = vunpack.c.0.s8 %v2983
        %v2985 = vlaneseq
        %v2986 = vshrl.u32 %v2985, 7
        %v2987 = vsub.s32 %v2984, %v2986
        %v2988 = vrot.slane %v2974, %v2987
        %v2989 = vcombine.low %v2965, %v2981
        %v2990 = vcombine.high %v2965, %v2981
        %v2992 = vunpack.c.l.s4 1934713408
        %v2993 = vunpack.c.0.s8 %v2992
        %v2994 = vlaneseq
        %v2995 = vshrl.u32 %v2994, 7
        %v2996 = vsub.s32 %v2993, %v2995
        %v2997 = vrot.slane %v2989, %v2996
        %v2999 = vunpack.c.l.s4 1934713408
        %v3000 = vunpack.c.0.s8 %v2999
        %v3001 = vlaneseq
        %v3002 = vshrl.u32 %v3001, 7
        %v3003 = vsub.s32 %v3000, %v3002
        %v3004 = vrot.slane %v2990, %v3003
        %v3005 = vcombine.low %v2972, %v2988
        %v3006 = vcombine.high %v2972, %v2988
        %v3008 = vunpack.c.l.s4 1934713408
        %v3009 = vunpack.c.0.s8 %v3008
        %v3010 = vlaneseq
        %v3011 = vshrl.u32 %v3010, 7
        %v3012 = vsub.s32 %v3009, %v3011
        %v3013 = vrot.slane %v3005, %v3012
        %v3015 = vunpack.c.l.s4 1934713408
        %v3016 = vunpack.c.0.s8 %v3015
        %v3017 = vlaneseq
        %v3018 = vshrl.u32 %v3017, 7
        %v3019 = vsub.s32 %v3016, %v3018
        %v3020 = vrot.slane %v3006, %v3019
        %v3021 = vcombine.high %v2997, 0
        %v3022 = vcombine.high %v3004, 0
        %v3023 = vcombine.high %v3013, 0
        %v3024 = vcombine.high %v3020, 0
        %v3025 = vcombine.low %v2795, %v2811
        %v3026 = vcombine.high %v2795, %v2811
        %v3028 = vunpack.c.l.s4 1983009808
        %v3029 = vunpack.c.0.s8 %v3028
        %v3030 = vlaneseq
        %v3031 = vshrl.u32 %v3030, 7
        %v3032 = vsub.s32 %v3029, %v3031
        %v3033 = vrot.slane %v3025, %v3032
        %v3035 = vunpack.c.l.s4 1983009808
        %v3036 = vunpack.c.0.s8 %v3035
        %v3037 = vlaneseq
        %v3038 = vshrl.u32 %v3037, 7
        %v3039 = vsub.s32 %v3036, %v3038
        %v3040 = vrot.slane %v3026, %v3039
        %v3041 = vcombine.low %v2803, %v2819
        %v3042 = vcombine.high %v2803, %v2819
        %v3044 = vunpack.c.l.s4 1983009808
        %v3045 = vunpack.c.0.s8 %v3044
        %v3046 = vlaneseq
        %v3047 = vshrl.u32 %v3046, 7
        %v3048 = vsub.s32 %v3045, %v3047
        %v3049 = vrot.slane %v3041, %v3048
        %v3051 = vunpack.c.l.s4 1983009808
        %v3052 = vunpack.c.0.s8 %v3051
        %v3053 = vlaneseq
        %v3054 = vshrl.u32 %v3053, 7
        %v3055 = vsub.s32 %v3052, %v3054
        %v3056 = vrot.slane %v3042, %v3055
        %v3057 = vcombine.low %v3033, %v3049
        %v3058 = vcombine.high %v3033, %v3049
        %v3060 = vunpack.c.l.s4 1934713408
        %v3061 = vunpack.c.0.s8 %v3060
        %v3062 = vlaneseq
        %v3063 = vshrl.u32 %v3062, 7
        %v3064 = vsub.s32 %v3061, %v3063
        %v3065 = vrot.slane %v3057, %v3064
        %v3067 = vunpack.c.l.s4 1934713408
        %v3068 = vunpack.c.0.s8 %v3067
        %v3069 = vlaneseq
        %v3070 = vshrl.u32 %v3069, 7
        %v3071 = vsub.s32 %v3068, %v3070
        %v3072 = vrot.slane %v3058, %v3071
        %v3073 = vcombine.low %v3040, %v3056
        %v3074 = vcombine.high %v3040, %v3056
        %v3076 = vunpack.c.l.s4 1934713408
        %v3077 = vunpack.c.0.s8 %v3076
        %v3078 = vlaneseq
        %v3079 = vshrl.u32 %v3078, 7
        %v3080 = vsub.s32 %v3077, %v3079
        %v3081 = vrot.slane %v3073, %v3080
        %v3083 = vunpack.c.l.s4 1934713408
        %v3084 = vunpack.c.0.s8 %v3083
        %v3085 = vlaneseq
        %v3086 = vshrl.u32 %v3085, 7
        %v3087 = vsub.s32 %v3084, %v3086
        %v3088 = vrot.slane %v3074, %v3087
        %v3089 = vcombine.high %v3065, 0
        %v3090 = vcombine.high %v3072, 0
        %v3091 = vcombine.high %v3081, 0
        %v3092 = vcombine.high %v3088, 0
        %3093 = vxpose.xlu0.c.b16.start [1/8] %v2861, 128
        %3094 = vxpose.xlu0.c.b16.cont [2/8] 0, 128
        %3095 = vxpose.xlu0.c.b16.cont [3/8] 0, 128
        %3096 = vxpose.xlu0.c.b16.cont [4/8] 0, 128
        %3097 = vxpose.xlu0.c.b16.cont [5/8] 0, 128
        %3098 = vxpose.xlu0.c.b16.cont [6/8] 0, 128
        %3099 = vxpose.xlu0.c.b16.cont [7/8] 0, 128
        %3100 = vxpose.xlu0.c.b16.end [8/8] 0, 128
        %v3101 = vpop.trf.xlu0
        %v3102 = vpop.trf.xlu0
        %v3103 = vpop.trf.xlu0
        %v3104 = vpop.trf.xlu0
        %v3105 = vpop.trf.xlu0
        %v3106 = vpop.trf.xlu0
        %v3107 = vpop.trf.xlu0
        %v3108 = vpop.trf.xlu0
        %3109 = vxpose.xlu0.c.b16.start [1/8] %v2929, 128
        %3110 = vxpose.xlu0.c.b16.cont [2/8] 0, 128
        %3111 = vxpose.xlu0.c.b16.cont [3/8] 0, 128
        %3112 = vxpose.xlu0.c.b16.cont [4/8] 0, 128
        %3113 = vxpose.xlu0.c.b16.cont [5/8] 0, 128
        %3114 = vxpose.xlu0.c.b16.cont [6/8] 0, 128
        %3115 = vxpose.xlu0.c.b16.cont [7/8] 0, 128
        %3116 = vxpose.xlu0.c.b16.end [8/8] 0, 128
        %v3117 = vpop.trf.xlu0
        %v3118 = vpop.trf.xlu0
        %v3119 = vpop.trf.xlu0
        %v3120 = vpop.trf.xlu0
        %v3121 = vpop.trf.xlu0
        %v3122 = vpop.trf.xlu0
        %v3123 = vpop.trf.xlu0
        %v3124 = vpop.trf.xlu0
        %3125 = vxpose.xlu0.c.b16.start [1/8] %v2885, 128
        %3126 = vxpose.xlu0.c.b16.cont [2/8] 0, 128
        %3127 = vxpose.xlu0.c.b16.cont [3/8] 0, 128
        %3128 = vxpose.xlu0.c.b16.cont [4/8] 0, 128
        %3129 = vxpose.xlu0.c.b16.cont [5/8] 0, 128
        %3130 = vxpose.xlu0.c.b16.cont [6/8] 0, 128
        %3131 = vxpose.xlu0.c.b16.cont [7/8] 0, 128
        %3132 = vxpose.xlu0.c.b16.end [8/8] 0, 128
        %v3133 = vpop.trf.xlu0
        %v3134 = vpop.trf.xlu0
        %v3135 = vpop.trf.xlu0
        %v3136 = vpop.trf.xlu0
        %v3137 = vpop.trf.xlu0
        %v3138 = vpop.trf.xlu0
        %v3139 = vpop.trf.xlu0
        %v3140 = vpop.trf.xlu0
        %3141 = vxpose.xlu0.c.b16.start [1/8] %v2953, 128
        %3142 = vxpose.xlu0.c.b16.cont [2/8] 0, 128
        %3143 = vxpose.xlu0.c.b16.cont [3/8] 0, 128
        %3144 = vxpose.xlu0.c.b16.cont [4/8] 0, 128
        %3145 = vxpose.xlu0.c.b16.cont [5/8] 0, 128
        %3146 = vxpose.xlu0.c.b16.cont [6/8] 0, 128
        %3147 = vxpose.xlu0.c.b16.cont [7/8] 0, 128
        %3148 = vxpose.xlu0.c.b16.end [8/8] 0, 128
        %v3149 = vpop.trf.xlu0
        %v3150 = vpop.trf.xlu0
        %v3151 = vpop.trf.xlu0
        %v3152 = vpop.trf.xlu0
        %v3153 = vpop.trf.xlu0
        %v3154 = vpop.trf.xlu0
        %v3155 = vpop.trf.xlu0
        %v3156 = vpop.trf.xlu0
        %3157 = vxpose.xlu0.c.b16.start [1/8] %v2868, 128
        %3158 = vxpose.xlu0.c.b16.cont [2/8] 0, 128
        %3159 = vxpose.xlu0.c.b16.cont [3/8] 0, 128
        %3160 = vxpose.xlu0.c.b16.cont [4/8] 0, 128
        %3161 = vxpose.xlu0.c.b16.cont [5/8] 0, 128
        %3162 = vxpose.xlu0.c.b16.cont [6/8] 0, 128
        %3163 = vxpose.xlu0.c.b16.cont [7/8] 0, 128
        %3164 = vxpose.xlu0.c.b16.end [8/8] 0, 128
        %v3165 = vpop.trf.xlu0
        %v3166 = vpop.trf.xlu0
        %v3167 = vpop.trf.xlu0
        %v3168 = vpop.trf.xlu0
        %v3169 = vpop.trf.xlu0
        %v3170 = vpop.trf.xlu0
        %v3171 = vpop.trf.xlu0
        %v3172 = vpop.trf.xlu0
        %3173 = vxpose.xlu0.c.b16.start [1/8] %v2936, 128
        %3174 = vxpose.xlu0.c.b16.cont [2/8] 0, 128
        %3175 = vxpose.xlu0.c.b16.cont [3/8] 0, 128
        %3176 = vxpose.xlu0.c.b16.cont [4/8] 0, 128
        %3177 = vxpose.xlu0.c.b16.cont [5/8] 0, 128
        %3178 = vxpose.xlu0.c.b16.cont [6/8] 0, 128
        %3179 = vxpose.xlu0.c.b16.cont [7/8] 0, 128
        %3180 = vxpose.xlu0.c.b16.end [8/8] 0, 128
        %v3181 = vpop.trf.xlu0
        %v3182 = vpop.trf.xlu0
        %v3183 = vpop.trf.xlu0
        %v3184 = vpop.trf.xlu0
        %v3185 = vpop.trf.xlu0
        %v3186 = vpop.trf.xlu0
        %v3187 = vpop.trf.xlu0
        %v3188 = vpop.trf.xlu0
        %3189 = vxpose.xlu0.c.b16.start [1/8] %v2886, 128
        %3190 = vxpose.xlu0.c.b16.cont [2/8] 0, 128
        %3191 = vxpose.xlu0.c.b16.cont [3/8] 0, 128
        %3192 = vxpose.xlu0.c.b16.cont [4/8] 0, 128
        %3193 = vxpose.xlu0.c.b16.cont [5/8] 0, 128
        %3194 = vxpose.xlu0.c.b16.cont [6/8] 0, 128
        %3195 = vxpose.xlu0.c.b16.cont [7/8] 0, 128
        %3196 = vxpose.xlu0.c.b16.end [8/8] 0, 128
        %v3197 = vpop.trf.xlu0
        %v3198 = vpop.trf.xlu0
        %v3199 = vpop.trf.xlu0
        %v3200 = vpop.trf.xlu0
        %v3201 = vpop.trf.xlu0
        %v3202 = vpop.trf.xlu0
        %v3203 = vpop.trf.xlu0
        %v3204 = vpop.trf.xlu0
        %3205 = vxpose.xlu0.c.b16.start [1/8] %v2954, 128
        %3206 = vxpose.xlu0.c.b16.cont [2/8] 0, 128
        %3207 = vxpose.xlu0.c.b16.cont [3/8] 0, 128
        %3208 = vxpose.xlu0.c.b16.cont [4/8] 0, 128
        %3209 = vxpose.xlu0.c.b16.cont [5/8] 0, 128
        %3210 = vxpose.xlu0.c.b16.cont [6/8] 0, 128
        %3211 = vxpose.xlu0.c.b16.cont [7/8] 0, 128
        %3212 = vxpose.xlu0.c.b16.end [8/8] 0, 128
        %v3213 = vpop.trf.xlu0
        %v3214 = vpop.trf.xlu0
        %v3215 = vpop.trf.xlu0
        %v3216 = vpop.trf.xlu0
        %v3217 = vpop.trf.xlu0
        %v3218 = vpop.trf.xlu0
        %v3219 = vpop.trf.xlu0
        %v3220 = vpop.trf.xlu0
        %3221 = vxpose.xlu0.c.b16.start [1/8] %v2877, 128
        %3222 = vxpose.xlu0.c.b16.cont [2/8] 0, 128
        %3223 = vxpose.xlu0.c.b16.cont [3/8] 0, 128
        %3224 = vxpose.xlu0.c.b16.cont [4/8] 0, 128
        %3225 = vxpose.xlu0.c.b16.cont [5/8] 0, 128
        %3226 = vxpose.xlu0.c.b16.cont [6/8] 0, 128
        %3227 = vxpose.xlu0.c.b16.cont [7/8] 0, 128
        %3228 = vxpose.xlu0.c.b16.end [8/8] 0, 128
        %v3229 = vpop.trf.xlu0
        %v3230 = vpop.trf.xlu0
        %v3231 = vpop.trf.xlu0
        %v3232 = vpop.trf.xlu0
        %v3233 = vpop.trf.xlu0
        %v3234 = vpop.trf.xlu0
        %v3235 = vpop.trf.xlu0
        %v3236 = vpop.trf.xlu0
        %3237 = vxpose.xlu0.c.b16.start [1/8] %v2945, 128
        %3238 = vxpose.xlu0.c.b16.cont [2/8] 0, 128
        %3239 = vxpose.xlu0.c.b16.cont [3/8] 0, 128
        %3240 = vxpose.xlu0.c.b16.cont [4/8] 0, 128
        %3241 = vxpose.xlu0.c.b16.cont [5/8] 0, 128
        %3242 = vxpose.xlu0.c.b16.cont [6/8] 0, 128
        %3243 = vxpose.xlu0.c.b16.cont [7/8] 0, 128
        %3244 = vxpose.xlu0.c.b16.end [8/8] 0, 128
        %v3245 = vpop.trf.xlu0
        %v3246 = vpop.trf.xlu0
        %v3247 = vpop.trf.xlu0
        %v3248 = vpop.trf.xlu0
        %v3249 = vpop.trf.xlu0
        %v3250 = vpop.trf.xlu0
        %v3251 = vpop.trf.xlu0
        %v3252 = vpop.trf.xlu0
        %3253 = vxpose.xlu0.c.b16.start [1/8] %v2887, 128
        %3254 = vxpose.xlu0.c.b16.cont [2/8] 0, 128
        %3255 = vxpose.xlu0.c.b16.cont [3/8] 0, 128
        %3256 = vxpose.xlu0.c.b16.cont [4/8] 0, 128
        %3257 = vxpose.xlu0.c.b16.cont [5/8] 0, 128
        %3258 = vxpose.xlu0.c.b16.cont [6/8] 0, 128
        %3259 = vxpose.xlu0.c.b16.cont [7/8] 0, 128
        %3260 = vxpose.xlu0.c.b16.end [8/8] 0, 128
        %v3261 = vpop.trf.xlu0
        %v3262 = vpop.trf.xlu0
        %v3263 = vpop.trf.xlu0
        %v3264 = vpop.trf.xlu0
        %v3265 = vpop.trf.xlu0
        %v3266 = vpop.trf.xlu0
        %v3267 = vpop.trf.xlu0
        %v3268 = vpop.trf.xlu0
        %3269 = vxpose.xlu0.c.b16.start [1/8] %v2955, 128
        %3270 = vxpose.xlu0.c.b16.cont [2/8] 0, 128
        %3271 = vxpose.xlu0.c.b16.cont [3/8] 0, 128
        %3272 = vxpose.xlu0.c.b16.cont [4/8] 0, 128
        %3273 = vxpose.xlu0.c.b16.cont [5/8] 0, 128
        %3274 = vxpose.xlu0.c.b16.cont [6/8] 0, 128
        %3275 = vxpose.xlu0.c.b16.cont [7/8] 0, 128
        %3276 = vxpose.xlu0.c.b16.end [8/8] 0, 128
        %v3277 = vpop.trf.xlu0
        %v3278 = vpop.trf.xlu0
        %v3279 = vpop.trf.xlu0
        %v3280 = vpop.trf.xlu0
        %v3281 = vpop.trf.xlu0
        %v3282 = vpop.trf.xlu0
        %v3283 = vpop.trf.xlu0
        %v3284 = vpop.trf.xlu0
        %3285 = vxpose.xlu0.c.b16.start [1/8] %v2884, 128
        %3286 = vxpose.xlu0.c.b16.cont [2/8] 0, 128
        %3287 = vxpose.xlu0.c.b16.cont [3/8] 0, 128
        %3288 = vxpose.xlu0.c.b16.cont [4/8] 0, 128
        %3289 = vxpose.xlu0.c.b16.cont [5/8] 0, 128
        %3290 = vxpose.xlu0.c.b16.cont [6/8] 0, 128
        %3291 = vxpose.xlu0.c.b16.cont [7/8] 0, 128
        %3292 = vxpose.xlu0.c.b16.end [8/8] 0, 128
        %v3293 = vpop.trf.xlu0
        %v3294 = vpop.trf.xlu0
        %v3295 = vpop.trf.xlu0
        %v3296 = vpop.trf.xlu0
        %v3297 = vpop.trf.xlu0
        %v3298 = vpop.trf.xlu0
        %v3299 = vpop.trf.xlu0
        %v3300 = vpop.trf.xlu0
        %3301 = vxpose.xlu0.c.b16.start [1/8] %v2952, 128
        %3302 = vxpose.xlu0.c.b16.cont [2/8] 0, 128
        %3303 = vxpose.xlu0.c.b16.cont [3/8] 0, 128
        %3304 = vxpose.xlu0.c.b16.cont [4/8] 0, 128
        %3305 = vxpose.xlu0.c.b16.cont [5/8] 0, 128
        %3306 = vxpose.xlu0.c.b16.cont [6/8] 0, 128
        %3307 = vxpose.xlu0.c.b16.cont [7/8] 0, 128
        %3308 = vxpose.xlu0.c.b16.end [8/8] 0, 128
        %v3309 = vpop.trf.xlu0
        %v3310 = vpop.trf.xlu0
        %v3311 = vpop.trf.xlu0
        %v3312 = vpop.trf.xlu0
        %v3313 = vpop.trf.xlu0
        %v3314 = vpop.trf.xlu0
        %v3315 = vpop.trf.xlu0
        %v3316 = vpop.trf.xlu0
        %3317 = vxpose.xlu0.c.b16.start [1/8] %v2888, 128
        %3318 = vxpose.xlu0.c.b16.cont [2/8] 0, 128
        %3319 = vxpose.xlu0.c.b16.cont [3/8] 0, 128
        %3320 = vxpose.xlu0.c.b16.cont [4/8] 0, 128
        %3321 = vxpose.xlu0.c.b16.cont [5/8] 0, 128
        %3322 = vxpose.xlu0.c.b16.cont [6/8] 0, 128
        %3323 = vxpose.xlu0.c.b16.cont [7/8] 0, 128
        %3324 = vxpose.xlu0.c.b16.end [8/8] 0, 128
        %v3325 = vpop.trf.xlu0
        %v3326 = vpop.trf.xlu0
        %v3327 = vpop.trf.xlu0
        %v3328 = vpop.trf.xlu0
        %v3329 = vpop.trf.xlu0
        %v3330 = vpop.trf.xlu0
        %v3331 = vpop.trf.xlu0
        %v3332 = vpop.trf.xlu0
        %3333 = vxpose.xlu0.c.b16.start [1/8] %v2956, 128
        %3334 = vxpose.xlu0.c.b16.cont [2/8] 0, 128
        %3335 = vxpose.xlu0.c.b16.cont [3/8] 0, 128
        %3336 = vxpose.xlu0.c.b16.cont [4/8] 0, 128
        %3337 = vxpose.xlu0.c.b16.cont [5/8] 0, 128
        %3338 = vxpose.xlu0.c.b16.cont [6/8] 0, 128
        %3339 = vxpose.xlu0.c.b16.cont [7/8] 0, 128
        %3340 = vxpose.xlu0.c.b16.end [8/8] 0, 128
        %v3341 = vpop.trf.xlu0
        %v3342 = vpop.trf.xlu0
        %v3343 = vpop.trf.xlu0
        %v3344 = vpop.trf.xlu0
        %v3345 = vpop.trf.xlu0
        %v3346 = vpop.trf.xlu0
        %v3347 = vpop.trf.xlu0
        %v3348 = vpop.trf.xlu0
        %3349 = vxpose.xlu0.c.b16.start [1/8] %v2997, 128
        %3350 = vxpose.xlu0.c.b16.cont [2/8] 0, 128
        %3351 = vxpose.xlu0.c.b16.cont [3/8] 0, 128
        %3352 = vxpose.xlu0.c.b16.cont [4/8] 0, 128
        %3353 = vxpose.xlu0.c.b16.cont [5/8] 0, 128
        %3354 = vxpose.xlu0.c.b16.cont [6/8] 0, 128
        %3355 = vxpose.xlu0.c.b16.cont [7/8] 0, 128
        %3356 = vxpose.xlu0.c.b16.end [8/8] 0, 128
        %v3357 = vpop.trf.xlu0
        %v3358 = vpop.trf.xlu0
        %v3359 = vpop.trf.xlu0
        %v3360 = vpop.trf.xlu0
        %v3361 = vpop.trf.xlu0
        %v3362 = vpop.trf.xlu0
        %v3363 = vpop.trf.xlu0
        %v3364 = vpop.trf.xlu0
        %3365 = vxpose.xlu0.c.b16.start [1/8] %v3065, 128
        %3366 = vxpose.xlu0.c.b16.cont [2/8] 0, 128
        %3367 = vxpose.xlu0.c.b16.cont [3/8] 0, 128
        %3368 = vxpose.xlu0.c.b16.cont [4/8] 0, 128
        %3369 = vxpose.xlu0.c.b16.cont [5/8] 0, 128
        %3370 = vxpose.xlu0.c.b16.cont [6/8] 0, 128
        %3371 = vxpose.xlu0.c.b16.cont [7/8] 0, 128
        %3372 = vxpose.xlu0.c.b16.end [8/8] 0, 128
        %v3373 = vpop.trf.xlu0
        %v3374 = vpop.trf.xlu0
        %v3375 = vpop.trf.xlu0
        %v3376 = vpop.trf.xlu0
        %v3377 = vpop.trf.xlu0
        %v3378 = vpop.trf.xlu0
        %v3379 = vpop.trf.xlu0
        %v3380 = vpop.trf.xlu0
        %3381 = vxpose.xlu0.c.b16.start [1/8] %v3021, 128
        %3382 = vxpose.xlu0.c.b16.cont [2/8] 0, 128
        %3383 = vxpose.xlu0.c.b16.cont [3/8] 0, 128
        %3384 = vxpose.xlu0.c.b16.cont [4/8] 0, 128
        %3385 = vxpose.xlu0.c.b16.cont [5/8] 0, 128
        %3386 = vxpose.xlu0.c.b16.cont [6/8] 0, 128
        %3387 = vxpose.xlu0.c.b16.cont [7/8] 0, 128
        %3388 = vxpose.xlu0.c.b16.end [8/8] 0, 128
        %v3389 = vpop.trf.xlu0
        %v3390 = vpop.trf.xlu0
        %v3391 = vpop.trf.xlu0
        %v3392 = vpop.trf.xlu0
        %v3393 = vpop.trf.xlu0
        %v3394 = vpop.trf.xlu0
        %v3395 = vpop.trf.xlu0
        %v3396 = vpop.trf.xlu0
        %3397 = vxpose.xlu0.c.b16.start [1/8] %v3089, 128
        %3398 = vxpose.xlu0.c.b16.cont [2/8] 0, 128
        %3399 = vxpose.xlu0.c.b16.cont [3/8] 0, 128
        %3400 = vxpose.xlu0.c.b16.cont [4/8] 0, 128
        %3401 = vxpose.xlu0.c.b16.cont [5/8] 0, 128
        %3402 = vxpose.xlu0.c.b16.cont [6/8] 0, 128
        %3403 = vxpose.xlu0.c.b16.cont [7/8] 0, 128
        %3404 = vxpose.xlu0.c.b16.end [8/8] 0, 128
        %v3405 = vpop.trf.xlu0
        %v3406 = vpop.trf.xlu0
        %v3407 = vpop.trf.xlu0
        %v3408 = vpop.trf.xlu0
        %v3409 = vpop.trf.xlu0
        %v3410 = vpop.trf.xlu0
        %v3411 = vpop.trf.xlu0
        %v3412 = vpop.trf.xlu0
        %3413 = vxpose.xlu0.c.b16.start [1/8] %v3004, 128
        %3414 = vxpose.xlu0.c.b16.cont [2/8] 0, 128
        %3415 = vxpose.xlu0.c.b16.cont [3/8] 0, 128
        %3416 = vxpose.xlu0.c.b16.cont [4/8] 0, 128
        %3417 = vxpose.xlu0.c.b16.cont [5/8] 0, 128
        %3418 = vxpose.xlu0.c.b16.cont [6/8] 0, 128
        %3419 = vxpose.xlu0.c.b16.cont [7/8] 0, 128
        %3420 = vxpose.xlu0.c.b16.end [8/8] 0, 128
        %v3421 = vpop.trf.xlu0
        %v3422 = vpop.trf.xlu0
        %v3423 = vpop.trf.xlu0
        %v3424 = vpop.trf.xlu0
        %v3425 = vpop.trf.xlu0
        %v3426 = vpop.trf.xlu0
        %v3427 = vpop.trf.xlu0
        %v3428 = vpop.trf.xlu0
        %3429 = vxpose.xlu0.c.b16.start [1/8] %v3072, 128
        %3430 = vxpose.xlu0.c.b16.cont [2/8] 0, 128
        %3431 = vxpose.xlu0.c.b16.cont [3/8] 0, 128
        %3432 = vxpose.xlu0.c.b16.cont [4/8] 0, 128
        %3433 = vxpose.xlu0.c.b16.cont [5/8] 0, 128
        %3434 = vxpose.xlu0.c.b16.cont [6/8] 0, 128
        %3435 = vxpose.xlu0.c.b16.cont [7/8] 0, 128
        %3436 = vxpose.xlu0.c.b16.end [8/8] 0, 128
        %v3437 = vpop.trf.xlu0
        %v3438 = vpop.trf.xlu0
        %v3439 = vpop.trf.xlu0
        %v3440 = vpop.trf.xlu0
        %v3441 = vpop.trf.xlu0
        %v3442 = vpop.trf.xlu0
        %v3443 = vpop.trf.xlu0
        %v3444 = vpop.trf.xlu0
        %3445 = vxpose.xlu0.c.b16.start [1/8] %v3022, 128
        %3446 = vxpose.xlu0.c.b16.cont [2/8] 0, 128
        %3447 = vxpose.xlu0.c.b16.cont [3/8] 0, 128
        %3448 = vxpose.xlu0.c.b16.cont [4/8] 0, 128
        %3449 = vxpose.xlu0.c.b16.cont [5/8] 0, 128
        %3450 = vxpose.xlu0.c.b16.cont [6/8] 0, 128
        %3451 = vxpose.xlu0.c.b16.cont [7/8] 0, 128
        %3452 = vxpose.xlu0.c.b16.end [8/8] 0, 128
        %v3453 = vpop.trf.xlu0
        %v3454 = vpop.trf.xlu0
        %v3455 = vpop.trf.xlu0
        %v3456 = vpop.trf.xlu0
        %v3457 = vpop.trf.xlu0
        %v3458 = vpop.trf.xlu0
        %v3459 = vpop.trf.xlu0
        %v3460 = vpop.trf.xlu0
        %3461 = vxpose.xlu0.c.b16.start [1/8] %v3090, 128
        %3462 = vxpose.xlu0.c.b16.cont [2/8] 0, 128
        %3463 = vxpose.xlu0.c.b16.cont [3/8] 0, 128
        %3464 = vxpose.xlu0.c.b16.cont [4/8] 0, 128
        %3465 = vxpose.xlu0.c.b16.cont [5/8] 0, 128
        %3466 = vxpose.xlu0.c.b16.cont [6/8] 0, 128
        %3467 = vxpose.xlu0.c.b16.cont [7/8] 0, 128
        %3468 = vxpose.xlu0.c.b16.end [8/8] 0, 128
        %v3469 = vpop.trf.xlu0
        %v3470 = vpop.trf.xlu0
        %v3471 = vpop.trf.xlu0
        %v3472 = vpop.trf.xlu0
        %v3473 = vpop.trf.xlu0
        %v3474 = vpop.trf.xlu0
        %v3475 = vpop.trf.xlu0
        %v3476 = vpop.trf.xlu0
        %3477 = vxpose.xlu0.c.b16.start [1/8] %v3013, 128
        %3478 = vxpose.xlu0.c.b16.cont [2/8] 0, 128
        %3479 = vxpose.xlu0.c.b16.cont [3/8] 0, 128
        %3480 = vxpose.xlu0.c.b16.cont [4/8] 0, 128
        %3481 = vxpose.xlu0.c.b16.cont [5/8] 0, 128
        %3482 = vxpose.xlu0.c.b16.cont [6/8] 0, 128
        %3483 = vxpose.xlu0.c.b16.cont [7/8] 0, 128
        %3484 = vxpose.xlu0.c.b16.end [8/8] 0, 128
        %v3485 = vpop.trf.xlu0
        %v3486 = vpop.trf.xlu0
        %v3487 = vpop.trf.xlu0
        %v3488 = vpop.trf.xlu0
        %v3489 = vpop.trf.xlu0
        %v3490 = vpop.trf.xlu0
        %v3491 = vpop.trf.xlu0
        %v3492 = vpop.trf.xlu0
        %3493 = vxpose.xlu0.c.b16.start [1/8] %v3081, 128
        %3494 = vxpose.xlu0.c.b16.cont [2/8] 0, 128
        %3495 = vxpose.xlu0.c.b16.cont [3/8] 0, 128
        %3496 = vxpose.xlu0.c.b16.cont [4/8] 0, 128
        %3497 = vxpose.xlu0.c.b16.cont [5/8] 0, 128
        %3498 = vxpose.xlu0.c.b16.cont [6/8] 0, 128
        %3499 = vxpose.xlu0.c.b16.cont [7/8] 0, 128
        %3500 = vxpose.xlu0.c.b16.end [8/8] 0, 128
        %v3501 = vpop.trf.xlu0
        %v3502 = vpop.trf.xlu0
        %v3503 = vpop.trf.xlu0
        %v3504 = vpop.trf.xlu0
        %v3505 = vpop.trf.xlu0
        %v3506 = vpop.trf.xlu0
        %v3507 = vpop.trf.xlu0
        %v3508 = vpop.trf.xlu0
        %3509 = vxpose.xlu0.c.b16.start [1/8] %v3023, 128
        %3510 = vxpose.xlu0.c.b16.cont [2/8] 0, 128
        %3511 = vxpose.xlu0.c.b16.cont [3/8] 0, 128
        %3512 = vxpose.xlu0.c.b16.cont [4/8] 0, 128
        %3513 = vxpose.xlu0.c.b16.cont [5/8] 0, 128
        %3514 = vxpose.xlu0.c.b16.cont [6/8] 0, 128
        %3515 = vxpose.xlu0.c.b16.cont [7/8] 0, 128
        %3516 = vxpose.xlu0.c.b16.end [8/8] 0, 128
        %v3517 = vpop.trf.xlu0
        %v3518 = vpop.trf.xlu0
        %v3519 = vpop.trf.xlu0
        %v3520 = vpop.trf.xlu0
        %v3521 = vpop.trf.xlu0
        %v3522 = vpop.trf.xlu0
        %v3523 = vpop.trf.xlu0
        %v3524 = vpop.trf.xlu0
        %3525 = vxpose.xlu0.c.b16.start [1/8] %v3091, 128
        %3526 = vxpose.xlu0.c.b16.cont [2/8] 0, 128
        %3527 = vxpose.xlu0.c.b16.cont [3/8] 0, 128
        %3528 = vxpose.xlu0.c.b16.cont [4/8] 0, 128
        %3529 = vxpose.xlu0.c.b16.cont [5/8] 0, 128
        %3530 = vxpose.xlu0.c.b16.cont [6/8] 0, 128
        %3531 = vxpose.xlu0.c.b16.cont [7/8] 0, 128
        %3532 = vxpose.xlu0.c.b16.end [8/8] 0, 128
        %v3533 = vpop.trf.xlu0
        %v3534 = vpop.trf.xlu0
        %v3535 = vpop.trf.xlu0
        %v3536 = vpop.trf.xlu0
        %v3537 = vpop.trf.xlu0
        %v3538 = vpop.trf.xlu0
        %v3539 = vpop.trf.xlu0
        %v3540 = vpop.trf.xlu0
        %3541 = vxpose.xlu0.c.b16.start [1/8] %v3020, 128
        %3542 = vxpose.xlu0.c.b16.cont [2/8] 0, 128
        %3543 = vxpose.xlu0.c.b16.cont [3/8] 0, 128
        %3544 = vxpose.xlu0.c.b16.cont [4/8] 0, 128
        %3545 = vxpose.xlu0.c.b16.cont [5/8] 0, 128
        %3546 = vxpose.xlu0.c.b16.cont [6/8] 0, 128
        %3547 = vxpose.xlu0.c.b16.cont [7/8] 0, 128
        %3548 = vxpose.xlu0.c.b16.end [8/8] 0, 128
        %v3549 = vpop.trf.xlu0
        %v3550 = vpop.trf.xlu0
        %v3551 = vpop.trf.xlu0
        %v3552 = vpop.trf.xlu0
        %v3553 = vpop.trf.xlu0
        %v3554 = vpop.trf.xlu0
        %v3555 = vpop.trf.xlu0
        %v3556 = vpop.trf.xlu0
        %3557 = vxpose.xlu0.c.b16.start [1/8] %v3088, 128
        %3558 = vxpose.xlu0.c.b16.cont [2/8] 0, 128
        %3559 = vxpose.xlu0.c.b16.cont [3/8] 0, 128
        %3560 = vxpose.xlu0.c.b16.cont [4/8] 0, 128
        %3561 = vxpose.xlu0.c.b16.cont [5/8] 0, 128
        %3562 = vxpose.xlu0.c.b16.cont [6/8] 0, 128
        %3563 = vxpose.xlu0.c.b16.cont [7/8] 0, 128
        %3564 = vxpose.xlu0.c.b16.end [8/8] 0, 128
        %v3565 = vpop.trf.xlu0
        %v3566 = vpop.trf.xlu0
        %v3567 = vpop.trf.xlu0
        %v3568 = vpop.trf.xlu0
        %v3569 = vpop.trf.xlu0
        %v3570 = vpop.trf.xlu0
        %v3571 = vpop.trf.xlu0
        %v3572 = vpop.trf.xlu0
        %3573 = vxpose.xlu0.c.b16.start [1/8] %v3024, 128
        %3574 = vxpose.xlu0.c.b16.cont [2/8] 0, 128
        %3575 = vxpose.xlu0.c.b16.cont [3/8] 0, 128
        %3576 = vxpose.xlu0.c.b16.cont [4/8] 0, 128
        %3577 = vxpose.xlu0.c.b16.cont [5/8] 0, 128
        %3578 = vxpose.xlu0.c.b16.cont [6/8] 0, 128
        %3579 = vxpose.xlu0.c.b16.cont [7/8] 0, 128
        %3580 = vxpose.xlu0.c.b16.end [8/8] 0, 128
        %v3581 = vpop.trf.xlu0
        %v3582 = vpop.trf.xlu0
        %v3583 = vpop.trf.xlu0
        %v3584 = vpop.trf.xlu0
        %v3585 = vpop.trf.xlu0
        %v3586 = vpop.trf.xlu0
        %v3587 = vpop.trf.xlu0
        %v3588 = vpop.trf.xlu0
        %3589 = vxpose.xlu0.c.b16.start [1/8] %v3092, 128
        %3590 = vxpose.xlu0.c.b16.cont [2/8] 0, 128
        %3591 = vxpose.xlu0.c.b16.cont [3/8] 0, 128
        %3592 = vxpose.xlu0.c.b16.cont [4/8] 0, 128
        %3593 = vxpose.xlu0.c.b16.cont [5/8] 0, 128
        %3594 = vxpose.xlu0.c.b16.cont [6/8] 0, 128
        %3595 = vxpose.xlu0.c.b16.cont [7/8] 0, 128
        %3596 = vxpose.xlu0.c.b16.end [8/8] 0, 128
        %v3597 = vpop.trf.xlu0
        %v3598 = vpop.trf.xlu0
        %v3599 = vpop.trf.xlu0
        %v3600 = vpop.trf.xlu0
        %v3601 = vpop.trf.xlu0
        %v3602 = vpop.trf.xlu0
        %v3603 = vpop.trf.xlu0
        %v3604 = vpop.trf.xlu0
        %v3605 = vcombine.low %v3101, %v3165
        %v3607 = vunpack.c.l.s4 1983009808
        %v3608 = vunpack.c.0.s8 %v3607
        %v3609 = vlaneseq
        %v3610 = vshrl.u32 %v3609, 7
        %v3611 = vsub.s32 %v3608, %v3610
        %v3612 = vrot.slane %v3605, %v3611
        %v3613 = vcombine.low %v3133, %v3197
        %v3615 = vunpack.c.l.s4 1983009808
        %v3616 = vunpack.c.0.s8 %v3615
        %v3617 = vlaneseq
        %v3618 = vshrl.u32 %v3617, 7
        %v3619 = vsub.s32 %v3616, %v3618
        %v3620 = vrot.slane %v3613, %v3619
        %v3621 = vcombine.low %v3229, %v3293
        %v3623 = vunpack.c.l.s4 1983009808
        %v3624 = vunpack.c.0.s8 %v3623
        %v3625 = vlaneseq
        %v3626 = vshrl.u32 %v3625, 7
        %v3627 = vsub.s32 %v3624, %v3626
        %v3628 = vrot.slane %v3621, %v3627
        %v3629 = vcombine.low %v3261, %v3325
        %v3631 = vunpack.c.l.s4 1983009808
        %v3632 = vunpack.c.0.s8 %v3631
        %v3633 = vlaneseq
        %v3634 = vshrl.u32 %v3633, 7
        %v3635 = vsub.s32 %v3632, %v3634
        %v3636 = vrot.slane %v3629, %v3635
        %v3637 = vcombine.low %v3612, %v3620
        %v3639 = vunpack.c.l.s4 1934713408
        %v3640 = vunpack.c.0.s8 %v3639
        %v3641 = vlaneseq
        %v3642 = vshrl.u32 %v3641, 7
        %v3643 = vsub.s32 %v3640, %v3642
        %v3644 = vrot.slane %v3637, %v3643
        %v3645 = vcombine.low %v3628, %v3636
        %v3647 = vunpack.c.l.s4 1934713408
        %v3648 = vunpack.c.0.s8 %v3647
        %v3649 = vlaneseq
        %v3650 = vshrl.u32 %v3649, 7
        %v3651 = vsub.s32 %v3648, %v3650
        %v3652 = vrot.slane %v3645, %v3651
        %v3653 = vcombine.low %v3644, %v3652
        %v3654 = vcombine.high %v3644, %v3652
        %v3655 = vcombine.low %v3117, %v3181
        %v3657 = vunpack.c.l.s4 1983009808
        %v3658 = vunpack.c.0.s8 %v3657
        %v3659 = vlaneseq
        %v3660 = vshrl.u32 %v3659, 7
        %v3661 = vsub.s32 %v3658, %v3660
        %v3662 = vrot.slane %v3655, %v3661
        %v3663 = vcombine.low %v3149, %v3213
        %v3665 = vunpack.c.l.s4 1983009808
        %v3666 = vunpack.c.0.s8 %v3665
        %v3667 = vlaneseq
        %v3668 = vshrl.u32 %v3667, 7
        %v3669 = vsub.s32 %v3666, %v3668
        %v3670 = vrot.slane %v3663, %v3669
        %v3671 = vcombine.low %v3245, %v3309
        %v3673 = vunpack.c.l.s4 1983009808
        %v3674 = vunpack.c.0.s8 %v3673
        %v3675 = vlaneseq
        %v3676 = vshrl.u32 %v3675, 7
        %v3677 = vsub.s32 %v3674, %v3676
        %v3678 = vrot.slane %v3671, %v3677
        %v3679 = vcombine.low %v3277, %v3341
        %v3681 = vunpack.c.l.s4 1983009808
        %v3682 = vunpack.c.0.s8 %v3681
        %v3683 = vlaneseq
        %v3684 = vshrl.u32 %v3683, 7
        %v3685 = vsub.s32 %v3682, %v3684
        %v3686 = vrot.slane %v3679, %v3685
        %v3687 = vcombine.low %v3662, %v3670
        %v3689 = vunpack.c.l.s4 1934713408
        %v3690 = vunpack.c.0.s8 %v3689
        %v3691 = vlaneseq
        %v3692 = vshrl.u32 %v3691, 7
        %v3693 = vsub.s32 %v3690, %v3692
        %v3694 = vrot.slane %v3687, %v3693
        %v3695 = vcombine.low %v3678, %v3686
        %v3697 = vunpack.c.l.s4 1934713408
        %v3698 = vunpack.c.0.s8 %v3697
        %v3699 = vlaneseq
        %v3700 = vshrl.u32 %v3699, 7
        %v3701 = vsub.s32 %v3698, %v3700
        %v3702 = vrot.slane %v3695, %v3701
        %v3703 = vcombine.low %v3694, %v3702
        %v3704 = vcombine.high %v3694, %v3702
        %v3705 = vcombine.low %v3357, %v3421
        %v3707 = vunpack.c.l.s4 1983009808
        %v3708 = vunpack.c.0.s8 %v3707
        %v3709 = vlaneseq
        %v3710 = vshrl.u32 %v3709, 7
        %v3711 = vsub.s32 %v3708, %v3710
        %v3712 = vrot.slane %v3705, %v3711
        %v3713 = vcombine.low %v3389, %v3453
        %v3715 = vunpack.c.l.s4 1983009808
        %v3716 = vunpack.c.0.s8 %v3715
        %v3717 = vlaneseq
        %v3718 = vshrl.u32 %v3717, 7
        %v3719 = vsub.s32 %v3716, %v3718
        %v3720 = vrot.slane %v3713, %v3719
        %v3721 = vcombine.low %v3485, %v3549
        %v3723 = vunpack.c.l.s4 1983009808
        %v3724 = vunpack.c.0.s8 %v3723
        %v3725 = vlaneseq
        %v3726 = vshrl.u32 %v3725, 7
        %v3727 = vsub.s32 %v3724, %v3726
        %v3728 = vrot.slane %v3721, %v3727
        %v3729 = vcombine.low %v3517, %v3581
        %v3731 = vunpack.c.l.s4 1983009808
        %v3732 = vunpack.c.0.s8 %v3731
        %v3733 = vlaneseq
        %v3734 = vshrl.u32 %v3733, 7
        %v3735 = vsub.s32 %v3732, %v3734
        %v3736 = vrot.slane %v3729, %v3735
        %v3737 = vcombine.low %v3712, %v3720
        %v3739 = vunpack.c.l.s4 1934713408
        %v3740 = vunpack.c.0.s8 %v3739
        %v3741 = vlaneseq
        %v3742 = vshrl.u32 %v3741, 7
        %v3743 = vsub.s32 %v3740, %v3742
        %v3744 = vrot.slane %v3737, %v3743
        %v3745 = vcombine.low %v3728, %v3736
        %v3747 = vunpack.c.l.s4 1934713408
        %v3748 = vunpack.c.0.s8 %v3747
        %v3749 = vlaneseq
        %v3750 = vshrl.u32 %v3749, 7
        %v3751 = vsub.s32 %v3748, %v3750
        %v3752 = vrot.slane %v3745, %v3751
        %v3753 = vcombine.low %v3744, %v3752
        %v3754 = vcombine.high %v3744, %v3752
        %v3755 = vcombine.low %v3373, %v3437
        %v3757 = vunpack.c.l.s4 1983009808
        %v3758 = vunpack.c.0.s8 %v3757
        %v3759 = vlaneseq
        %v3760 = vshrl.u32 %v3759, 7
        %v3761 = vsub.s32 %v3758, %v3760
        %v3762 = vrot.slane %v3755, %v3761
        %v3763 = vcombine.low %v3405, %v3469
        %v3765 = vunpack.c.l.s4 1983009808
        %v3766 = vunpack.c.0.s8 %v3765
        %v3767 = vlaneseq
        %v3768 = vshrl.u32 %v3767, 7
        %v3769 = vsub.s32 %v3766, %v3768
        %v3770 = vrot.slane %v3763, %v3769
        %v3771 = vcombine.low %v3501, %v3565
        %v3773 = vunpack.c.l.s4 1983009808
        %v3774 = vunpack.c.0.s8 %v3773
        %v3775 = vlaneseq
        %v3776 = vshrl.u32 %v3775, 7
        %v3777 = vsub.s32 %v3774, %v3776
        %v3778 = vrot.slane %v3771, %v3777
        %v3779 = vcombine.low %v3533, %v3597
        %v3781 = vunpack.c.l.s4 1983009808
        %v3782 = vunpack.c.0.s8 %v3781
        %v3783 = vlaneseq
        %v3784 = vshrl.u32 %v3783, 7
        %v3785 = vsub.s32 %v3782, %v3784
        %v3786 = vrot.slane %v3779, %v3785
        %v3787 = vcombine.low %v3762, %v3770
        %v3789 = vunpack.c.l.s4 1934713408
        %v3790 = vunpack.c.0.s8 %v3789
        %v3791 = vlaneseq
        %v3792 = vshrl.u32 %v3791, 7
        %v3793 = vsub.s32 %v3790, %v3792
        %v3794 = vrot.slane %v3787, %v3793
        %v3795 = vcombine.low %v3778, %v3786
        %v3797 = vunpack.c.l.s4 1934713408
        %v3798 = vunpack.c.0.s8 %v3797
        %v3799 = vlaneseq
        %v3800 = vshrl.u32 %v3799, 7
        %v3801 = vsub.s32 %v3798, %v3800
        %v3802 = vrot.slane %v3795, %v3801
        %v3803 = vcombine.low %v3794, %v3802
        %v3804 = vcombine.high %v3794, %v3802
        %v3807 = vpack.i.b16 %v3703, %v3653
        %v3808 = vshrl.u32 %v3653, 16
        %v3809 = vshrl.u32 %v3703, 16
        %v3810 = vpack.i.b16 %v3809, %v3808
        %v3813 = vpack.i.b16 %v3704, %v3654
        %v3814 = vshrl.u32 %v3654, 16
        %v3815 = vshrl.u32 %v3704, 16
        %v3816 = vpack.i.b16 %v3815, %v3814
        %v3819 = vpack.i.b16 %v3803, %v3753
        %v3820 = vshrl.u32 %v3753, 16
        %v3821 = vshrl.u32 %v3803, 16
        %v3822 = vpack.i.b16 %v3821, %v3820
        %v3825 = vpack.i.b16 %v3804, %v3754
        %v3826 = vshrl.u32 %v3754, 16
        %v3827 = vshrl.u32 %v3804, 16
        %v3828 = vpack.i.b16 %v3827, %v3826
        %v3830 = vsel %vm2572, %v3807, 0
        %v3833 = vsel %vm2572, %v3819, 0
        %v3836 = vsel %vm2572, %v2617, 0
        %3838 = vmatprep.subr.bf16.mxu0 0
        %3839 = vmatpush1.bf16.xpose.msra.mxu0 %v3836
        %3840 = vmatprep.subr.bf16.mxu0 0
        %3841 = vmatpush1.bf16.xpose.msra.mxu0 0
        %3842 = vmatprep.subr.bf16.mxu0 0
        %3843 = vmatpush1.bf16.xpose.msra.mxu0 0
        %3844 = vmatprep.subr.bf16.mxu0 0
        %3845 = vmatpush1.bf16.xpose.msra.mxu0 0
        %3846 = vmatprep.subr.bf16.mxu0 0
        %3847 = vmatpush1.bf16.xpose.msra.mxu0 0
        %3848 = vmatprep.subr.bf16.mxu0 0
        %3849 = vmatpush1.bf16.xpose.msra.mxu0 0
        %3850 = vmatprep.subr.bf16.mxu0 0
        %3851 = vmatpush1.bf16.xpose.msra.mxu0 0
        %3852 = vmatprep.subr.bf16.mxu0 0
        %3853 = vmatpush1.bf16.xpose.msra.mxu0 0
        %3854 = vmatprep.subr.bf16.mxu0 0
        %3855 = vmatpush1.bf16.xpose.msra.mxu0 0
        %3856 = vmatprep.subr.bf16.mxu0 0
        %3857 = vmatpush1.bf16.xpose.msra.mxu0 0
        %3858 = vmatprep.subr.bf16.mxu0 0
        %3859 = vmatpush1.bf16.xpose.msra.mxu0 0
        %3860 = vmatprep.subr.bf16.mxu0 0
        %3861 = vmatpush1.bf16.xpose.msra.mxu0 0
        %3862 = vmatprep.subr.bf16.mxu0 0
        %3863 = vmatpush1.bf16.xpose.msra.mxu0 0
        %3864 = vmatprep.subr.bf16.mxu0 0
        %3865 = vmatpush1.bf16.xpose.msra.mxu0 0
        %3866 = vmatprep.subr.bf16.mxu0 0
        %3867 = vmatpush1.bf16.xpose.msra.mxu0 0
        %3868 = vmatprep.subr.bf16.mxu0 0
        %3869 = vmatpush1.bf16.xpose.msra.mxu0 0
        %3870 = vmatprep.mubr.bf16.mxu0 0
        %3871 = vmatmul.mubr.bf16.gmra.mrb[0].mxu0 %v3830
        %v3872 = vpop.f32.mrb[0].mxu0
        %v3873 = vadd.f32 0.0, %v3872
        %v3874 = vpop.f32.mrb[0].mxu0
        %v3875 = vpop.f32.mrb[0].mxu0
        %v3876 = vadd.f32 0.0, %v3875
        %v3877 = vpop.f32.mrb[0].mxu0
        %3878 = vmatprep.mubr.bf16.mxu0 0
        %3879 = vmatmul.mubr.bf16.gmra.mrb[0].mxu0 %v3833
        %v3880 = vpop.f32.mrb[0].mxu0
        %v3881 = vadd.f32 0.0, %v3880
        %v3882 = vpop.f32.mrb[0].mxu0
        %v3883 = vpop.f32.mrb[0].mxu0
        %v3884 = vadd.f32 0.0, %v3883
        %v3885 = vpop.f32.mrb[0].mxu0
        %3886 = vdwg.mxu0
        %v3888 = vsel %vm2572, %v3810, 0
        %v3891 = vsel %vm2572, %v3822, 0
        %v3894 = vsel %vm2572, %v2618, 0
        %3896 = vmatprep.subr.bf16.mxu0 0
        %3897 = vmatpush1.bf16.xpose.msra.mxu0 %v3894
        %3898 = vmatprep.subr.bf16.mxu0 0
        %3899 = vmatpush1.bf16.xpose.msra.mxu0 0
        %3900 = vmatprep.subr.bf16.mxu0 0
        %3901 = vmatpush1.bf16.xpose.msra.mxu0 0
        %3902 = vmatprep.subr.bf16.mxu0 0
        %3903 = vmatpush1.bf16.xpose.msra.mxu0 0
        %3904 = vmatprep.subr.bf16.mxu0 0
        %3905 = vmatpush1.bf16.xpose.msra.mxu0 0
        %3906 = vmatprep.subr.bf16.mxu0 0
        %3907 = vmatpush1.bf16.xpose.msra.mxu0 0
        %3908 = vmatprep.subr.bf16.mxu0 0
        %3909 = vmatpush1.bf16.xpose.msra.mxu0 0
        %3910 = vmatprep.subr.bf16.mxu0 0
        %3911 = vmatpush1.bf16.xpose.msra.mxu0 0
        %3912 = vmatprep.subr.bf16.mxu0 0
        %3913 = vmatpush1.bf16.xpose.msra.mxu0 0
        %3914 = vmatprep.subr.bf16.mxu0 0
        %3915 = vmatpush1.bf16.xpose.msra.mxu0 0
        %3916 = vmatprep.subr.bf16.mxu0 0
        %3917 = vmatpush1.bf16.xpose.msra.mxu0 0
        %3918 = vmatprep.subr.bf16.mxu0 0
        %3919 = vmatpush1.bf16.xpose.msra.mxu0 0
        %3920 = vmatprep.subr.bf16.mxu0 0
        %3921 = vmatpush1.bf16.xpose.msra.mxu0 0
        %3922 = vmatprep.subr.bf16.mxu0 0
        %3923 = vmatpush1.bf16.xpose.msra.mxu0 0
        %3924 = vmatprep.subr.bf16.mxu0 0
        %3925 = vmatpush1.bf16.xpose.msra.mxu0 0
        %3926 = vmatprep.subr.bf16.mxu0 0
        %3927 = vmatpush1.bf16.xpose.msra.mxu0 0
        %3928 = vmatprep.mubr.bf16.mxu0 0
        %3929 = vmatmul.mubr.bf16.gmra.mrb[0].mxu0 %v3888
        %v3930 = vpop.f32.mrb[0].mxu0
        %v3931 = vadd.f32 0.0, %v3930
        %v3932 = vpop.f32.mrb[0].mxu0
        %v3933 = vpop.f32.mrb[0].mxu0
        %v3934 = vadd.f32 0.0, %v3933
        %v3935 = vpop.f32.mrb[0].mxu0
        %3936 = vmatprep.mubr.bf16.mxu0 0
        %3937 = vmatmul.mubr.bf16.gmra.mrb[0].mxu0 %v3891
        %v3938 = vpop.f32.mrb[0].mxu0
        %v3939 = vadd.f32 0.0, %v3938
        %v3940 = vpop.f32.mrb[0].mxu0
        %v3941 = vpop.f32.mrb[0].mxu0
        %v3942 = vadd.f32 0.0, %v3941
        %v3943 = vpop.f32.mrb[0].mxu0
        %3944 = vdwg.mxu0
        %v3946 = vsel %vm2572, %v3813, 0
        %v3949 = vsel %vm2572, %v3825, 0
        %v3952 = vsel %vm2572, %v2619, 0
        %3954 = vmatprep.subr.bf16.mxu0 0
        %3955 = vmatpush1.bf16.xpose.msra.mxu0 %v3952
        %3956 = vmatprep.subr.bf16.mxu0 0
        %3957 = vmatpush1.bf16.xpose.msra.mxu0 0
        %3958 = vmatprep.subr.bf16.mxu0 0
        %3959 = vmatpush1.bf16.xpose.msra.mxu0 0
        %3960 = vmatprep.subr.bf16.mxu0 0
        %3961 = vmatpush1.bf16.xpose.msra.mxu0 0
        %3962 = vmatprep.subr.bf16.mxu0 0
        %3963 = vmatpush1.bf16.xpose.msra.mxu0 0
        %3964 = vmatprep.subr.bf16.mxu0 0
        %3965 = vmatpush1.bf16.xpose.msra.mxu0 0
        %3966 = vmatprep.subr.bf16.mxu0 0
        %3967 = vmatpush1.bf16.xpose.msra.mxu0 0
        %3968 = vmatprep.subr.bf16.mxu0 0
        %3969 = vmatpush1.bf16.xpose.msra.mxu0 0
        %3970 = vmatprep.subr.bf16.mxu0 0
        %3971 = vmatpush1.bf16.xpose.msra.mxu0 0
        %3972 = vmatprep.subr.bf16.mxu0 0
        %3973 = vmatpush1.bf16.xpose.msra.mxu0 0
        %3974 = vmatprep.subr.bf16.mxu0 0
        %3975 = vmatpush1.bf16.xpose.msra.mxu0 0
        %3976 = vmatprep.subr.bf16.mxu0 0
        %3977 = vmatpush1.bf16.xpose.msra.mxu0 0
        %3978 = vmatprep.subr.bf16.mxu0 0
        %3979 = vmatpush1.bf16.xpose.msra.mxu0 0
        %3980 = vmatprep.subr.bf16.mxu0 0
        %3981 = vmatpush1.bf16.xpose.msra.mxu0 0
        %3982 = vmatprep.subr.bf16.mxu0 0
        %3983 = vmatpush1.bf16.xpose.msra.mxu0 0
        %3984 = vmatprep.subr.bf16.mxu0 0
        %3985 = vmatpush1.bf16.xpose.msra.mxu0 0
        %3986 = vmatprep.mubr.bf16.mxu0 0
        %3987 = vmatmul.mubr.bf16.gmra.mrb[0].mxu0 %v3946
        %v3988 = vpop.f32.mrb[0].mxu0
        %v3989 = vadd.f32 0.0, %v3988
        %v3990 = vpop.f32.mrb[0].mxu0
        %v3991 = vpop.f32.mrb[0].mxu0
        %v3992 = vadd.f32 0.0, %v3991
        %v3993 = vpop.f32.mrb[0].mxu0
        %3994 = vmatprep.mubr.bf16.mxu0 0
        %3995 = vmatmul.mubr.bf16.gmra.mrb[0].mxu0 %v3949
        %v3996 = vpop.f32.mrb[0].mxu0
        %v3997 = vadd.f32 0.0, %v3996
        %v3998 = vpop.f32.mrb[0].mxu0
        %v3999 = vpop.f32.mrb[0].mxu0
        %v4000 = vadd.f32 0.0, %v3999
        %v4001 = vpop.f32.mrb[0].mxu0
        %4002 = vdwg.mxu0
        %v4004 = vsel %vm2572, %v3816, 0
        %v4007 = vsel %vm2572, %v3828, 0
        %v4010 = vsel %vm2572, %v2620, 0
        %4012 = vmatprep.subr.bf16.mxu0 0
        %4013 = vmatpush1.bf16.xpose.msra.mxu0 %v4010
        %4014 = vmatprep.subr.bf16.mxu0 0
        %4015 = vmatpush1.bf16.xpose.msra.mxu0 0
        %4016 = vmatprep.subr.bf16.mxu0 0
        %4017 = vmatpush1.bf16.xpose.msra.mxu0 0
        %4018 = vmatprep.subr.bf16.mxu0 0
        %4019 = vmatpush1.bf16.xpose.msra.mxu0 0
        %4020 = vmatprep.subr.bf16.mxu0 0
        %4021 = vmatpush1.bf16.xpose.msra.mxu0 0
        %4022 = vmatprep.subr.bf16.mxu0 0
        %4023 = vmatpush1.bf16.xpose.msra.mxu0 0
        %4024 = vmatprep.subr.bf16.mxu0 0
        %4025 = vmatpush1.bf16.xpose.msra.mxu0 0
        %4026 = vmatprep.subr.bf16.mxu0 0
        %4027 = vmatpush1.bf16.xpose.msra.mxu0 0
        %4028 = vmatprep.subr.bf16.mxu0 0
        %4029 = vmatpush1.bf16.xpose.msra.mxu0 0
        %4030 = vmatprep.subr.bf16.mxu0 0
        %4031 = vmatpush1.bf16.xpose.msra.mxu0 0
        %4032 = vmatprep.subr.bf16.mxu0 0
        %4033 = vmatpush1.bf16.xpose.msra.mxu0 0
        %4034 = vmatprep.subr.bf16.mxu0 0
        %4035 = vmatpush1.bf16.xpose.msra.mxu0 0
        %4036 = vmatprep.subr.bf16.mxu0 0
        %4037 = vmatpush1.bf16.xpose.msra.mxu0 0
        %4038 = vmatprep.subr.bf16.mxu0 0
        %4039 = vmatpush1.bf16.xpose.msra.mxu0 0
        %4040 = vmatprep.subr.bf16.mxu0 0
        %4041 = vmatpush1.bf16.xpose.msra.mxu0 0
        %4042 = vmatprep.subr.bf16.mxu0 0
        %4043 = vmatpush1.bf16.xpose.msra.mxu0 0
        %4044 = vmatprep.mubr.bf16.mxu0 0
        %4045 = vmatmul.mubr.bf16.gmra.mrb[0].mxu0 %v4004
        %v4046 = vpop.f32.mrb[0].mxu0
        %v4047 = vadd.f32 0.0, %v4046
        %v4048 = vpop.f32.mrb[0].mxu0
        %v4049 = vpop.f32.mrb[0].mxu0
        %v4050 = vadd.f32 0.0, %v4049
        %v4051 = vpop.f32.mrb[0].mxu0
        %4052 = vmatprep.mubr.bf16.mxu0 0
        %4053 = vmatmul.mubr.bf16.gmra.mrb[0].mxu0 %v4007
        %v4054 = vpop.f32.mrb[0].mxu0
        %v4055 = vadd.f32 0.0, %v4054
        %v4056 = vpop.f32.mrb[0].mxu0
        %v4057 = vpop.f32.mrb[0].mxu0
        %v4058 = vadd.f32 0.0, %v4057
        %v4059 = vpop.f32.mrb[0].mxu0
        %4060 = vdwg.mxu0
        %4061 = vxpose.xlu0.b32.start [1/16] %v3873, 128
        %4062 = vxpose.xlu0.b32.cont [2/16] %v3876, 128
        %4063 = vxpose.xlu0.b32.cont [3/16] %v3881, 128
        %4064 = vxpose.xlu0.b32.cont [4/16] %v3884, 128
        %4065 = vxpose.xlu0.b32.cont [5/16] 0.0, 128
        %4066 = vxpose.xlu0.b32.cont [6/16] 0.0, 128
        %4067 = vxpose.xlu0.b32.cont [7/16] 0.0, 128
        %4068 = vxpose.xlu0.b32.cont [8/16] 0.0, 128
        %4069 = vxpose.xlu0.b32.cont [9/16] 0.0, 128
        %4070 = vxpose.xlu0.b32.cont [10/16] 0.0, 128
        %4071 = vxpose.xlu0.b32.cont [11/16] 0.0, 128
        %4072 = vxpose.xlu0.b32.cont [12/16] 0.0, 128
        %4073 = vxpose.xlu0.b32.cont [13/16] 0.0, 128
        %4074 = vxpose.xlu0.b32.cont [14/16] 0.0, 128
        %4075 = vxpose.xlu0.b32.cont [15/16] 0.0, 128
        %4076 = vxpose.xlu0.b32.end [16/16] 0.0, 128
        %v4077 = vpop.trf.xlu0
        %v4078 = vpop.trf.xlu0
        %v4079 = vpop.trf.xlu0
        %v4080 = vpop.trf.xlu0
        %v4081 = vpop.trf.xlu0
        %v4082 = vpop.trf.xlu0
        %v4083 = vpop.trf.xlu0
        %v4084 = vpop.trf.xlu0
        %v4085 = vpop.trf.xlu0
        %v4086 = vpop.trf.xlu0
        %v4087 = vpop.trf.xlu0
        %v4088 = vpop.trf.xlu0
        %v4089 = vpop.trf.xlu0
        %v4090 = vpop.trf.xlu0
        %v4091 = vpop.trf.xlu0
        %v4092 = vpop.trf.xlu0
        %4093 = vxpose.xlu0.b32.start [1/16] %v3931, 128
        %4094 = vxpose.xlu0.b32.cont [2/16] %v3934, 128
        %4095 = vxpose.xlu0.b32.cont [3/16] %v3939, 128
        %4096 = vxpose.xlu0.b32.cont [4/16] %v3942, 128
        %4097 = vxpose.xlu0.b32.cont [5/16] 0.0, 128
        %4098 = vxpose.xlu0.b32.cont [6/16] 0.0, 128
        %4099 = vxpose.xlu0.b32.cont [7/16] 0.0, 128
        %4100 = vxpose.xlu0.b32.cont [8/16] 0.0, 128
        %4101 = vxpose.xlu0.b32.cont [9/16] 0.0, 128
        %4102 = vxpose.xlu0.b32.cont [10/16] 0.0, 128
        %4103 = vxpose.xlu0.b32.cont [11/16] 0.0, 128
        %4104 = vxpose.xlu0.b32.cont [12/16] 0.0, 128
        %4105 = vxpose.xlu0.b32.cont [13/16] 0.0, 128
        %4106 = vxpose.xlu0.b32.cont [14/16] 0.0, 128
        %4107 = vxpose.xlu0.b32.cont [15/16] 0.0, 128
        %4108 = vxpose.xlu0.b32.end [16/16] 0.0, 128
        %v4109 = vpop.trf.xlu0
        %v4110 = vpop.trf.xlu0
        %v4111 = vpop.trf.xlu0
        %v4112 = vpop.trf.xlu0
        %v4113 = vpop.trf.xlu0
        %v4114 = vpop.trf.xlu0
        %v4115 = vpop.trf.xlu0
        %v4116 = vpop.trf.xlu0
        %v4117 = vpop.trf.xlu0
        %v4118 = vpop.trf.xlu0
        %v4119 = vpop.trf.xlu0
        %v4120 = vpop.trf.xlu0
        %v4121 = vpop.trf.xlu0
        %v4122 = vpop.trf.xlu0
        %v4123 = vpop.trf.xlu0
        %v4124 = vpop.trf.xlu0
        %4125 = vxpose.xlu0.b32.start [1/16] %v3989, 128
        %4126 = vxpose.xlu0.b32.cont [2/16] %v3992, 128
        %4127 = vxpose.xlu0.b32.cont [3/16] %v3997, 128
        %4128 = vxpose.xlu0.b32.cont [4/16] %v4000, 128
        %4129 = vxpose.xlu0.b32.cont [5/16] 0.0, 128
        %4130 = vxpose.xlu0.b32.cont [6/16] 0.0, 128
        %4131 = vxpose.xlu0.b32.cont [7/16] 0.0, 128
        %4132 = vxpose.xlu0.b32.cont [8/16] 0.0, 128
        %4133 = vxpose.xlu0.b32.cont [9/16] 0.0, 128
        %4134 = vxpose.xlu0.b32.cont [10/16] 0.0, 128
        %4135 = vxpose.xlu0.b32.cont [11/16] 0.0, 128
        %4136 = vxpose.xlu0.b32.cont [12/16] 0.0, 128
        %4137 = vxpose.xlu0.b32.cont [13/16] 0.0, 128
        %4138 = vxpose.xlu0.b32.cont [14/16] 0.0, 128
        %4139 = vxpose.xlu0.b32.cont [15/16] 0.0, 128
        %4140 = vxpose.xlu0.b32.end [16/16] 0.0, 128
        %v4141 = vpop.trf.xlu0
        %v4142 = vpop.trf.xlu0
        %v4143 = vpop.trf.xlu0
        %v4144 = vpop.trf.xlu0
        %v4145 = vpop.trf.xlu0
        %v4146 = vpop.trf.xlu0
        %v4147 = vpop.trf.xlu0
        %v4148 = vpop.trf.xlu0
        %v4149 = vpop.trf.xlu0
        %v4150 = vpop.trf.xlu0
        %v4151 = vpop.trf.xlu0
        %v4152 = vpop.trf.xlu0
        %v4153 = vpop.trf.xlu0
        %v4154 = vpop.trf.xlu0
        %v4155 = vpop.trf.xlu0
        %v4156 = vpop.trf.xlu0
        %4157 = vxpose.xlu0.b32.start [1/16] %v4047, 128
        %4158 = vxpose.xlu0.b32.cont [2/16] %v4050, 128
        %4159 = vxpose.xlu0.b32.cont [3/16] %v4055, 128
        %4160 = vxpose.xlu0.b32.cont [4/16] %v4058, 128
        %4161 = vxpose.xlu0.b32.cont [5/16] 0.0, 128
        %4162 = vxpose.xlu0.b32.cont [6/16] 0.0, 128
        %4163 = vxpose.xlu0.b32.cont [7/16] 0.0, 128
        %4164 = vxpose.xlu0.b32.cont [8/16] 0.0, 128
        %4165 = vxpose.xlu0.b32.cont [9/16] 0.0, 128
        %4166 = vxpose.xlu0.b32.cont [10/16] 0.0, 128
        %4167 = vxpose.xlu0.b32.cont [11/16] 0.0, 128
        %4168 = vxpose.xlu0.b32.cont [12/16] 0.0, 128
        %4169 = vxpose.xlu0.b32.cont [13/16] 0.0, 128
        %4170 = vxpose.xlu0.b32.cont [14/16] 0.0, 128
        %4171 = vxpose.xlu0.b32.cont [15/16] 0.0, 128
        %4172 = vxpose.xlu0.b32.end [16/16] 0.0, 128
        %v4173 = vpop.trf.xlu0
        %v4174 = vpop.trf.xlu0
        %v4175 = vpop.trf.xlu0
        %v4176 = vpop.trf.xlu0
        %v4177 = vpop.trf.xlu0
        %v4178 = vpop.trf.xlu0
        %v4179 = vpop.trf.xlu0
        %v4180 = vpop.trf.xlu0
        %v4181 = vpop.trf.xlu0
        %v4182 = vpop.trf.xlu0
        %v4183 = vpop.trf.xlu0
        %v4184 = vpop.trf.xlu0
        %v4185 = vpop.trf.xlu0
        %v4186 = vpop.trf.xlu0
        %v4187 = vpop.trf.xlu0
        %v4188 = vpop.trf.xlu0
        %v4189 = vcombine.low %v4077, %v4141
        %v4190 = vcombine.high %v4077, %v4141
        %v4192 = vunpack.c.l.s4 1983009808
        %v4193 = vunpack.c.0.s8 %v4192
        %v4194 = vlaneseq
        %v4195 = vshrl.u32 %v4194, 7
        %v4196 = vsub.s32 %v4193, %v4195
        %v4197 = vrot.slane %v4189, %v4196
        %v4199 = vunpack.c.l.s4 1983009808
        %v4200 = vunpack.c.0.s8 %v4199
        %v4201 = vlaneseq
        %v4202 = vshrl.u32 %v4201, 7
        %v4203 = vsub.s32 %v4200, %v4202
        %v4204 = vrot.slane %v4190, %v4203
        %v4205 = vcombine.low %v4109, %v4173
        %v4206 = vcombine.high %v4109, %v4173
        %v4208 = vunpack.c.l.s4 1983009808
        %v4209 = vunpack.c.0.s8 %v4208
        %v4210 = vlaneseq
        %v4211 = vshrl.u32 %v4210, 7
        %v4212 = vsub.s32 %v4209, %v4211
        %v4213 = vrot.slane %v4205, %v4212
        %v4215 = vunpack.c.l.s4 1983009808
        %v4216 = vunpack.c.0.s8 %v4215
        %v4217 = vlaneseq
        %v4218 = vshrl.u32 %v4217, 7
        %v4219 = vsub.s32 %v4216, %v4218
        %v4220 = vrot.slane %v4206, %v4219
        %v4221 = vcombine.low %v4197, %v4213
        %v4222 = vcombine.high %v4197, %v4213
        %v4224 = vunpack.c.l.s4 1934713408
        %v4225 = vunpack.c.0.s8 %v4224
        %v4226 = vlaneseq
        %v4227 = vshrl.u32 %v4226, 7
        %v4228 = vsub.s32 %v4225, %v4227
        %v4229 = vrot.slane %v4221, %v4228
        %v4231 = vunpack.c.l.s4 1934713408
        %v4232 = vunpack.c.0.s8 %v4231
        %v4233 = vlaneseq
        %v4234 = vshrl.u32 %v4233, 7
        %v4235 = vsub.s32 %v4232, %v4234
        %v4236 = vrot.slane %v4222, %v4235
        %v4237 = vcombine.low %v4204, %v4220
        %v4238 = vcombine.high %v4204, %v4220
        %v4240 = vunpack.c.l.s4 1934713408
        %v4241 = vunpack.c.0.s8 %v4240
        %v4242 = vlaneseq
        %v4243 = vshrl.u32 %v4242, 7
        %v4244 = vsub.s32 %v4241, %v4243
        %v4245 = vrot.slane %v4237, %v4244
        %v4247 = vunpack.c.l.s4 1934713408
        %v4248 = vunpack.c.0.s8 %v4247
        %v4249 = vlaneseq
        %v4250 = vshrl.u32 %v4249, 7
        %v4251 = vsub.s32 %v4248, %v4250
        %v4252 = vrot.slane %v4238, %v4251
        %v4253 = vcombine.high %v4229, 0.0
        %v4254 = vcombine.high %v4236, 0.0
        %v4255 = vcombine.high %v4245, 0.0
        %v4256 = vcombine.high %v4252, 0.0
        %v4257 = vcombine.low %v4229, %v4236
        %v4259 = vunpack.c.l.s4 1983009808
        %v4260 = vunpack.c.0.s8 %v4259
        %v4261 = vlaneseq
        %v4262 = vshrl.u32 %v4261, 7
        %v4263 = vsub.s32 %v4260, %v4262
        %v4264 = vrot.slane %v4257, %v4263
        %v4265 = vcombine.low %v4253, %v4254
        %v4267 = vunpack.c.l.s4 1983009808
        %v4268 = vunpack.c.0.s8 %v4267
        %v4269 = vlaneseq
        %v4270 = vshrl.u32 %v4269, 7
        %v4271 = vsub.s32 %v4268, %v4270
        %v4272 = vrot.slane %v4265, %v4271
        %v4273 = vcombine.low %v4245, %v4252
        %v4275 = vunpack.c.l.s4 1983009808
        %v4276 = vunpack.c.0.s8 %v4275
        %v4277 = vlaneseq
        %v4278 = vshrl.u32 %v4277, 7
        %v4279 = vsub.s32 %v4276, %v4278
        %v4280 = vrot.slane %v4273, %v4279
        %v4281 = vcombine.low %v4255, %v4256
        %v4283 = vunpack.c.l.s4 1983009808
        %v4284 = vunpack.c.0.s8 %v4283
        %v4285 = vlaneseq
        %v4286 = vshrl.u32 %v4285, 7
        %v4287 = vsub.s32 %v4284, %v4286
        %v4288 = vrot.slane %v4281, %v4287
        %v4289 = vcombine.low %v4264, %v4272
        %v4290 = vcombine.high %v4264, %v4272
        %v4292 = vunpack.c.l.s4 1934713408
        %v4293 = vunpack.c.0.s8 %v4292
        %v4294 = vlaneseq
        %v4295 = vshrl.u32 %v4294, 7
        %v4296 = vsub.s32 %v4293, %v4295
        %v4297 = vrot.slane %v4289, %v4296
        %v4299 = vunpack.c.l.s4 1934713408
        %v4300 = vunpack.c.0.s8 %v4299
        %v4301 = vlaneseq
        %v4302 = vshrl.u32 %v4301, 7
        %v4303 = vsub.s32 %v4300, %v4302
        %v4304 = vrot.slane %v4290, %v4303
        %v4305 = vcombine.low %v4280, %v4288
        %v4306 = vcombine.high %v4280, %v4288
        %v4308 = vunpack.c.l.s4 1934713408
        %v4309 = vunpack.c.0.s8 %v4308
        %v4310 = vlaneseq
        %v4311 = vshrl.u32 %v4310, 7
        %v4312 = vsub.s32 %v4309, %v4311
        %v4313 = vrot.slane %v4305, %v4312
        %v4315 = vunpack.c.l.s4 1934713408
        %v4316 = vunpack.c.0.s8 %v4315
        %v4317 = vlaneseq
        %v4318 = vshrl.u32 %v4317, 7
        %v4319 = vsub.s32 %v4316, %v4318
        %v4320 = vrot.slane %v4306, %v4319
        %v4321 = vcombine.low %v4297, %v4313
        %v4322 = vcombine.high %v4297, %v4313
        %v4323 = vcombine.low %v4304, %v4320
        %v4324 = vcombine.high %v4304, %v4320
        %4326 = vrot.lane.b32.xlu0 %v4322, 32
        %v4327 = vpop.permute.xlu0 %4326
        %4330 = vrot.lane.b32.xlu0 %v4323, 64
        %v4331 = vpop.permute.xlu0 %4330
        %4334 = vrot.lane.b32.xlu0 %v4324, 96
        %v4335 = vpop.permute.xlu0 %4334
        %v4337 = vsel %vm2399, %v4321, %v4327
        %vm4338 = vcmask 523264
        %v4339 = vsel %vm4338, %v4337, %v4331
        %vm4340 = vcmask 785408
        %v4341 = vsel %vm4340, %v4339, %v4335
        %v4342 = vld [vmem:[#allocation10] sm:$0xf]
        %v4343 = vld [vmem:[#allocation10 + $0x4] sm:$0xf]
        %v4344 = vld [vmem:[#allocation10 + $0x8] sm:$0xf]
        %v4345 = vld [vmem:[#allocation10 + $0xc] sm:$0xf]
        %v4346 = vld [vmem:[#allocation10 + $0x10] sm:$0xf]
        %v4347 = vld [vmem:[#allocation10 + $0x14] sm:$0xf]
        %v4348 = vld [vmem:[#allocation10 + $0x18] sm:$0xf]
        %v4349 = vld [vmem:[#allocation10 + $0x1c] sm:$0xf]
        %v4350 = vld [vmem:[#allocation10 + $0x20] sm:$0xf]
        %v4351 = vld [vmem:[#allocation10 + $0x24] sm:$0xf]
        %v4352 = vld [vmem:[#allocation10 + $0x28] sm:$0xf]
        %v4353 = vld [vmem:[#allocation10 + $0x2c] sm:$0xf]
        %v4354 = vld [vmem:[#allocation10 + $0x30] sm:$0xf]
        %v4355 = vld [vmem:[#allocation10 + $0x34] sm:$0xf]
        %v4356 = vld [vmem:[#allocation10 + $0x38] sm:$0xf]
        %v4357 = vld [vmem:[#allocation10 + $0x3c] sm:$0xf]
        %v4358 = vpack.c.bf16 %v4341, %v4341
        %v4375 = vunpack.c.l.b16 %v4342
        %v4376 = vunpack.c.l.b16 %v4343
        %v4377 = vunpack.c.l.b16 %v4344
        %v4378 = vunpack.c.l.b16 %v4345
        %v4379 = vunpack.c.l.b16 %v4346
        %v4380 = vunpack.c.l.b16 %v4347
        %v4381 = vunpack.c.l.b16 %v4348
        %v4382 = vunpack.c.l.b16 %v4349
        %v4383 = vunpack.c.l.b16 %v4350
        %v4384 = vunpack.c.l.b16 %v4351
        %v4385 = vunpack.c.l.b16 %v4352
        %v4386 = vunpack.c.l.b16 %v4353
        %v4387 = vunpack.c.l.b16 %v4354
        %v4388 = vunpack.c.l.b16 %v4355
        %v4389 = vunpack.c.l.b16 %v4356
        %v4390 = vunpack.c.l.b16 %v4357
        %v4391 = vpack.c.b16 %v4376, %v4375
        %v4392 = vpack.c.b16 %v4378, %v4377
        %v4393 = vpack.c.b16 %v4380, %v4379
        %v4394 = vpack.c.b16 %v4382, %v4381
        %v4395 = vpack.c.b16 %v4384, %v4383
        %v4396 = vpack.c.b16 %v4386, %v4385
        %v4397 = vpack.c.b16 %v4388, %v4387
        %v4398 = vpack.c.b16 %v4390, %v4389
        %4407 = vmatprep.subr.bf16.mxu0 0
        %4408 = vmatpush1.bf16.msra.mxu0 %v4391
        %4409 = vmatprep.subr.bf16.mxu0 0
        %4410 = vmatpush1.bf16.msra.mxu0 %v4392
        %4411 = vmatprep.subr.bf16.mxu0 0
        %4412 = vmatpush1.bf16.msra.mxu0 %v4393
        %4413 = vmatprep.subr.bf16.mxu0 0
        %4414 = vmatpush1.bf16.msra.mxu0 %v4394
        %4415 = vmatprep.subr.bf16.mxu0 0
        %4416 = vmatpush1.bf16.msra.mxu0 %v4395
        %4417 = vmatprep.subr.bf16.mxu0 0
        %4418 = vmatpush1.bf16.msra.mxu0 %v4396
        %4419 = vmatprep.subr.bf16.mxu0 0
        %4420 = vmatpush1.bf16.msra.mxu0 %v4397
        %4421 = vmatprep.subr.bf16.mxu0 0
        %4422 = vmatpush1.bf16.msra.mxu0 %v4398
        %4423 = vmatprep.subr.bf16.mxu0 0
        %4424 = vmatpush1.bf16.msra.mxu0 0
        %4425 = vmatprep.subr.bf16.mxu0 0
        %4426 = vmatpush1.bf16.msra.mxu0 0
        %4427 = vmatprep.subr.bf16.mxu0 0
        %4428 = vmatpush1.bf16.msra.mxu0 0
        %4429 = vmatprep.subr.bf16.mxu0 0
        %4430 = vmatpush1.bf16.msra.mxu0 0
        %4431 = vmatprep.subr.bf16.mxu0 0
        %4432 = vmatpush1.bf16.msra.mxu0 0
        %4433 = vmatprep.subr.bf16.mxu0 0
        %4434 = vmatpush1.bf16.msra.mxu0 0
        %4435 = vmatprep.subr.bf16.mxu0 0
        %4436 = vmatpush1.bf16.msra.mxu0 0
        %4437 = vmatprep.subr.bf16.mxu0 0
        %4438 = vmatpush1.bf16.msra.mxu0 0
        %4439 = vmatprep.mubr.bf16.mxu0 0
        %4440 = vmatmul.mubr.bf16.gmra.mrb[0].mxu0 %v4358
        %v4441 = vpop.f32.mrb[0].mxu0
        %v4442 = vadd.f32 0.0, %v4441
        %v4443 = vpop.f32.mrb[0].mxu0
        %v4444 = vpop.f32.mrb[0].mxu0
        %v4445 = vpop.f32.mrb[0].mxu0
        %4446 = vdwg.mxu0
        %v4447 = vadd.f32 %v624, %v4442
        %v4448 = vld [vmem:[%s10] sm:$0x1]
        %v4449 = vld [vmem:[%s11] sm:$0x1]
        %4450 = vadd.xlane.f32.xlu0 %v4447
        %v4451 = vpop.xlane.xlu0 %4450
        %v4452 = vrcp.pop 128.0
        %v4453 = vmul.f32 %v4451, %v4452
        %v4454 = vsub.f32 %v4447, %v4453
        %v4455 = vmul.f32 %v4454, %v4454
        %4456 = vadd.xlane.f32.xlu0 %v4455
        %v4457 = vpop.xlane.xlu0 %4456
        %v4458 = vmul.f32 %v4457, %v4452
        %v4459 = vadd.f32 %v4458, 1e-05
        %v4460 = vrsqrt.pop %v4459
        %v4461 = vmul.f32 %v4454, %v4460
        %v4463 = vlaneseq
        %v4464 = vshrl.u32 %v4463, 7
        %v4465 = vsub.s32 0, %v4464
        %v4466 = vrot.slane %v4448, %v4465
        %v4468 = vmul.f32 %v4461, %v4466
        %v4470 = vlaneseq
        %v4471 = vshrl.u32 %v4470, 7
        %v4472 = vsub.s32 0, %v4471
        %v4473 = vrot.slane %v4449, %v4472
        %v4475 = vadd.f32 %v4468, %v4473
        %v4476 = vld [vmem:[#allocation11] sm:$0xff]
        %v4477 = vld [vmem:[#allocation11 + $0x8] sm:$0xff]
        %v4478 = vld [vmem:[#allocation11 + $0x10] sm:$0xff]
        %v4479 = vld [vmem:[#allocation11 + $0x18] sm:$0xff]
        %v4480 = vld [vmem:[#allocation11 + $0x20] sm:$0xff]
        %v4481 = vld [vmem:[#allocation11 + $0x28] sm:$0xff]
        %v4482 = vld [vmem:[#allocation11 + $0x30] sm:$0xff]
        %v4483 = vld [vmem:[#allocation11 + $0x38] sm:$0xff]
        %v4484 = vld [vmem:[#allocation11 + $0x40] sm:$0xff]
        %v4485 = vld [vmem:[#allocation11 + $0x48] sm:$0xff]
        %v4486 = vld [vmem:[#allocation11 + $0x50] sm:$0xff]
        %v4487 = vld [vmem:[#allocation11 + $0x58] sm:$0xff]
        %v4488 = vld [vmem:[#allocation11 + $0x60] sm:$0xff]
        %v4489 = vld [vmem:[#allocation11 + $0x68] sm:$0xff]
        %v4490 = vld [vmem:[#allocation11 + $0x70] sm:$0xff]
        %v4491 = vld [vmem:[#allocation11 + $0x78] sm:$0xff]
        %v4492 = vpack.c.bf16 %v4475, %v4475
        %v4493 = vld [vmem:[%s7] sm:$0x3]
        %v4495 = vlaneseq
        %v4496 = vshrl.u32 %v4495, 7
        %v4497 = vsub.s32 0, %v4496
        %v4498 = vrot.slane %v4493, %v4497
        %v4499 = vlaneseq
        %v4500 = vshrl.u32 %v4499, 7
        %v4501 = vsub.s32 1, %v4500
        %v4502 = vrot.slane %v4493, %v4501
        %v4521 = vunpack.c.l.b16 %v4476
        %v4522 = vunpack.c.h.b16 %v4476
        %v4523 = vunpack.c.l.b16 %v4477
        %v4524 = vunpack.c.h.b16 %v4477
        %v4525 = vunpack.c.l.b16 %v4478
        %v4526 = vunpack.c.h.b16 %v4478
        %v4527 = vunpack.c.l.b16 %v4479
        %v4528 = vunpack.c.h.b16 %v4479
        %v4529 = vunpack.c.l.b16 %v4480
        %v4530 = vunpack.c.h.b16 %v4480
        %v4531 = vunpack.c.l.b16 %v4481
        %v4532 = vunpack.c.h.b16 %v4481
        %v4533 = vunpack.c.l.b16 %v4482
        %v4534 = vunpack.c.h.b16 %v4482
        %v4535 = vunpack.c.l.b16 %v4483
        %v4536 = vunpack.c.h.b16 %v4483
        %v4537 = vunpack.c.l.b16 %v4484
        %v4538 = vunpack.c.h.b16 %v4484
        %v4539 = vunpack.c.l.b16 %v4485
        %v4540 = vunpack.c.h.b16 %v4485
        %v4541 = vunpack.c.l.b16 %v4486
        %v4542 = vunpack.c.h.b16 %v4486
        %v4543 = vunpack.c.l.b16 %v4487
        %v4544 = vunpack.c.h.b16 %v4487
        %v4545 = vunpack.c.l.b16 %v4488
        %v4546 = vunpack.c.h.b16 %v4488
        %v4547 = vunpack.c.l.b16 %v4489
        %v4548 = vunpack.c.h.b16 %v4489
        %v4549 = vunpack.c.l.b16 %v4490
        %v4550 = vunpack.c.h.b16 %v4490
        %v4551 = vunpack.c.l.b16 %v4491
        %v4552 = vunpack.c.h.b16 %v4491
        %v4553 = vpack.c.b16 %v4523, %v4521
        %v4554 = vpack.c.b16 %v4524, %v4522
        %v4555 = vpack.c.b16 %v4527, %v4525
        %v4556 = vpack.c.b16 %v4528, %v4526
        %v4557 = vpack.c.b16 %v4531, %v4529
        %v4558 = vpack.c.b16 %v4532, %v4530
        %v4559 = vpack.c.b16 %v4535, %v4533
        %v4560 = vpack.c.b16 %v4536, %v4534
        %v4561 = vpack.c.b16 %v4539, %v4537
        %v4562 = vpack.c.b16 %v4540, %v4538
        %v4563 = vpack.c.b16 %v4543, %v4541
        %v4564 = vpack.c.b16 %v4544, %v4542
        %v4565 = vpack.c.b16 %v4547, %v4545
        %v4566 = vpack.c.b16 %v4548, %v4546
        %v4567 = vpack.c.b16 %v4551, %v4549
        %v4568 = vpack.c.b16 %v4552, %v4550
        %4585 = vmatprep.subr.bf16.mxu0 %v4554
        %4586 = vmatpush1.bf16.msra.mxu0 %v4553
        %4587 = vmatprep.subr.bf16.mxu0 %v4556
        %4588 = vmatpush1.bf16.msra.mxu0 %v4555
        %4589 = vmatprep.subr.bf16.mxu0 %v4558
        %4590 = vmatpush1.bf16.msra.mxu0 %v4557
        %4591 = vmatprep.subr.bf16.mxu0 %v4560
        %4592 = vmatpush1.bf16.msra.mxu0 %v4559
        %4593 = vmatprep.subr.bf16.mxu0 %v4562
        %4594 = vmatpush1.bf16.msra.mxu0 %v4561
        %4595 = vmatprep.subr.bf16.mxu0 %v4564
        %4596 = vmatpush1.bf16.msra.mxu0 %v4563
        %4597 = vmatprep.subr.bf16.mxu0 %v4566
        %4598 = vmatpush1.bf16.msra.mxu0 %v4565
        %4599 = vmatprep.subr.bf16.mxu0 %v4568
        %4600 = vmatpush1.bf16.msra.mxu0 %v4567
        %4601 = vmatprep.subr.bf16.mxu0 0
        %4602 = vmatpush1.bf16.msra.mxu0 0
        %4603 = vmatprep.subr.bf16.mxu0 0
        %4604 = vmatpush1.bf16.msra.mxu0 0
        %4605 = vmatprep.subr.bf16.mxu0 0
        %4606 = vmatpush1.bf16.msra.mxu0 0
        %4607 = vmatprep.subr.bf16.mxu0 0
        %4608 = vmatpush1.bf16.msra.mxu0 0
        %4609 = vmatprep.subr.bf16.mxu0 0
        %4610 = vmatpush1.bf16.msra.mxu0 0
        %4611 = vmatprep.subr.bf16.mxu0 0
        %4612 = vmatpush1.bf16.msra.mxu0 0
        %4613 = vmatprep.subr.bf16.mxu0 0
        %4614 = vmatpush1.bf16.msra.mxu0 0
        %4615 = vmatprep.subr.bf16.mxu0 0
        %4616 = vmatpush1.bf16.msra.mxu0 0
        %4617 = vmatprep.mubr.bf16.mxu0 0
        %4618 = vmatmul.mubr.bf16.gmra.mrb[0].mxu0 %v4492
        %v4619 = vpop.f32.mrb[0].mxu0
        %v4620 = vadd.f32 %v4498, %v4619
        %v4621 = vpop.f32.mrb[0].mxu0
        %v4622 = vadd.f32 %v4502, %v4621
        %v4623 = vpop.f32.mrb[0].mxu0
        %v4624 = vpop.f32.mrb[0].mxu0
        %4625 = vdwg.mxu0
        %v4626 = vmax.f32 %v4620, 0.0
        %v4627 = vmax.f32 %v4622, 0.0
        %v4628 = vld [vmem:[#allocation13] sm:$0xf]
        %v4629 = vld [vmem:[#allocation13 + $0x4] sm:$0xf]
        %v4630 = vld [vmem:[#allocation13 + $0x8] sm:$0xf]
        %v4631 = vld [vmem:[#allocation13 + $0xc] sm:$0xf]
        %v4632 = vld [vmem:[#allocation13 + $0x10] sm:$0xf]
        %v4633 = vld [vmem:[#allocation13 + $0x14] sm:$0xf]
        %v4634 = vld [vmem:[#allocation13 + $0x18] sm:$0xf]
        %v4635 = vld [vmem:[#allocation13 + $0x1c] sm:$0xf]
        %v4636 = vld [vmem:[#allocation13 + $0x20] sm:$0xf]
        %v4637 = vld [vmem:[#allocation13 + $0x24] sm:$0xf]
        %v4638 = vld [vmem:[#allocation13 + $0x28] sm:$0xf]
        %v4639 = vld [vmem:[#allocation13 + $0x2c] sm:$0xf]
        %v4640 = vld [vmem:[#allocation13 + $0x30] sm:$0xf]
        %v4641 = vld [vmem:[#allocation13 + $0x34] sm:$0xf]
        %v4642 = vld [vmem:[#allocation13 + $0x38] sm:$0xf]
        %v4643 = vld [vmem:[#allocation13 + $0x3c] sm:$0xf]
        %v4644 = vld [vmem:[#allocation13 + $0x40] sm:$0xf]
        %v4645 = vld [vmem:[#allocation13 + $0x44] sm:$0xf]
        %v4646 = vld [vmem:[#allocation13 + $0x48] sm:$0xf]
        %v4647 = vld [vmem:[#allocation13 + $0x4c] sm:$0xf]
        %v4648 = vld [vmem:[#allocation13 + $0x50] sm:$0xf]
        %v4649 = vld [vmem:[#allocation13 + $0x54] sm:$0xf]
        %v4650 = vld [vmem:[#allocation13 + $0x58] sm:$0xf]
        %v4651 = vld [vmem:[#allocation13 + $0x5c] sm:$0xf]
        %v4652 = vld [vmem:[#allocation13 + $0x60] sm:$0xf]
        %v4653 = vld [vmem:[#allocation13 + $0x64] sm:$0xf]
        %v4654 = vld [vmem:[#allocation13 + $0x68] sm:$0xf]
        %v4655 = vld [vmem:[#allocation13 + $0x6c] sm:$0xf]
        %v4656 = vld [vmem:[#allocation13 + $0x70] sm:$0xf]
        %v4657 = vld [vmem:[#allocation13 + $0x74] sm:$0xf]
        %v4658 = vld [vmem:[#allocation13 + $0x78] sm:$0xf]
        %v4659 = vld [vmem:[#allocation13 + $0x7c] sm:$0xf]
        %v4660 = vpack.c.bf16 %v4626, %v4626
        %v4661 = vpack.c.bf16 %v4627, %v4627
        %v4662 = vld [vmem:[%s9] sm:$0x1]
        %v4664 = vlaneseq
        %v4665 = vshrl.u32 %v4664, 7
        %v4666 = vsub.s32 0, %v4665
        %v4667 = vrot.slane %v4662, %v4666
        %v4701 = vunpack.c.l.b16 %v4628
        %v4702 = vunpack.c.l.b16 %v4629
        %v4703 = vunpack.c.l.b16 %v4630
        %v4704 = vunpack.c.l.b16 %v4631
        %v4705 = vunpack.c.l.b16 %v4632
        %v4706 = vunpack.c.l.b16 %v4633
        %v4707 = vunpack.c.l.b16 %v4634
        %v4708 = vunpack.c.l.b16 %v4635
        %v4709 = vunpack.c.l.b16 %v4636
        %v4710 = vunpack.c.l.b16 %v4637
        %v4711 = vunpack.c.l.b16 %v4638
        %v4712 = vunpack.c.l.b16 %v4639
        %v4713 = vunpack.c.l.b16 %v4640
        %v4714 = vunpack.c.l.b16 %v4641
        %v4715 = vunpack.c.l.b16 %v4642
        %v4716 = vunpack.c.l.b16 %v4643
        %v4717 = vunpack.c.l.b16 %v4644
        %v4718 = vunpack.c.l.b16 %v4645
        %v4719 = vunpack.c.l.b16 %v4646
        %v4720 = vunpack.c.l.b16 %v4647
        %v4721 = vunpack.c.l.b16 %v4648
        %v4722 = vunpack.c.l.b16 %v4649
        %v4723 = vunpack.c.l.b16 %v4650
        %v4724 = vunpack.c.l.b16 %v4651
        %v4725 = vunpack.c.l.b16 %v4652
        %v4726 = vunpack.c.l.b16 %v4653
        %v4727 = vunpack.c.l.b16 %v4654
        %v4728 = vunpack.c.l.b16 %v4655
        %v4729 = vunpack.c.l.b16 %v4656
        %v4730 = vunpack.c.l.b16 %v4657
        %v4731 = vunpack.c.l.b16 %v4658
        %v4732 = vunpack.c.l.b16 %v4659
        %v4733 = vpack.c.b16 %v4702, %v4701
        %v4734 = vpack.c.b16 %v4704, %v4703
        %v4735 = vpack.c.b16 %v4706, %v4705
        %v4736 = vpack.c.b16 %v4708, %v4707
        %v4737 = vpack.c.b16 %v4710, %v4709
        %v4738 = vpack.c.b16 %v4712, %v4711
        %v4739 = vpack.c.b16 %v4714, %v4713
        %v4740 = vpack.c.b16 %v4716, %v4715
        %v4741 = vpack.c.b16 %v4718, %v4717
        %v4742 = vpack.c.b16 %v4720, %v4719
        %v4743 = vpack.c.b16 %v4722, %v4721
        %v4744 = vpack.c.b16 %v4724, %v4723
        %v4745 = vpack.c.b16 %v4726, %v4725
        %v4746 = vpack.c.b16 %v4728, %v4727
        %v4747 = vpack.c.b16 %v4730, %v4729
        %v4748 = vpack.c.b16 %v4732, %v4731
        %4765 = vmatprep.subr.bf16.mxu0 0
        %4766 = vmatpush1.bf16.msra.mxu0 %v4733
        %4767 = vmatprep.subr.bf16.mxu0 0
        %4768 = vmatpush1.bf16.msra.mxu0 %v4734
        %4769 = vmatprep.subr.bf16.mxu0 0
        %4770 = vmatpush1.bf16.msra.mxu0 %v4735
        %4771 = vmatprep.subr.bf16.mxu0 0
        %4772 = vmatpush1.bf16.msra.mxu0 %v4736
        %4773 = vmatprep.subr.bf16.mxu0 0
        %4774 = vmatpush1.bf16.msra.mxu0 %v4737
        %4775 = vmatprep.subr.bf16.mxu0 0
        %4776 = vmatpush1.bf16.msra.mxu0 %v4738
        %4777 = vmatprep.subr.bf16.mxu0 0
        %4778 = vmatpush1.bf16.msra.mxu0 %v4739
        %4779 = vmatprep.subr.bf16.mxu0 0
        %4780 = vmatpush1.bf16.msra.mxu0 %v4740
        %4781 = vmatprep.subr.bf16.mxu0 0
        %4782 = vmatpush1.bf16.msra.mxu0 %v4741
        %4783 = vmatprep.subr.bf16.mxu0 0
        %4784 = vmatpush1.bf16.msra.mxu0 %v4742
        %4785 = vmatprep.subr.bf16.mxu0 0
        %4786 = vmatpush1.bf16.msra.mxu0 %v4743
        %4787 = vmatprep.subr.bf16.mxu0 0
        %4788 = vmatpush1.bf16.msra.mxu0 %v4744
        %4789 = vmatprep.subr.bf16.mxu0 0
        %4790 = vmatpush1.bf16.msra.mxu0 %v4745
        %4791 = vmatprep.subr.bf16.mxu0 0
        %4792 = vmatpush1.bf16.msra.mxu0 %v4746
        %4793 = vmatprep.subr.bf16.mxu0 0
        %4794 = vmatpush1.bf16.msra.mxu0 %v4747
        %4795 = vmatprep.subr.bf16.mxu0 0
        %4796 = vmatpush1.bf16.msra.mxu0 %v4748
        %4797 = vmatprep.mubr.bf16.mxu0 %v4661
        %4798 = vmatmul.mubr.bf16.gmra.mrb[0].mxu0 %v4660
        %v4799 = vpop.f32.mrb[0].mxu0
        %v4800 = vadd.f32 %v4667, %v4799
        %v4801 = vpop.f32.mrb[0].mxu0
        %v4802 = vpop.f32.mrb[0].mxu0
        %v4803 = vpop.f32.mrb[0].mxu0
        %4804 = vdwg.mxu0
        %v4805 = vadd.f32 %v4475, %v4800
        %v4806 = vld [vmem:[%s12] sm:$0x1]
        %v4807 = vld [vmem:[%s13] sm:$0x1]
        %4808 = vadd.xlane.f32.xlu0 %v4805
        %v4809 = vpop.xlane.xlu0 %4808
        %v4810 = vmul.f32 %v4809, %v4452
        %v4811 = vsub.f32 %v4805, %v4810
        %v4812 = vmul.f32 %v4811, %v4811
        %4813 = vadd.xlane.f32.xlu0 %v4812
        %v4814 = vpop.xlane.xlu0 %4813
        %v4815 = vmul.f32 %v4814, %v4452
        %v4816 = vadd.f32 %v4815, 1e-05
        %v4817 = vrsqrt.pop %v4816
        %v4818 = vmul.f32 %v4811, %v4817
        %v4820 = vlaneseq
        %v4821 = vshrl.u32 %v4820, 7
        %v4822 = vsub.s32 0, %v4821
        %v4823 = vrot.slane %v4806, %v4822
        %v4825 = vmul.f32 %v4818, %v4823
        %v4827 = vlaneseq
        %v4828 = vshrl.u32 %v4827, 7
        %v4829 = vsub.s32 0, %v4828
        %v4830 = vrot.slane %v4807, %v4829
        %v4832 = vadd.f32 %v4825, %v4830
        %4833 = vst [vmem:[%s619] sm:$0xff] %v4832
        %s4834 = sand.u32 %s369, 1
        %s4835 = scalar_lea.sflag [#allocation4], %s4834
        %s4836 = sand.u32 %s369, 1
        %s4837 = smul.addr %s4836, 8
        %s4838 = scalar_lea.vmem [#allocation14], %s4837
        // Predicated region
        $region105: #{tpu_custom_call.1} parent=75 // pred_check
          %p4839 = pneg %p379
        $region106: #{tpu_custom_call.1} parent=75 // pred_check_branch
          %4841 = sbr.rel (%p4839) target = $region108
        $region107: #{tpu_custom_call.1} parent=75 // pred_region
          %s4843 = ssub.s32 128, 128
          %4844 = vsyncadd %s4835, %s4843
          %s4845 = sadd.s32 %s41, %s40
          %s4846 = smul.addr %s4845, 128
          %s4847 = scalar_lea.hbm %s14, %s4846
          %s4849 = sshll.u32 %s4838, 4
          %s4850 = int_to_ptr.vmem [resolvable:$true] %s4849
          %4852 = dma.vmem_to_hbm [thread:$0]  %s4850, 128, %s4847, %s4835
        $region108: #{tpu_custom_call.1} parent=75 // pred_fallthru
          _
      $region76: #{tpu_custom_call.1} parent=5 // pred_fallthru
        _
      %p4853 = scmp.le.s32.totalorder 2, %s31
      // Predicated region
      $region109: #{tpu_custom_call.1} parent=5 // pred_check
        %p4854 = pneg %p4853
      $region110: #{tpu_custom_call.1} parent=5 // pred_check_branch
        %4856 = sbr.rel (%p4854) target = $region112
      $region111: #{tpu_custom_call.1} parent=5 // pred_region
        %s4857 = ssub.s32 %s31, 2
        // Predicated region
        $region113: #{tpu_custom_call.1} parent=111 // pred_check
          %p4858 = pneg %p385
        $region114: #{tpu_custom_call.1} parent=111 // pred_check_branch
          %4860 = sbr.rel (%p4858) target = $region116
        $region115: #{tpu_custom_call.1} parent=111 // pred_region
          %s4861 = sand.u32 %s370, 1
          %s4862 = scalar_lea.sflag [#allocation4], %s4861
          %s4863 = sand.u32 %s370, 1
          %s4864 = smul.addr %s4863, 8
          %s4865 = scalar_lea.vmem [#allocation14], %s4864
          %4866 = dma.done %s4862, 128
        $region116: #{tpu_custom_call.1} parent=111 // pred_fallthru
          _
      $region112: #{tpu_custom_call.1} parent=5 // pred_fallthru
        _
    $region6: #{tpu_custom_call.1} parent=1 // loop_footer
      %s35 = sadd.s32 1, %s31
    $region7: #{tpu_custom_call.1} parent=1 // loop_footer_branch
      %30 = sbr.rel target = $region3
    $region8: #{tpu_custom_call.1} parent=1 // loop_exit
      _
    %4867 = vsyncpa [#allocation3], 1
    %s4868 = scalar_lea.sflag [#allocation3], 1
    %4869 = vsyncpa %s4868, 1
    %4870 = vsyncpa [#allocation6], 1
    %s4871 = scalar_lea.sflag [#allocation6], 1
    %4872 = vsyncpa %s4871, 1
    %4873 = vsyncpa [#allocation9], 1
    %4874 = vsyncpa [#allocation12], 1
    %4875 = vsyncpa [#allocation4], 1
    %s4876 = scalar_lea.sflag [#allocation4], 1
    %4877 = vsyncpa %s4876, 1

</llo_original>
